<compile_context>
chip_gen: v7x
topology: tpu7x:2x2x1
jax: 0.10.0
libtpu: 0.0.40
codegen_flags: <defaults>
</compile_context>

<pallas_src>
import math

import jax
import jax.numpy as jnp
from jax.experimental import pallas as pl
from jax.experimental.pallas import tpu as pltpu

NUM_HEADS = 8          # fixed by the module (nn.MultiheadAttention(num_heads=8))
NEG_INF = -1e30        # additive mask bias (exp underflows to 0)


def _relu(x):
    return jnp.maximum(x, 0.0)


def _choose_tb(batch):
    """Samples per grid step: fill the MXU M dimension, but keep the grid
    length >= 2 so v7x can shard across its two TensorCores."""
    if batch >= 16:
        return 8
    if batch >= 4:
        return max(1, batch // 2)
    return 1


def credibility_kernel(x_ref, kbias_ref, pbias_ref, *refs):
    (wqkv, bqkv, wo, bo,
     aw1, ab1, aw2, ab2,
     sw1, sb1, sw2, sb2, sw3, sb3,
     lw1, lb1, lw2, lb2,
     ew1, eb1, ew2, eb2,
     fw1s, fw1l, fw1e, fb1, fw2, fb2,
     cw1, cb1, cw2, cb2,
     out_ref) = refs

    f32 = jnp.float32
    bf16 = jnp.bfloat16

    TB, S, H = x_ref.shape
    DH = H // NUM_HEADS

    def mm(a, w_ref, b_ref):        # bf16 MXU matmul, f32 accumulation + f32 bias
        return jnp.dot(a.astype(bf16), w_ref[...],
                       preferred_element_type=f32) + b_ref[...]

    # ---- fused QKV projection, batch folded into M (scale pre-folded in Wq) --
    x2 = x_ref[...].reshape(TB * S, H)                   # (TB*S, H) bf16
    qkv = mm(x2, wqkv, bqkv)                             # (TB*S, 3H) f32

    # ---- nn.MultiheadAttention(H, 8, batch_first=True), eval mode -----------
    # Per-(sample, head) 2-D score / PV matmuls (K=DH is intrinsic to MHA);
    # key-padding mask applied as a precomputed additive f32 bias.
    o_rows = []
    for t in range(TB):                                  # static unrolled
        key_bias = kbias_ref[t]                          # (1, S) f32
        base = t * S
        o_heads = []
        for h in range(NUM_HEADS):                       # static unrolled
            lo = h * DH
            q_h = qkv[base:base + S, lo:lo + DH].astype(bf16)            # (S,DH)
            k_h = qkv[base:base + S, H + lo:H + lo + DH].astype(bf16)
            v_h = qkv[base:base + S, 2 * H + lo:2 * H + lo + DH].astype(bf16)
            s = jnp.einsum('qd,kd->qk', q_h, k_h,
                           preferred_element_type=f32)                   # (S,S)
            s = s + key_bias                                             # mask
            s = s - jnp.max(s, axis=-1, keepdims=True)
            p = jnp.exp(s)
            p = p / jnp.sum(p, axis=-1, keepdims=True)                   # exact
            o_heads.append(jnp.dot(p.astype(bf16), v_h,
                                   preferred_element_type=f32))          # (S,DH)
        o_rows.append(jnp.concatenate(o_heads, axis=1))                  # (S,H)
    o_cat = jnp.concatenate(o_rows, axis=0)              # (TB*S, H) f32

    # single lane-dense out_proj with K=H (replaces 8 K=DH matmuls + add tree)
    attn_all = mm(o_cat, wo, bo)                         # (TB*S, H) f32

    # ---- attention_weights pooling: Linear->Tanh->Linear, mask, softmax(seq) -
    a = jnp.tanh(mm(attn_all, aw1, ab1))                 # (TB*S, 128)
    wl_all = mm(a, aw2, ab2)                             # (TB*S, 1)

    attn3 = attn_all.reshape(TB, S, H)
    wl3 = wl_all.reshape(TB, S, 1) + pbias_ref[...]      # (TB, S, 1) masked
    wl3 = wl3 - jnp.max(wl3, axis=1, keepdims=True)
    we3 = jnp.exp(wl3)
    wts3 = we3 / jnp.sum(we3, axis=1, keepdims=True)     # exact f32 softmax
    pooled = jnp.sum(wts3 * attn3, axis=1)               # (TB, H) f32 (f32 reduce)
    cls_tok = attn3[:, 0, :]                             # (TB, H)

    # ---- MLP tail, batched over TB (real matmuls, not M=1 matvecs) ----------
    # sensationalism_features: H->256->128->64 (dropout = identity)
    sens = _relu(mm(pooled, sw1, sb1))
    sens = _relu(mm(sens, sw2, sb2))
    sens = mm(sens, sw3, sb3)                            # (TB, 64)

    # linguistic_patterns: H->128->64
    ling = _relu(mm(cls_tok, lw1, lb1))
    ling = mm(ling, lw2, lb2)                            # (TB, 64)

    # emotional_intensity: H->64->32
    emo = _relu(mm(pooled, ew1, eb1))
    emo = mm(emo, ew2, eb2)                              # (TB, 32)

    # feature_fusion on concat([sens, ling, emo]) via row-split weights
    fused = (jnp.dot(sens.astype(bf16), fw1s[...], preferred_element_type=f32)
             + jnp.dot(ling.astype(bf16), fw1l[...], preferred_element_type=f32)
             + jnp.dot(emo.astype(bf16), fw1e[...], preferred_element_type=f32)
             + fb1[...])
    fused = _relu(fused)
    fused = _relu(mm(fused, fw2, fb2))                   # (TB, 64)

    # credibility_head: 64->32->1, Sigmoid
    c = _relu(mm(fused, cw1, cb1))
    logit = mm(c, cw2, cb2)                              # (TB, 1)
    out_ref[0] = 1.0 / (1.0 + jnp.exp(-logit))


def init_params(key, hidden):
    """Deterministic synthetic parameters in torch-equivalent layout:
    weights (in, out) f32, biases (1, out) f32."""
    def dense(k, fan_in, fan_out):
        k1, k2 = jax.random.split(k)
        lim = 1.0 / math.sqrt(fan_in)
        w = jax.random.uniform(k1, (fan_in, fan_out), jnp.float32, -lim, lim)
        b = jax.random.uniform(k2, (1, fan_out), jnp.float32, -lim, lim)
        return [w, b]

    keys = iter(jax.random.split(key, 17))
    p = []
    # multi_head_attention: in_proj (q, k, v) + out_proj
    p += dense(next(keys), hidden, hidden)        # Wq, bq
    p += dense(next(keys), hidden, hidden)        # Wk, bk
    p += dense(next(keys), hidden, hidden)        # Wv, bv
    p += dense(next(keys), hidden, hidden)        # Wo, bo
    # attention_weights: H->128, 128->1
    p += dense(next(keys), hidden, 128)
    p += dense(next(keys), 128, 1)
    # sensationalism_features: H->256->128->64
    p += dense(next(keys), hidden, 256)
    p += dense(next(keys), 256, 128)
    p += dense(next(keys), 128, 64)
    # linguistic_patterns: H->128->64
    p += dense(next(keys), hidden, 128)
    p += dense(next(keys), 128, 64)
    # emotional_intensity: H->64->32
    p += dense(next(keys), hidden, 64)
    p += dense(next(keys), 64, 32)
    # feature_fusion: 160->128->64
    p += dense(next(keys), 64 + 64 + 32, 128)
    p += dense(next(keys), 128, 64)
    # credibility_head: 64->32->1
    p += dense(next(keys), 64, 32)
    p += dense(next(keys), 32, 1)
    return p


def pack_params(params, hidden):
    """Host-side layout prep: fuse Wq|Wk|Wv into one lane-dense (H, 3H) slab
    with the 1/sqrt(DH) attention scale folded into Wq/bq, row-split the
    fusion weight (concat-free), cast weights to bf16, keep biases f32."""
    (wq, bq, wk, bk, wv, bv, wo, bo,
     aw1, ab1, aw2, ab2,
     sw1, sb1, sw2, sb2, sw3, sb3,
     lw1, lb1, lw2, lb2,
     ew1, eb1, ew2, eb2,
     fw1, fb1, fw2, fb2,
     cw1, cb1, cw2, cb2) = params
    H = hidden
    DH = H // NUM_HEADS
    scale = 1.0 / math.sqrt(DH)
    bf = lambda w: w.astype(jnp.bfloat16)

    wqkv = jnp.concatenate([wq * scale, wk, wv], axis=1)      # (H, 3H)
    bqkv = jnp.concatenate([bq * scale, bk, bv], axis=1)      # (1, 3H)

    return [
        bf(wqkv), bqkv.astype(jnp.float32),
        bf(wo), bo,
        bf(aw1), ab1, bf(aw2), ab2,
        bf(sw1), sb1, bf(sw2), sb2, bf(sw3), sb3,
        bf(lw1), lb1, bf(lw2), lb2,
        bf(ew1), eb1, bf(ew2), eb2,
        bf(fw1[0:64]), bf(fw1[64:128]), bf(fw1[128:160]), fb1,   # concat row-split
        bf(fw2), fb2,
        bf(cw1), cb1, bf(cw2), cb2,
    ]


@jax.jit
def credibility_regressor(hidden_states, attention_mask, kparams):
    B, S, H = hidden_states.shape
    TB = _choose_tb(B)
    nblocks = pl.cdiv(B, TB)
    B_pad = nblocks * TB

    x = hidden_states.astype(jnp.bfloat16)
    mask = attention_mask.astype(jnp.int32)
    if B_pad != B:
        # pad samples are fully masked -> uniform attention, outputs discarded
        x = jnp.pad(x, ((0, B_pad - B), (0, 0), (0, 0)))
        mask = jnp.pad(mask, ((0, B_pad - B), (0, 0)))

    neg = jnp.asarray(NEG_INF, jnp.float32)
    pad = mask == 0
    key_bias = jnp.where(pad, neg, 0.0)[:, None, :].astype(jnp.float32)   # (Bp,1,S)
    pool_bias = jnp.where(pad, neg, 0.0)[:, :, None].astype(jnp.float32)  # (Bp,S,1)

    # Activations tiled TB samples per step; weights resident (constant index_map).
    in_specs = [
        pl.BlockSpec((TB, S, H), lambda i: (i, 0, 0)),
        pl.BlockSpec((TB, 1, S), lambda i: (i, 0, 0)),
        pl.BlockSpec((TB, S, 1), lambda i: (i, 0, 0)),
    ]
    in_specs += [pl.BlockSpec(p.shape, lambda i, nd=p.ndim: (0,) * nd)
                 for p in kparams]

    weight_bytes = sum(int(p.size) * p.dtype.itemsize for p in kparams)

    # VMEM budget derived from the working set, capped at the v7x 64 MiB ceiling.
    block_bytes = TB * (S * H * 2 + 2 * S * 4 + 4)                 # act + masks + out
    inter_bytes = TB * 4 * (S * 3 * H                              # fused qkv
                            + 2 * NUM_HEADS * S * S                # scores + probs
                            + 2 * S * H                            # o_cat + attn
                            + S * 128)                             # pooling hidden
    vmem_needed = 2 * (weight_bytes + block_bytes) + inter_bytes + (8 << 20)
    vmem_limit = int(min(max(vmem_needed, 32 << 20), 64 << 20))

    def mmf(m, k, n):
        return 2 * m * k * n
    flops_s = (mmf(S, H, 3 * H)                                    # fused QKV
               + 2 * mmf(S, S, H)                                  # QK^T + PV (all heads)
               + mmf(S, H, H)                                      # out_proj
               + mmf(S, H, 128) + mmf(S, 128, 1) + 2 * S * H       # pooling
               + mmf(1, H, 256) + mmf(1, 256, 128) + mmf(1, 128, 64)
               + mmf(1, H, 128) + mmf(1, 128, 64)
               + mmf(1, H, 64) + mmf(1, 64, 32)
               + mmf(1, 160, 128) + mmf(1, 128, 64)
               + mmf(1, 64, 32) + mmf(1, 32, 1))
    trans_s = NUM_HEADS * S * S + S * 128 + S + 1
    bytes_accessed = (x.size * 2 + key_bias.size * 4 + pool_bias.size * 4
                      + B_pad * 4 + weight_bytes)
    cost = pl.CostEstimate(flops=int(B_pad * flops_s),
                           transcendentals=int(B_pad * trans_s),
                           bytes_accessed=int(bytes_accessed))

    score = pl.pallas_call(
        credibility_kernel,
        out_shape=jax.ShapeDtypeStruct((nblocks, TB, 1), jnp.float32),
        grid=(nblocks,),
        in_specs=in_specs,
        out_specs=pl.BlockSpec((1, TB, 1), lambda i: (i, 0, 0)),
        compiler_params=pltpu.CompilerParams(
            dimension_semantics=("parallel",),     # megacore-shard batch on v7x
            vmem_limit_bytes=vmem_limit),
        cost_estimate=cost,
    )(x, key_bias, pool_bias, *kparams)

    # torch's .squeeze() on (B, 1) -> (B,) for B > 1
    return score.reshape(B_pad)[:B]


if __name__ == "__main__":
    # small demo shapes: TinyBERT uses hidden_size=312; we use H=32 (divisible
    # by num_heads=8 -> head_dim=4), B=2, S=8.
    B, S, H = 2, 8, 32
    key = jax.random.PRNGKey(0)
    k_hidden, k_params = jax.random.split(key)

    hidden_states = jax.random.normal(k_hidden, (B, S, H), dtype=jnp.float32)
    attention_mask = jnp.array(
        [[1, 1, 1, 1, 1, 1, 1, 1],
         [1, 1, 1, 1, 1, 0, 0, 0]], dtype=jnp.int32)

    torch_layout_params = init_params(k_params, H)
    kernel_params = pack_params(torch_layout_params, H)

    score = credibility_regressor(hidden_states, attention_mask, kernel_params)
    jax.block_until_ready(score)
    assert score.shape == (B,)
    assert bool(jnp.all((score >= 0.0) & (score <= 1.0)))
    print("KERNEL_OK")
</pallas_src>

<mosaic_0001>
module attributes {stable_mosaic.version = 11 : i64} {
  func.func @credibility_kernel(%arg0: i32, %arg1: memref<1x8x32xbf16, #tpu.memory_space<vmem>>, %arg2: memref<1x1x8xf32, #tpu.memory_space<vmem>>, %arg3: memref<1x8x1xf32, #tpu.memory_space<vmem>>, %arg4: memref<32x96xbf16, #tpu.memory_space<vmem>>, %arg5: memref<1x96xf32, #tpu.memory_space<vmem>>, %arg6: memref<32x32xbf16, #tpu.memory_space<vmem>>, %arg7: memref<1x32xf32, #tpu.memory_space<vmem>>, %arg8: memref<32x128xbf16, #tpu.memory_space<vmem>>, %arg9: memref<1x128xf32, #tpu.memory_space<vmem>>, %arg10: memref<128x1xbf16, #tpu.memory_space<vmem>>, %arg11: memref<1x1xf32, #tpu.memory_space<vmem>>, %arg12: memref<32x256xbf16, #tpu.memory_space<vmem>>, %arg13: memref<1x256xf32, #tpu.memory_space<vmem>>, %arg14: memref<256x128xbf16, #tpu.memory_space<vmem>>, %arg15: memref<1x128xf32, #tpu.memory_space<vmem>>, %arg16: memref<128x64xbf16, #tpu.memory_space<vmem>>, %arg17: memref<1x64xf32, #tpu.memory_space<vmem>>, %arg18: memref<32x128xbf16, #tpu.memory_space<vmem>>, %arg19: memref<1x128xf32, #tpu.memory_space<vmem>>, %arg20: memref<128x64xbf16, #tpu.memory_space<vmem>>, %arg21: memref<1x64xf32, #tpu.memory_space<vmem>>, %arg22: memref<32x64xbf16, #tpu.memory_space<vmem>>, %arg23: memref<1x64xf32, #tpu.memory_space<vmem>>, %arg24: memref<64x32xbf16, #tpu.memory_space<vmem>>, %arg25: memref<1x32xf32, #tpu.memory_space<vmem>>, %arg26: memref<64x128xbf16, #tpu.memory_space<vmem>>, %arg27: memref<64x128xbf16, #tpu.memory_space<vmem>>, %arg28: memref<32x128xbf16, #tpu.memory_space<vmem>>, %arg29: memref<1x128xf32, #tpu.memory_space<vmem>>, %arg30: memref<128x64xbf16, #tpu.memory_space<vmem>>, %arg31: memref<1x64xf32, #tpu.memory_space<vmem>>, %arg32: memref<64x32xbf16, #tpu.memory_space<vmem>>, %arg33: memref<1x32xf32, #tpu.memory_space<vmem>>, %arg34: memref<32x1xbf16, #tpu.memory_space<vmem>>, %arg35: memref<1x1xf32, #tpu.memory_space<vmem>>, %arg36: memref<1x1x1xf32, #tpu.memory_space<vmem>>) attributes {dimension_semantics = [#tpu.dimension_semantics<parallel>], iteration_bounds = array<i64: 2>, scalar_prefetch = 0 : i64, scratch_operands = 0 : i64, tpu.core_type = #tpu.core_type<tc>, window_params = [{transform_indices = @transform_0, window_bounds = array<i64: 1, 8, 32>}, {transform_indices = @transform_1, window_bounds = array<i64: 1, 1, 8>}, {transform_indices = @transform_2, window_bounds = array<i64: 1, 8, 1>}, {pipeline_mode = #tpu.pipeline_mode<synchronous>, transform_indices = @transform_3, window_bounds = array<i64: 32, 96>}, {pipeline_mode = #tpu.pipeline_mode<synchronous>, transform_indices = @transform_4, window_bounds = array<i64: 1, 96>}, {pipeline_mode = #tpu.pipeline_mode<synchronous>, transform_indices = @transform_5, window_bounds = array<i64: 32, 32>}, {pipeline_mode = #tpu.pipeline_mode<synchronous>, transform_indices = @transform_6, window_bounds = array<i64: 1, 32>}, {pipeline_mode = #tpu.pipeline_mode<synchronous>, transform_indices = @transform_7, window_bounds = array<i64: 32, 128>}, {pipeline_mode = #tpu.pipeline_mode<synchronous>, transform_indices = @transform_8, window_bounds = array<i64: 1, 128>}, {pipeline_mode = #tpu.pipeline_mode<synchronous>, transform_indices = @transform_9, window_bounds = array<i64: 128, 1>}, {pipeline_mode = #tpu.pipeline_mode<synchronous>, transform_indices = @transform_10, window_bounds = array<i64: 1, 1>}, {pipeline_mode = #tpu.pipeline_mode<synchronous>, transform_indices = @transform_11, window_bounds = array<i64: 32, 256>}, {pipeline_mode = #tpu.pipeline_mode<synchronous>, transform_indices = @transform_12, window_bounds = array<i64: 1, 256>}, {pipeline_mode = #tpu.pipeline_mode<synchronous>, transform_indices = @transform_13, window_bounds = array<i64: 256, 128>}, {pipeline_mode = #tpu.pipeline_mode<synchronous>, transform_indices = @transform_14, window_bounds = array<i64: 1, 128>}, {pipeline_mode = #tpu.pipeline_mode<synchronous>, transform_indices = @transform_15, window_bounds = array<i64: 128, 64>}, {pipeline_mode = #tpu.pipeline_mode<synchronous>, transform_indices = @transform_16, window_bounds = array<i64: 1, 64>}, {pipeline_mode = #tpu.pipeline_mode<synchronous>, transform_indices = @transform_17, window_bounds = array<i64: 32, 128>}, {pipeline_mode = #tpu.pipeline_mode<synchronous>, transform_indices = @transform_18, window_bounds = array<i64: 1, 128>}, {pipeline_mode = #tpu.pipeline_mode<synchronous>, transform_indices = @transform_19, window_bounds = array<i64: 128, 64>}, {pipeline_mode = #tpu.pipeline_mode<synchronous>, transform_indices = @transform_20, window_bounds = array<i64: 1, 64>}, {pipeline_mode = #tpu.pipeline_mode<synchronous>, transform_indices = @transform_21, window_bounds = array<i64: 32, 64>}, {pipeline_mode = #tpu.pipeline_mode<synchronous>, transform_indices = @transform_22, window_bounds = array<i64: 1, 64>}, {pipeline_mode = #tpu.pipeline_mode<synchronous>, transform_indices = @transform_23, window_bounds = array<i64: 64, 32>}, {pipeline_mode = #tpu.pipeline_mode<synchronous>, transform_indices = @transform_24, window_bounds = array<i64: 1, 32>}, {pipeline_mode = #tpu.pipeline_mode<synchronous>, transform_indices = @transform_25, window_bounds = array<i64: 64, 128>}, {pipeline_mode = #tpu.pipeline_mode<synchronous>, transform_indices = @transform_26, window_bounds = array<i64: 64, 128>}, {pipeline_mode = #tpu.pipeline_mode<synchronous>, transform_indices = @transform_27, window_bounds = array<i64: 32, 128>}, {pipeline_mode = #tpu.pipeline_mode<synchronous>, transform_indices = @transform_28, window_bounds = array<i64: 1, 128>}, {pipeline_mode = #tpu.pipeline_mode<synchronous>, transform_indices = @transform_29, window_bounds = array<i64: 128, 64>}, {pipeline_mode = #tpu.pipeline_mode<synchronous>, transform_indices = @transform_30, window_bounds = array<i64: 1, 64>}, {pipeline_mode = #tpu.pipeline_mode<synchronous>, transform_indices = @transform_31, window_bounds = array<i64: 64, 32>}, {pipeline_mode = #tpu.pipeline_mode<synchronous>, transform_indices = @transform_32, window_bounds = array<i64: 1, 32>}, {pipeline_mode = #tpu.pipeline_mode<synchronous>, transform_indices = @transform_33, window_bounds = array<i64: 32, 1>}, {pipeline_mode = #tpu.pipeline_mode<synchronous>, transform_indices = @transform_34, window_bounds = array<i64: 1, 1>}, {transform_indices = @transform_35, window_bounds = array<i64: 1, 1, 1>}]} {
    %c0 = arith.constant 0 : index
    %c0_0 = arith.constant 0 : index
    %c0_1 = arith.constant 0 : index
    %0 = vector.load %arg1[%c0, %c0_0, %c0_1] : memref<1x8x32xbf16, #tpu.memory_space<vmem>>, vector<1x8x32xbf16>
    %1 = vector.shape_cast %0 : vector<1x8x32xbf16> to vector<8x32xbf16>
    %c0_2 = arith.constant 0 : index
    %c0_3 = arith.constant 0 : index
    %2 = vector.load %arg4[%c0_2, %c0_3] : memref<32x96xbf16, #tpu.memory_space<vmem>>, vector<32x96xbf16>
    %cst = arith.constant dense<0.000000e+00> : vector<8x96xf32>
    %3 = tpu.matmul %1, %2, %cst {dimension_numbers = #tpu.dot_dimension_numbers<[1], [0], [0], [1], [0, 0, 1, 1], [], []>} : vector<8x32xbf16>, vector<32x96xbf16>, vector<8x96xf32> -> vector<8x96xf32>
    %c0_4 = arith.constant 0 : index
    %c0_5 = arith.constant 0 : index
    %4 = vector.load %arg5[%c0_4, %c0_5] : memref<1x96xf32, #tpu.memory_space<vmem>>, vector<1x96xf32>
    %5 = vector.broadcast %4 : vector<1x96xf32> to vector<8x96xf32>
    %6 = arith.addf %3, %5 : vector<8x96xf32>
    %c0_6 = arith.constant 0 : index
    %c0_7 = arith.constant 0 : index
    %c0_8 = arith.constant 0 : index
    %7 = vector.load %arg2[%c0_6, %c0_7, %c0_8] : memref<1x1x8xf32, #tpu.memory_space<vmem>>, vector<1x1x8xf32>
    %8 = vector.shape_cast %7 : vector<1x1x8xf32> to vector<1x8xf32>
    %9 = vector.extract_strided_slice %6 {offsets = [0, 0], sizes = [8, 4], strides = [1, 1]} : vector<8x96xf32> to vector<8x4xf32>
    %10 = arith.truncf %9 : vector<8x4xf32> to vector<8x4xbf16>
    %11 = vector.extract_strided_slice %6 {offsets = [0, 32], sizes = [8, 4], strides = [1, 1]} : vector<8x96xf32> to vector<8x4xf32>
    %12 = arith.truncf %11 : vector<8x4xf32> to vector<8x4xbf16>
    %13 = vector.extract_strided_slice %6 {offsets = [0, 64], sizes = [8, 4], strides = [1, 1]} : vector<8x96xf32> to vector<8x4xf32>
    %14 = arith.truncf %13 : vector<8x4xf32> to vector<8x4xbf16>
    "tpu.trace_start"() <{level = 10 : i32, message = "qd,kd->qk"}> : () -> ()
    %cst_9 = arith.constant dense<0.000000e+00> : vector<8x8xf32>
    %15 = tpu.matmul %10, %12, %cst_9 {dimension_numbers = #tpu.dot_dimension_numbers<[1], [1], [0], [0], [0, 0, 1, 0], [], []>} : vector<8x4xbf16>, vector<8x4xbf16>, vector<8x8xf32> -> vector<8x8xf32>
    "tpu.trace_stop"() : () -> ()
    %16 = vector.broadcast %8 : vector<1x8xf32> to vector<8x8xf32>
    %17 = arith.addf %15, %16 : vector<8x8xf32>
    %cst_10 = arith.constant dense<0xFF800000> : vector<8xf32>
    %18 = vector.multi_reduction <maximumf>, %17, %cst_10 [1] : vector<8x8xf32> to vector<8xf32>
    %19 = vector.shape_cast %18 : vector<8xf32> to vector<8x1xf32>
    %20 = vector.broadcast %19 : vector<8x1xf32> to vector<8x8xf32>
    %21 = arith.subf %17, %20 : vector<8x8xf32>
    %22 = math.exp %21 : vector<8x8xf32>
    %cst_11 = arith.constant dense<0.000000e+00> : vector<8xf32>
    %23 = vector.multi_reduction <add>, %22, %cst_11 [1] : vector<8x8xf32> to vector<8xf32>
    %24 = vector.shape_cast %23 : vector<8xf32> to vector<8x1xf32>
    %25 = vector.broadcast %24 : vector<8x1xf32> to vector<8x8xf32>
    %26 = arith.divf %22, %25 : vector<8x8xf32>
    %27 = arith.truncf %26 : vector<8x8xf32> to vector<8x8xbf16>
    %cst_12 = arith.constant dense<0.000000e+00> : vector<8x4xf32>
    %28 = tpu.matmul %27, %14, %cst_12 {dimension_numbers = #tpu.dot_dimension_numbers<[1], [0], [0], [1], [0, 0, 1, 1], [], []>} : vector<8x8xbf16>, vector<8x4xbf16>, vector<8x4xf32> -> vector<8x4xf32>
    %29 = vector.extract_strided_slice %6 {offsets = [0, 4], sizes = [8, 4], strides = [1, 1]} : vector<8x96xf32> to vector<8x4xf32>
    %30 = arith.truncf %29 : vector<8x4xf32> to vector<8x4xbf16>
    %31 = vector.extract_strided_slice %6 {offsets = [0, 36], sizes = [8, 4], strides = [1, 1]} : vector<8x96xf32> to vector<8x4xf32>
    %32 = arith.truncf %31 : vector<8x4xf32> to vector<8x4xbf16>
    %33 = vector.extract_strided_slice %6 {offsets = [0, 68], sizes = [8, 4], strides = [1, 1]} : vector<8x96xf32> to vector<8x4xf32>
    %34 = arith.truncf %33 : vector<8x4xf32> to vector<8x4xbf16>
    "tpu.trace_start"() <{level = 10 : i32, message = "qd,kd->qk"}> : () -> ()
    %cst_13 = arith.constant dense<0.000000e+00> : vector<8x8xf32>
    %35 = tpu.matmul %30, %32, %cst_13 {dimension_numbers = #tpu.dot_dimension_numbers<[1], [1], [0], [0], [0, 0, 1, 0], [], []>} : vector<8x4xbf16>, vector<8x4xbf16>, vector<8x8xf32> -> vector<8x8xf32>
    "tpu.trace_stop"() : () -> ()
    %36 = vector.broadcast %8 : vector<1x8xf32> to vector<8x8xf32>
    %37 = arith.addf %35, %36 : vector<8x8xf32>
    %cst_14 = arith.constant dense<0xFF800000> : vector<8xf32>
    %38 = vector.multi_reduction <maximumf>, %37, %cst_14 [1] : vector<8x8xf32> to vector<8xf32>
    %39 = vector.shape_cast %38 : vector<8xf32> to vector<8x1xf32>
    %40 = vector.broadcast %39 : vector<8x1xf32> to vector<8x8xf32>
    %41 = arith.subf %37, %40 : vector<8x8xf32>
    %42 = math.exp %41 : vector<8x8xf32>
    %cst_15 = arith.constant dense<0.000000e+00> : vector<8xf32>
    %43 = vector.multi_reduction <add>, %42, %cst_15 [1] : vector<8x8xf32> to vector<8xf32>
    %44 = vector.shape_cast %43 : vector<8xf32> to vector<8x1xf32>
    %45 = vector.broadcast %44 : vector<8x1xf32> to vector<8x8xf32>
    %46 = arith.divf %42, %45 : vector<8x8xf32>
    %47 = arith.truncf %46 : vector<8x8xf32> to vector<8x8xbf16>
    %cst_16 = arith.constant dense<0.000000e+00> : vector<8x4xf32>
    %48 = tpu.matmul %47, %34, %cst_16 {dimension_numbers = #tpu.dot_dimension_numbers<[1], [0], [0], [1], [0, 0, 1, 1], [], []>} : vector<8x8xbf16>, vector<8x4xbf16>, vector<8x4xf32> -> vector<8x4xf32>
    %49 = vector.extract_strided_slice %6 {offsets = [0, 8], sizes = [8, 4], strides = [1, 1]} : vector<8x96xf32> to vector<8x4xf32>
    %50 = arith.truncf %49 : vector<8x4xf32> to vector<8x4xbf16>
    %51 = vector.extract_strided_slice %6 {offsets = [0, 40], sizes = [8, 4], strides = [1, 1]} : vector<8x96xf32> to vector<8x4xf32>
    %52 = arith.truncf %51 : vector<8x4xf32> to vector<8x4xbf16>
    %53 = vector.extract_strided_slice %6 {offsets = [0, 72], sizes = [8, 4], strides = [1, 1]} : vector<8x96xf32> to vector<8x4xf32>
    %54 = arith.truncf %53 : vector<8x4xf32> to vector<8x4xbf16>
    "tpu.trace_start"() <{level = 10 : i32, message = "qd,kd->qk"}> : () -> ()
    %cst_17 = arith.constant dense<0.000000e+00> : vector<8x8xf32>
    %55 = tpu.matmul %50, %52, %cst_17 {dimension_numbers = #tpu.dot_dimension_numbers<[1], [1], [0], [0], [0, 0, 1, 0], [], []>} : vector<8x4xbf16>, vector<8x4xbf16>, vector<8x8xf32> -> vector<8x8xf32>
    "tpu.trace_stop"() : () -> ()
    %56 = vector.broadcast %8 : vector<1x8xf32> to vector<8x8xf32>
    %57 = arith.addf %55, %56 : vector<8x8xf32>
    %cst_18 = arith.constant dense<0xFF800000> : vector<8xf32>
    %58 = vector.multi_reduction <maximumf>, %57, %cst_18 [1] : vector<8x8xf32> to vector<8xf32>
    %59 = vector.shape_cast %58 : vector<8xf32> to vector<8x1xf32>
    %60 = vector.broadcast %59 : vector<8x1xf32> to vector<8x8xf32>
    %61 = arith.subf %57, %60 : vector<8x8xf32>
    %62 = math.exp %61 : vector<8x8xf32>
    %cst_19 = arith.constant dense<0.000000e+00> : vector<8xf32>
    %63 = vector.multi_reduction <add>, %62, %cst_19 [1] : vector<8x8xf32> to vector<8xf32>
    %64 = vector.shape_cast %63 : vector<8xf32> to vector<8x1xf32>
    %65 = vector.broadcast %64 : vector<8x1xf32> to vector<8x8xf32>
    %66 = arith.divf %62, %65 : vector<8x8xf32>
    %67 = arith.truncf %66 : vector<8x8xf32> to vector<8x8xbf16>
    %cst_20 = arith.constant dense<0.000000e+00> : vector<8x4xf32>
    %68 = tpu.matmul %67, %54, %cst_20 {dimension_numbers = #tpu.dot_dimension_numbers<[1], [0], [0], [1], [0, 0, 1, 1], [], []>} : vector<8x8xbf16>, vector<8x4xbf16>, vector<8x4xf32> -> vector<8x4xf32>
    %69 = vector.extract_strided_slice %6 {offsets = [0, 12], sizes = [8, 4], strides = [1, 1]} : vector<8x96xf32> to vector<8x4xf32>
    %70 = arith.truncf %69 : vector<8x4xf32> to vector<8x4xbf16>
    %71 = vector.extract_strided_slice %6 {offsets = [0, 44], sizes = [8, 4], strides = [1, 1]} : vector<8x96xf32> to vector<8x4xf32>
    %72 = arith.truncf %71 : vector<8x4xf32> to vector<8x4xbf16>
    %73 = vector.extract_strided_slice %6 {offsets = [0, 76], sizes = [8, 4], strides = [1, 1]} : vector<8x96xf32> to vector<8x4xf32>
    %74 = arith.truncf %73 : vector<8x4xf32> to vector<8x4xbf16>
    "tpu.trace_start"() <{level = 10 : i32, message = "qd,kd->qk"}> : () -> ()
    %cst_21 = arith.constant dense<0.000000e+00> : vector<8x8xf32>
    %75 = tpu.matmul %70, %72, %cst_21 {dimension_numbers = #tpu.dot_dimension_numbers<[1], [1], [0], [0], [0, 0, 1, 0], [], []>} : vector<8x4xbf16>, vector<8x4xbf16>, vector<8x8xf32> -> vector<8x8xf32>
    "tpu.trace_stop"() : () -> ()
    %76 = vector.broadcast %8 : vector<1x8xf32> to vector<8x8xf32>
    %77 = arith.addf %75, %76 : vector<8x8xf32>
    %cst_22 = arith.constant dense<0xFF800000> : vector<8xf32>
    %78 = vector.multi_reduction <maximumf>, %77, %cst_22 [1] : vector<8x8xf32> to vector<8xf32>
    %79 = vector.shape_cast %78 : vector<8xf32> to vector<8x1xf32>
    %80 = vector.broadcast %79 : vector<8x1xf32> to vector<8x8xf32>
    %81 = arith.subf %77, %80 : vector<8x8xf32>
    %82 = math.exp %81 : vector<8x8xf32>
    %cst_23 = arith.constant dense<0.000000e+00> : vector<8xf32>
    %83 = vector.multi_reduction <add>, %82, %cst_23 [1] : vector<8x8xf32> to vector<8xf32>
    %84 = vector.shape_cast %83 : vector<8xf32> to vector<8x1xf32>
    %85 = vector.broadcast %84 : vector<8x1xf32> to vector<8x8xf32>
    %86 = arith.divf %82, %85 : vector<8x8xf32>
    %87 = arith.truncf %86 : vector<8x8xf32> to vector<8x8xbf16>
    %cst_24 = arith.constant dense<0.000000e+00> : vector<8x4xf32>
    %88 = tpu.matmul %87, %74, %cst_24 {dimension_numbers = #tpu.dot_dimension_numbers<[1], [0], [0], [1], [0, 0, 1, 1], [], []>} : vector<8x8xbf16>, vector<8x4xbf16>, vector<8x4xf32> -> vector<8x4xf32>
    %89 = vector.extract_strided_slice %6 {offsets = [0, 16], sizes = [8, 4], strides = [1, 1]} : vector<8x96xf32> to vector<8x4xf32>
    %90 = arith.truncf %89 : vector<8x4xf32> to vector<8x4xbf16>
    %91 = vector.extract_strided_slice %6 {offsets = [0, 48], sizes = [8, 4], strides = [1, 1]} : vector<8x96xf32> to vector<8x4xf32>
    %92 = arith.truncf %91 : vector<8x4xf32> to vector<8x4xbf16>
    %93 = vector.extract_strided_slice %6 {offsets = [0, 80], sizes = [8, 4], strides = [1, 1]} : vector<8x96xf32> to vector<8x4xf32>
    %94 = arith.truncf %93 : vector<8x4xf32> to vector<8x4xbf16>
    "tpu.trace_start"() <{level = 10 : i32, message = "qd,kd->qk"}> : () -> ()
    %cst_25 = arith.constant dense<0.000000e+00> : vector<8x8xf32>
    %95 = tpu.matmul %90, %92, %cst_25 {dimension_numbers = #tpu.dot_dimension_numbers<[1], [1], [0], [0], [0, 0, 1, 0], [], []>} : vector<8x4xbf16>, vector<8x4xbf16>, vector<8x8xf32> -> vector<8x8xf32>
    "tpu.trace_stop"() : () -> ()
    %96 = vector.broadcast %8 : vector<1x8xf32> to vector<8x8xf32>
    %97 = arith.addf %95, %96 : vector<8x8xf32>
    %cst_26 = arith.constant dense<0xFF800000> : vector<8xf32>
    %98 = vector.multi_reduction <maximumf>, %97, %cst_26 [1] : vector<8x8xf32> to vector<8xf32>
    %99 = vector.shape_cast %98 : vector<8xf32> to vector<8x1xf32>
    %100 = vector.broadcast %99 : vector<8x1xf32> to vector<8x8xf32>
    %101 = arith.subf %97, %100 : vector<8x8xf32>
    %102 = math.exp %101 : vector<8x8xf32>
    %cst_27 = arith.constant dense<0.000000e+00> : vector<8xf32>
    %103 = vector.multi_reduction <add>, %102, %cst_27 [1] : vector<8x8xf32> to vector<8xf32>
    %104 = vector.shape_cast %103 : vector<8xf32> to vector<8x1xf32>
    %105 = vector.broadcast %104 : vector<8x1xf32> to vector<8x8xf32>
    %106 = arith.divf %102, %105 : vector<8x8xf32>
    %107 = arith.truncf %106 : vector<8x8xf32> to vector<8x8xbf16>
    %cst_28 = arith.constant dense<0.000000e+00> : vector<8x4xf32>
    %108 = tpu.matmul %107, %94, %cst_28 {dimension_numbers = #tpu.dot_dimension_numbers<[1], [0], [0], [1], [0, 0, 1, 1], [], []>} : vector<8x8xbf16>, vector<8x4xbf16>, vector<8x4xf32> -> vector<8x4xf32>
    %109 = vector.extract_strided_slice %6 {offsets = [0, 20], sizes = [8, 4], strides = [1, 1]} : vector<8x96xf32> to vector<8x4xf32>
    %110 = arith.truncf %109 : vector<8x4xf32> to vector<8x4xbf16>
    %111 = vector.extract_strided_slice %6 {offsets = [0, 52], sizes = [8, 4], strides = [1, 1]} : vector<8x96xf32> to vector<8x4xf32>
    %112 = arith.truncf %111 : vector<8x4xf32> to vector<8x4xbf16>
    %113 = vector.extract_strided_slice %6 {offsets = [0, 84], sizes = [8, 4], strides = [1, 1]} : vector<8x96xf32> to vector<8x4xf32>
    %114 = arith.truncf %113 : vector<8x4xf32> to vector<8x4xbf16>
    "tpu.trace_start"() <{level = 10 : i32, message = "qd,kd->qk"}> : () -> ()
    %cst_29 = arith.constant dense<0.000000e+00> : vector<8x8xf32>
    %115 = tpu.matmul %110, %112, %cst_29 {dimension_numbers = #tpu.dot_dimension_numbers<[1], [1], [0], [0], [0, 0, 1, 0], [], []>} : vector<8x4xbf16>, vector<8x4xbf16>, vector<8x8xf32> -> vector<8x8xf32>
    "tpu.trace_stop"() : () -> ()
    %116 = vector.broadcast %8 : vector<1x8xf32> to vector<8x8xf32>
    %117 = arith.addf %115, %116 : vector<8x8xf32>
    %cst_30 = arith.constant dense<0xFF800000> : vector<8xf32>
    %118 = vector.multi_reduction <maximumf>, %117, %cst_30 [1] : vector<8x8xf32> to vector<8xf32>
    %119 = vector.shape_cast %118 : vector<8xf32> to vector<8x1xf32>
    %120 = vector.broadcast %119 : vector<8x1xf32> to vector<8x8xf32>
    %121 = arith.subf %117, %120 : vector<8x8xf32>
    %122 = math.exp %121 : vector<8x8xf32>
    %cst_31 = arith.constant dense<0.000000e+00> : vector<8xf32>
    %123 = vector.multi_reduction <add>, %122, %cst_31 [1] : vector<8x8xf32> to vector<8xf32>
    %124 = vector.shape_cast %123 : vector<8xf32> to vector<8x1xf32>
    %125 = vector.broadcast %124 : vector<8x1xf32> to vector<8x8xf32>
    %126 = arith.divf %122, %125 : vector<8x8xf32>
    %127 = arith.truncf %126 : vector<8x8xf32> to vector<8x8xbf16>
    %cst_32 = arith.constant dense<0.000000e+00> : vector<8x4xf32>
    %128 = tpu.matmul %127, %114, %cst_32 {dimension_numbers = #tpu.dot_dimension_numbers<[1], [0], [0], [1], [0, 0, 1, 1], [], []>} : vector<8x8xbf16>, vector<8x4xbf16>, vector<8x4xf32> -> vector<8x4xf32>
    %129 = vector.extract_strided_slice %6 {offsets = [0, 24], sizes = [8, 4], strides = [1, 1]} : vector<8x96xf32> to vector<8x4xf32>
    %130 = arith.truncf %129 : vector<8x4xf32> to vector<8x4xbf16>
    %131 = vector.extract_strided_slice %6 {offsets = [0, 56], sizes = [8, 4], strides = [1, 1]} : vector<8x96xf32> to vector<8x4xf32>
    %132 = arith.truncf %131 : vector<8x4xf32> to vector<8x4xbf16>
    %133 = vector.extract_strided_slice %6 {offsets = [0, 88], sizes = [8, 4], strides = [1, 1]} : vector<8x96xf32> to vector<8x4xf32>
    %134 = arith.truncf %133 : vector<8x4xf32> to vector<8x4xbf16>
    "tpu.trace_start"() <{level = 10 : i32, message = "qd,kd->qk"}> : () -> ()
    %cst_33 = arith.constant dense<0.000000e+00> : vector<8x8xf32>
    %135 = tpu.matmul %130, %132, %cst_33 {dimension_numbers = #tpu.dot_dimension_numbers<[1], [1], [0], [0], [0, 0, 1, 0], [], []>} : vector<8x4xbf16>, vector<8x4xbf16>, vector<8x8xf32> -> vector<8x8xf32>
    "tpu.trace_stop"() : () -> ()
    %136 = vector.broadcast %8 : vector<1x8xf32> to vector<8x8xf32>
    %137 = arith.addf %135, %136 : vector<8x8xf32>
    %cst_34 = arith.constant dense<0xFF800000> : vector<8xf32>
    %138 = vector.multi_reduction <maximumf>, %137, %cst_34 [1] : vector<8x8xf32> to vector<8xf32>
    %139 = vector.shape_cast %138 : vector<8xf32> to vector<8x1xf32>
    %140 = vector.broadcast %139 : vector<8x1xf32> to vector<8x8xf32>
    %141 = arith.subf %137, %140 : vector<8x8xf32>
    %142 = math.exp %141 : vector<8x8xf32>
    %cst_35 = arith.constant dense<0.000000e+00> : vector<8xf32>
    %143 = vector.multi_reduction <add>, %142, %cst_35 [1] : vector<8x8xf32> to vector<8xf32>
    %144 = vector.shape_cast %143 : vector<8xf32> to vector<8x1xf32>
    %145 = vector.broadcast %144 : vector<8x1xf32> to vector<8x8xf32>
    %146 = arith.divf %142, %145 : vector<8x8xf32>
    %147 = arith.truncf %146 : vector<8x8xf32> to vector<8x8xbf16>
    %cst_36 = arith.constant dense<0.000000e+00> : vector<8x4xf32>
    %148 = tpu.matmul %147, %134, %cst_36 {dimension_numbers = #tpu.dot_dimension_numbers<[1], [0], [0], [1], [0, 0, 1, 1], [], []>} : vector<8x8xbf16>, vector<8x4xbf16>, vector<8x4xf32> -> vector<8x4xf32>
    %149 = vector.extract_strided_slice %6 {offsets = [0, 28], sizes = [8, 4], strides = [1, 1]} : vector<8x96xf32> to vector<8x4xf32>
    %150 = arith.truncf %149 : vector<8x4xf32> to vector<8x4xbf16>
    %151 = vector.extract_strided_slice %6 {offsets = [0, 60], sizes = [8, 4], strides = [1, 1]} : vector<8x96xf32> to vector<8x4xf32>
    %152 = arith.truncf %151 : vector<8x4xf32> to vector<8x4xbf16>
    %153 = vector.extract_strided_slice %6 {offsets = [0, 92], sizes = [8, 4], strides = [1, 1]} : vector<8x96xf32> to vector<8x4xf32>
    %154 = arith.truncf %153 : vector<8x4xf32> to vector<8x4xbf16>
    "tpu.trace_start"() <{level = 10 : i32, message = "qd,kd->qk"}> : () -> ()
    %cst_37 = arith.constant dense<0.000000e+00> : vector<8x8xf32>
    %155 = tpu.matmul %150, %152, %cst_37 {dimension_numbers = #tpu.dot_dimension_numbers<[1], [1], [0], [0], [0, 0, 1, 0], [], []>} : vector<8x4xbf16>, vector<8x4xbf16>, vector<8x8xf32> -> vector<8x8xf32>
    "tpu.trace_stop"() : () -> ()
    %156 = vector.broadcast %8 : vector<1x8xf32> to vector<8x8xf32>
    %157 = arith.addf %155, %156 : vector<8x8xf32>
    %cst_38 = arith.constant dense<0xFF800000> : vector<8xf32>
    %158 = vector.multi_reduction <maximumf>, %157, %cst_38 [1] : vector<8x8xf32> to vector<8xf32>
    %159 = vector.shape_cast %158 : vector<8xf32> to vector<8x1xf32>
    %160 = vector.broadcast %159 : vector<8x1xf32> to vector<8x8xf32>
    %161 = arith.subf %157, %160 : vector<8x8xf32>
    %162 = math.exp %161 : vector<8x8xf32>
    %cst_39 = arith.constant dense<0.000000e+00> : vector<8xf32>
    %163 = vector.multi_reduction <add>, %162, %cst_39 [1] : vector<8x8xf32> to vector<8xf32>
    %164 = vector.shape_cast %163 : vector<8xf32> to vector<8x1xf32>
    %165 = vector.broadcast %164 : vector<8x1xf32> to vector<8x8xf32>
    %166 = arith.divf %162, %165 : vector<8x8xf32>
    %167 = arith.truncf %166 : vector<8x8xf32> to vector<8x8xbf16>
    %cst_40 = arith.constant dense<0.000000e+00> : vector<8x4xf32>
    %168 = tpu.matmul %167, %154, %cst_40 {dimension_numbers = #tpu.dot_dimension_numbers<[1], [0], [0], [1], [0, 0, 1, 1], [], []>} : vector<8x8xbf16>, vector<8x4xbf16>, vector<8x4xf32> -> vector<8x4xf32>
    %169 = tpu.concatenate %28, %48, %68, %88, %108, %128, %148, %168 in 1 : vector<8x4xf32>, vector<8x4xf32>, vector<8x4xf32>, vector<8x4xf32>, vector<8x4xf32>, vector<8x4xf32>, vector<8x4xf32>, vector<8x4xf32> -> vector<8x32xf32>
    %170 = arith.truncf %169 : vector<8x32xf32> to vector<8x32xbf16>
    %c0_41 = arith.constant 0 : index
    %c0_42 = arith.constant 0 : index
    %171 = vector.load %arg6[%c0_41, %c0_42] : memref<32x32xbf16, #tpu.memory_space<vmem>>, vector<32x32xbf16>
    %cst_43 = arith.constant dense<0.000000e+00> : vector<8x32xf32>
    %172 = tpu.matmul %170, %171, %cst_43 {dimension_numbers = #tpu.dot_dimension_numbers<[1], [0], [0], [1], [0, 0, 1, 1], [], []>} : vector<8x32xbf16>, vector<32x32xbf16>, vector<8x32xf32> -> vector<8x32xf32>
    %c0_44 = arith.constant 0 : index
    %c0_45 = arith.constant 0 : index
    %173 = vector.load %arg7[%c0_44, %c0_45] : memref<1x32xf32, #tpu.memory_space<vmem>>, vector<1x32xf32>
    %174 = vector.broadcast %173 : vector<1x32xf32> to vector<8x32xf32>
    %175 = arith.addf %172, %174 : vector<8x32xf32>
    %176 = arith.truncf %175 : vector<8x32xf32> to vector<8x32xbf16>
    %c0_46 = arith.constant 0 : index
    %c0_47 = arith.constant 0 : index
    %177 = vector.load %arg8[%c0_46, %c0_47] : memref<32x128xbf16, #tpu.memory_space<vmem>>, vector<32x128xbf16>
    %cst_48 = arith.constant dense<0.000000e+00> : vector<8x128xf32>
    %178 = tpu.matmul %176, %177, %cst_48 {dimension_numbers = #tpu.dot_dimension_numbers<[1], [0], [0], [1], [0, 0, 1, 1], [], []>} : vector<8x32xbf16>, vector<32x128xbf16>, vector<8x128xf32> -> vector<8x128xf32>
    %c0_49 = arith.constant 0 : index
    %c0_50 = arith.constant 0 : index
    %179 = vector.load %arg9[%c0_49, %c0_50] : memref<1x128xf32, #tpu.memory_space<vmem>>, vector<1x128xf32>
    %180 = vector.broadcast %179 : vector<1x128xf32> to vector<8x128xf32>
    %181 = arith.addf %178, %180 : vector<8x128xf32>
    %182 = math.tanh %181 : vector<8x128xf32>
    %183 = arith.truncf %182 : vector<8x128xf32> to vector<8x128xbf16>
    %c0_51 = arith.constant 0 : index
    %c0_52 = arith.constant 0 : index
    %184 = vector.load %arg10[%c0_51, %c0_52] : memref<128x1xbf16, #tpu.memory_space<vmem>>, vector<128x1xbf16>
    %cst_53 = arith.constant dense<0.000000e+00> : vector<8x1xf32>
    %185 = tpu.matmul %183, %184, %cst_53 {dimension_numbers = #tpu.dot_dimension_numbers<[1], [0], [0], [1], [0, 0, 1, 1], [], []>} : vector<8x128xbf16>, vector<128x1xbf16>, vector<8x1xf32> -> vector<8x1xf32>
    %c0_54 = arith.constant 0 : index
    %c0_55 = arith.constant 0 : index
    %186 = vector.load %arg11[%c0_54, %c0_55] : memref<1x1xf32, #tpu.memory_space<vmem>>, vector<1x1xf32>
    %187 = vector.broadcast %186 : vector<1x1xf32> to vector<8x1xf32>
    %188 = arith.addf %185, %187 : vector<8x1xf32>
    %189 = vector.shape_cast %175 : vector<8x32xf32> to vector<1x8x32xf32>
    %190 = vector.shape_cast %188 : vector<8x1xf32> to vector<1x8x1xf32>
    %c0_56 = arith.constant 0 : index
    %c0_57 = arith.constant 0 : index
    %c0_58 = arith.constant 0 : index
    %191 = vector.load %arg3[%c0_56, %c0_57, %c0_58] : memref<1x8x1xf32, #tpu.memory_space<vmem>>, vector<1x8x1xf32>
    %192 = arith.addf %190, %191 : vector<1x8x1xf32>
    %cst_59 = arith.constant dense<0xFF800000> : vector<1x1xf32>
    %193 = vector.multi_reduction <maximumf>, %192, %cst_59 [1] : vector<1x8x1xf32> to vector<1x1xf32>
    %194 = vector.shape_cast %193 : vector<1x1xf32> to vector<1x1x1xf32>
    %195 = vector.broadcast %194 : vector<1x1x1xf32> to vector<1x8x1xf32>
    %196 = arith.subf %192, %195 : vector<1x8x1xf32>
    %197 = math.exp %196 : vector<1x8x1xf32>
    %cst_60 = arith.constant dense<0.000000e+00> : vector<1x1xf32>
    %198 = vector.multi_reduction <add>, %197, %cst_60 [1] : vector<1x8x1xf32> to vector<1x1xf32>
    %199 = vector.shape_cast %198 : vector<1x1xf32> to vector<1x1x1xf32>
    %200 = vector.broadcast %199 : vector<1x1x1xf32> to vector<1x8x1xf32>
    %201 = arith.divf %197, %200 : vector<1x8x1xf32>
    %202 = vector.broadcast %201 : vector<1x8x1xf32> to vector<1x8x32xf32>
    %203 = arith.mulf %202, %189 : vector<1x8x32xf32>
    %cst_61 = arith.constant dense<0.000000e+00> : vector<1x32xf32>
    %204 = vector.multi_reduction <add>, %203, %cst_61 [1] : vector<1x8x32xf32> to vector<1x32xf32>
    %205 = vector.extract_strided_slice %189 {offsets = [0, 0, 0], sizes = [1, 1, 32], strides = [1, 1, 1]} : vector<1x8x32xf32> to vector<1x1x32xf32>
    %206 = vector.shape_cast %205 : vector<1x1x32xf32> to vector<1x32xf32>
    %207 = arith.truncf %204 : vector<1x32xf32> to vector<1x32xbf16>
    %c0_62 = arith.constant 0 : index
    %c0_63 = arith.constant 0 : index
    %208 = vector.load %arg12[%c0_62, %c0_63] : memref<32x256xbf16, #tpu.memory_space<vmem>>, vector<32x256xbf16>
    %cst_64 = arith.constant dense<0.000000e+00> : vector<1x256xf32>
    %209 = tpu.matmul %207, %208, %cst_64 {dimension_numbers = #tpu.dot_dimension_numbers<[1], [0], [0], [1], [0, 0, 1, 1], [], []>} : vector<1x32xbf16>, vector<32x256xbf16>, vector<1x256xf32> -> vector<1x256xf32>
    %c0_65 = arith.constant 0 : index
    %c0_66 = arith.constant 0 : index
    %210 = vector.load %arg13[%c0_65, %c0_66] : memref<1x256xf32, #tpu.memory_space<vmem>>, vector<1x256xf32>
    %211 = arith.addf %209, %210 : vector<1x256xf32>
    %cst_67 = arith.constant 0.000000e+00 : f32
    %212 = vector.broadcast %cst_67 : f32 to vector<1x256xf32>
    %213 = arith.maximumf %211, %212 : vector<1x256xf32>
    %214 = arith.truncf %213 : vector<1x256xf32> to vector<1x256xbf16>
    %c0_68 = arith.constant 0 : index
    %c0_69 = arith.constant 0 : index
    %215 = vector.load %arg14[%c0_68, %c0_69] : memref<256x128xbf16, #tpu.memory_space<vmem>>, vector<256x128xbf16>
    %cst_70 = arith.constant dense<0.000000e+00> : vector<1x128xf32>
    %216 = tpu.matmul %214, %215, %cst_70 {dimension_numbers = #tpu.dot_dimension_numbers<[1], [0], [0], [1], [0, 0, 1, 1], [], []>} : vector<1x256xbf16>, vector<256x128xbf16>, vector<1x128xf32> -> vector<1x128xf32>
    %c0_71 = arith.constant 0 : index
    %c0_72 = arith.constant 0 : index
    %217 = vector.load %arg15[%c0_71, %c0_72] : memref<1x128xf32, #tpu.memory_space<vmem>>, vector<1x128xf32>
    %218 = arith.addf %216, %217 : vector<1x128xf32>
    %cst_73 = arith.constant 0.000000e+00 : f32
    %219 = vector.broadcast %cst_73 : f32 to vector<1x128xf32>
    %220 = arith.maximumf %218, %219 : vector<1x128xf32>
    %221 = arith.truncf %220 : vector<1x128xf32> to vector<1x128xbf16>
    %c0_74 = arith.constant 0 : index
    %c0_75 = arith.constant 0 : index
    %222 = vector.load %arg16[%c0_74, %c0_75] : memref<128x64xbf16, #tpu.memory_space<vmem>>, vector<128x64xbf16>
    %cst_76 = arith.constant dense<0.000000e+00> : vector<1x64xf32>
    %223 = tpu.matmul %221, %222, %cst_76 {dimension_numbers = #tpu.dot_dimension_numbers<[1], [0], [0], [1], [0, 0, 1, 1], [], []>} : vector<1x128xbf16>, vector<128x64xbf16>, vector<1x64xf32> -> vector<1x64xf32>
    %c0_77 = arith.constant 0 : index
    %c0_78 = arith.constant 0 : index
    %224 = vector.load %arg17[%c0_77, %c0_78] : memref<1x64xf32, #tpu.memory_space<vmem>>, vector<1x64xf32>
    %225 = arith.addf %223, %224 : vector<1x64xf32>
    %226 = arith.truncf %206 : vector<1x32xf32> to vector<1x32xbf16>
    %c0_79 = arith.constant 0 : index
    %c0_80 = arith.constant 0 : index
    %227 = vector.load %arg18[%c0_79, %c0_80] : memref<32x128xbf16, #tpu.memory_space<vmem>>, vector<32x128xbf16>
    %cst_81 = arith.constant dense<0.000000e+00> : vector<1x128xf32>
    %228 = tpu.matmul %226, %227, %cst_81 {dimension_numbers = #tpu.dot_dimension_numbers<[1], [0], [0], [1], [0, 0, 1, 1], [], []>} : vector<1x32xbf16>, vector<32x128xbf16>, vector<1x128xf32> -> vector<1x128xf32>
    %c0_82 = arith.constant 0 : index
    %c0_83 = arith.constant 0 : index
    %229 = vector.load %arg19[%c0_82, %c0_83] : memref<1x128xf32, #tpu.memory_space<vmem>>, vector<1x128xf32>
    %230 = arith.addf %228, %229 : vector<1x128xf32>
    %cst_84 = arith.constant 0.000000e+00 : f32
    %231 = vector.broadcast %cst_84 : f32 to vector<1x128xf32>
    %232 = arith.maximumf %230, %231 : vector<1x128xf32>
    %233 = arith.truncf %232 : vector<1x128xf32> to vector<1x128xbf16>
    %c0_85 = arith.constant 0 : index
    %c0_86 = arith.constant 0 : index
    %234 = vector.load %arg20[%c0_85, %c0_86] : memref<128x64xbf16, #tpu.memory_space<vmem>>, vector<128x64xbf16>
    %cst_87 = arith.constant dense<0.000000e+00> : vector<1x64xf32>
    %235 = tpu.matmul %233, %234, %cst_87 {dimension_numbers = #tpu.dot_dimension_numbers<[1], [0], [0], [1], [0, 0, 1, 1], [], []>} : vector<1x128xbf16>, vector<128x64xbf16>, vector<1x64xf32> -> vector<1x64xf32>
    %c0_88 = arith.constant 0 : index
    %c0_89 = arith.constant 0 : index
    %236 = vector.load %arg21[%c0_88, %c0_89] : memref<1x64xf32, #tpu.memory_space<vmem>>, vector<1x64xf32>
    %237 = arith.addf %235, %236 : vector<1x64xf32>
    %238 = arith.truncf %204 : vector<1x32xf32> to vector<1x32xbf16>
    %c0_90 = arith.constant 0 : index
    %c0_91 = arith.constant 0 : index
    %239 = vector.load %arg22[%c0_90, %c0_91] : memref<32x64xbf16, #tpu.memory_space<vmem>>, vector<32x64xbf16>
    %cst_92 = arith.constant dense<0.000000e+00> : vector<1x64xf32>
    %240 = tpu.matmul %238, %239, %cst_92 {dimension_numbers = #tpu.dot_dimension_numbers<[1], [0], [0], [1], [0, 0, 1, 1], [], []>} : vector<1x32xbf16>, vector<32x64xbf16>, vector<1x64xf32> -> vector<1x64xf32>
    %c0_93 = arith.constant 0 : index
    %c0_94 = arith.constant 0 : index
    %241 = vector.load %arg23[%c0_93, %c0_94] : memref<1x64xf32, #tpu.memory_space<vmem>>, vector<1x64xf32>
    %242 = arith.addf %240, %241 : vector<1x64xf32>
    %cst_95 = arith.constant 0.000000e+00 : f32
    %243 = vector.broadcast %cst_95 : f32 to vector<1x64xf32>
    %244 = arith.maximumf %242, %243 : vector<1x64xf32>
    %245 = arith.truncf %244 : vector<1x64xf32> to vector<1x64xbf16>
    %c0_96 = arith.constant 0 : index
    %c0_97 = arith.constant 0 : index
    %246 = vector.load %arg24[%c0_96, %c0_97] : memref<64x32xbf16, #tpu.memory_space<vmem>>, vector<64x32xbf16>
    %cst_98 = arith.constant dense<0.000000e+00> : vector<1x32xf32>
    %247 = tpu.matmul %245, %246, %cst_98 {dimension_numbers = #tpu.dot_dimension_numbers<[1], [0], [0], [1], [0, 0, 1, 1], [], []>} : vector<1x64xbf16>, vector<64x32xbf16>, vector<1x32xf32> -> vector<1x32xf32>
    %c0_99 = arith.constant 0 : index
    %c0_100 = arith.constant 0 : index
    %248 = vector.load %arg25[%c0_99, %c0_100] : memref<1x32xf32, #tpu.memory_space<vmem>>, vector<1x32xf32>
    %249 = arith.addf %247, %248 : vector<1x32xf32>
    %250 = arith.truncf %225 : vector<1x64xf32> to vector<1x64xbf16>
    %c0_101 = arith.constant 0 : index
    %c0_102 = arith.constant 0 : index
    %251 = vector.load %arg26[%c0_101, %c0_102] : memref<64x128xbf16, #tpu.memory_space<vmem>>, vector<64x128xbf16>
    %cst_103 = arith.constant dense<0.000000e+00> : vector<1x128xf32>
    %252 = tpu.matmul %250, %251, %cst_103 {dimension_numbers = #tpu.dot_dimension_numbers<[1], [0], [0], [1], [0, 0, 1, 1], [], []>} : vector<1x64xbf16>, vector<64x128xbf16>, vector<1x128xf32> -> vector<1x128xf32>
    %253 = arith.truncf %237 : vector<1x64xf32> to vector<1x64xbf16>
    %c0_104 = arith.constant 0 : index
    %c0_105 = arith.constant 0 : index
    %254 = vector.load %arg27[%c0_104, %c0_105] : memref<64x128xbf16, #tpu.memory_space<vmem>>, vector<64x128xbf16>
    %cst_106 = arith.constant dense<0.000000e+00> : vector<1x128xf32>
    %255 = tpu.matmul %253, %254, %cst_106 {dimension_numbers = #tpu.dot_dimension_numbers<[1], [0], [0], [1], [0, 0, 1, 1], [], []>} : vector<1x64xbf16>, vector<64x128xbf16>, vector<1x128xf32> -> vector<1x128xf32>
    %256 = arith.addf %252, %255 : vector<1x128xf32>
    %257 = arith.truncf %249 : vector<1x32xf32> to vector<1x32xbf16>
    %c0_107 = arith.constant 0 : index
    %c0_108 = arith.constant 0 : index
    %258 = vector.load %arg28[%c0_107, %c0_108] : memref<32x128xbf16, #tpu.memory_space<vmem>>, vector<32x128xbf16>
    %cst_109 = arith.constant dense<0.000000e+00> : vector<1x128xf32>
    %259 = tpu.matmul %257, %258, %cst_109 {dimension_numbers = #tpu.dot_dimension_numbers<[1], [0], [0], [1], [0, 0, 1, 1], [], []>} : vector<1x32xbf16>, vector<32x128xbf16>, vector<1x128xf32> -> vector<1x128xf32>
    %260 = arith.addf %256, %259 : vector<1x128xf32>
    %c0_110 = arith.constant 0 : index
    %c0_111 = arith.constant 0 : index
    %261 = vector.load %arg29[%c0_110, %c0_111] : memref<1x128xf32, #tpu.memory_space<vmem>>, vector<1x128xf32>
    %262 = arith.addf %260, %261 : vector<1x128xf32>
    %cst_112 = arith.constant 0.000000e+00 : f32
    %263 = vector.broadcast %cst_112 : f32 to vector<1x128xf32>
    %264 = arith.maximumf %262, %263 : vector<1x128xf32>
    %265 = arith.truncf %264 : vector<1x128xf32> to vector<1x128xbf16>
    %c0_113 = arith.constant 0 : index
    %c0_114 = arith.constant 0 : index
    %266 = vector.load %arg30[%c0_113, %c0_114] : memref<128x64xbf16, #tpu.memory_space<vmem>>, vector<128x64xbf16>
    %cst_115 = arith.constant dense<0.000000e+00> : vector<1x64xf32>
    %267 = tpu.matmul %265, %266, %cst_115 {dimension_numbers = #tpu.dot_dimension_numbers<[1], [0], [0], [1], [0, 0, 1, 1], [], []>} : vector<1x128xbf16>, vector<128x64xbf16>, vector<1x64xf32> -> vector<1x64xf32>
    %c0_116 = arith.constant 0 : index
    %c0_117 = arith.constant 0 : index
    %268 = vector.load %arg31[%c0_116, %c0_117] : memref<1x64xf32, #tpu.memory_space<vmem>>, vector<1x64xf32>
    %269 = arith.addf %267, %268 : vector<1x64xf32>
    %cst_118 = arith.constant 0.000000e+00 : f32
    %270 = vector.broadcast %cst_118 : f32 to vector<1x64xf32>
    %271 = arith.maximumf %269, %270 : vector<1x64xf32>
    %272 = arith.truncf %271 : vector<1x64xf32> to vector<1x64xbf16>
    %c0_119 = arith.constant 0 : index
    %c0_120 = arith.constant 0 : index
    %273 = vector.load %arg32[%c0_119, %c0_120] : memref<64x32xbf16, #tpu.memory_space<vmem>>, vector<64x32xbf16>
    %cst_121 = arith.constant dense<0.000000e+00> : vector<1x32xf32>
    %274 = tpu.matmul %272, %273, %cst_121 {dimension_numbers = #tpu.dot_dimension_numbers<[1], [0], [0], [1], [0, 0, 1, 1], [], []>} : vector<1x64xbf16>, vector<64x32xbf16>, vector<1x32xf32> -> vector<1x32xf32>
    %c0_122 = arith.constant 0 : index
    %c0_123 = arith.constant 0 : index
    %275 = vector.load %arg33[%c0_122, %c0_123] : memref<1x32xf32, #tpu.memory_space<vmem>>, vector<1x32xf32>
    %276 = arith.addf %274, %275 : vector<1x32xf32>
    %cst_124 = arith.constant 0.000000e+00 : f32
    %277 = vector.broadcast %cst_124 : f32 to vector<1x32xf32>
    %278 = arith.maximumf %276, %277 : vector<1x32xf32>
    %279 = arith.truncf %278 : vector<1x32xf32> to vector<1x32xbf16>
    %c0_125 = arith.constant 0 : index
    %c0_126 = arith.constant 0 : index
    %280 = vector.load %arg34[%c0_125, %c0_126] : memref<32x1xbf16, #tpu.memory_space<vmem>>, vector<32x1xbf16>
    %cst_127 = arith.constant dense<0.000000e+00> : vector<1x1xf32>
    %281 = tpu.matmul %279, %280, %cst_127 {dimension_numbers = #tpu.dot_dimension_numbers<[1], [0], [0], [1], [0, 0, 1, 1], [], []>} : vector<1x32xbf16>, vector<32x1xbf16>, vector<1x1xf32> -> vector<1x1xf32>
    %c0_128 = arith.constant 0 : index
    %c0_129 = arith.constant 0 : index
    %282 = vector.load %arg35[%c0_128, %c0_129] : memref<1x1xf32, #tpu.memory_space<vmem>>, vector<1x1xf32>
    %283 = arith.addf %281, %282 : vector<1x1xf32>
    %cst_130 = arith.constant 0.000000e+00 : f32
    %284 = vector.broadcast %cst_130 : f32 to vector<1x1xf32>
    %285 = arith.subf %284, %283 : vector<1x1xf32>
    %286 = math.exp %285 : vector<1x1xf32>
    %cst_131 = arith.constant 1.000000e+00 : f32
    %287 = vector.broadcast %cst_131 : f32 to vector<1x1xf32>
    %288 = arith.addf %287, %286 : vector<1x1xf32>
    %cst_132 = arith.constant 1.000000e+00 : f32
    %289 = vector.broadcast %cst_132 : f32 to vector<1x1xf32>
    %290 = arith.divf %289, %288 : vector<1x1xf32>
    %c0_133 = arith.constant 0 : index
    %c0_134 = arith.constant 0 : index
    %c0_135 = arith.constant 0 : index
    %291 = vector.load %arg36[%c0_133, %c0_134, %c0_135] : memref<1x1x1xf32, #tpu.memory_space<vmem>>, vector<1x1x1xf32>
    %292 = vector.shape_cast %291 : vector<1x1x1xf32> to vector<1x1xf32>
    %293 = vector.shape_cast %290 : vector<1x1xf32> to vector<1x1x1xf32>
    tpu.vector_store %arg36[%c0_133, %c0_134, %c0_135], %293 {strides = array<i32>} : memref<1x1x1xf32, #tpu.memory_space<vmem>>, vector<1x1x1xf32>,
    return
  }
  func.func @transform_0(%arg0: i32) -> (i32, i32, i32) {
    %c0_i32 = arith.constant 0 : i32
    %c0_i32_0 = arith.constant 0 : i32
    %c0_i32_1 = arith.constant 0 : i32
    return %arg0, %c0_i32, %c0_i32_0 : i32, i32, i32
  }
  func.func @transform_1(%arg0: i32) -> (i32, i32, i32) {
    %c0_i32 = arith.constant 0 : i32
    %c0_i32_0 = arith.constant 0 : i32
    %c0_i32_1 = arith.constant 0 : i32
    return %arg0, %c0_i32, %c0_i32_0 : i32, i32, i32
  }
  func.func @transform_2(%arg0: i32) -> (i32, i32, i32) {
    %c0_i32 = arith.constant 0 : i32
    %c0_i32_0 = arith.constant 0 : i32
    %c0_i32_1 = arith.constant 0 : i32
    return %arg0, %c0_i32, %c0_i32_0 : i32, i32, i32
  }
  func.func @transform_3(%arg0: i32) -> (i32, i32) {
    %c0_i32 = arith.constant 0 : i32
    %c0_i32_0 = arith.constant 0 : i32
    %c0_i32_1 = arith.constant 0 : i32
    return %c0_i32, %c0_i32_0 : i32, i32
  }
  func.func @transform_4(%arg0: i32) -> (i32, i32) {
    %c0_i32 = arith.constant 0 : i32
    %c0_i32_0 = arith.constant 0 : i32
    %c0_i32_1 = arith.constant 0 : i32
    return %c0_i32, %c0_i32_0 : i32, i32
  }
  func.func @transform_5(%arg0: i32) -> (i32, i32) {
    %c0_i32 = arith.constant 0 : i32
    %c0_i32_0 = arith.constant 0 : i32
    %c0_i32_1 = arith.constant 0 : i32
    return %c0_i32, %c0_i32_0 : i32, i32
  }
  func.func @transform_6(%arg0: i32) -> (i32, i32) {
    %c0_i32 = arith.constant 0 : i32
    %c0_i32_0 = arith.constant 0 : i32
    %c0_i32_1 = arith.constant 0 : i32
    return %c0_i32, %c0_i32_0 : i32, i32
  }
  func.func @transform_7(%arg0: i32) -> (i32, i32) {
    %c0_i32 = arith.constant 0 : i32
    %c0_i32_0 = arith.constant 0 : i32
    %c0_i32_1 = arith.constant 0 : i32
    return %c0_i32, %c0_i32_0 : i32, i32
  }
  func.func @transform_8(%arg0: i32) -> (i32, i32) {
    %c0_i32 = arith.constant 0 : i32
    %c0_i32_0 = arith.constant 0 : i32
    %c0_i32_1 = arith.constant 0 : i32
    return %c0_i32, %c0_i32_0 : i32, i32
  }
  func.func @transform_9(%arg0: i32) -> (i32, i32) {
    %c0_i32 = arith.constant 0 : i32
    %c0_i32_0 = arith.constant 0 : i32
    %c0_i32_1 = arith.constant 0 : i32
    return %c0_i32, %c0_i32_0 : i32, i32
  }
  func.func @transform_10(%arg0: i32) -> (i32, i32) {
    %c0_i32 = arith.constant 0 : i32
    %c0_i32_0 = arith.constant 0 : i32
    %c0_i32_1 = arith.constant 0 : i32
    return %c0_i32, %c0_i32_0 : i32, i32
  }
  func.func @transform_11(%arg0: i32) -> (i32, i32) {
    %c0_i32 = arith.constant 0 : i32
    %c0_i32_0 = arith.constant 0 : i32
    %c0_i32_1 = arith.constant 0 : i32
    return %c0_i32, %c0_i32_0 : i32, i32
  }
  func.func @transform_12(%arg0: i32) -> (i32, i32) {
    %c0_i32 = arith.constant 0 : i32
    %c0_i32_0 = arith.constant 0 : i32
    %c0_i32_1 = arith.constant 0 : i32
    return %c0_i32, %c0_i32_0 : i32, i32
  }
  func.func @transform_13(%arg0: i32) -> (i32, i32) {
    %c0_i32 = arith.constant 0 : i32
    %c0_i32_0 = arith.constant 0 : i32
    %c0_i32_1 = arith.constant 0 : i32
    return %c0_i32, %c0_i32_0 : i32, i32
  }
  func.func @transform_14(%arg0: i32) -> (i32, i32) {
    %c0_i32 = arith.constant 0 : i32
    %c0_i32_0 = arith.constant 0 : i32
    %c0_i32_1 = arith.constant 0 : i32
    return %c0_i32, %c0_i32_0 : i32, i32
  }
  func.func @transform_15(%arg0: i32) -> (i32, i32) {
    %c0_i32 = arith.constant 0 : i32
    %c0_i32_0 = arith.constant 0 : i32
    %c0_i32_1 = arith.constant 0 : i32
    return %c0_i32, %c0_i32_0 : i32, i32
  }
  func.func @transform_16(%arg0: i32) -> (i32, i32) {
    %c0_i32 = arith.constant 0 : i32
    %c0_i32_0 = arith.constant 0 : i32
    %c0_i32_1 = arith.constant 0 : i32
    return %c0_i32, %c0_i32_0 : i32, i32
  }
  func.func @transform_17(%arg0: i32) -> (i32, i32) {
    %c0_i32 = arith.constant 0 : i32
    %c0_i32_0 = arith.constant 0 : i32
    %c0_i32_1 = arith.constant 0 : i32
    return %c0_i32, %c0_i32_0 : i32, i32
  }
  func.func @transform_18(%arg0: i32) -> (i32, i32) {
    %c0_i32 = arith.constant 0 : i32
    %c0_i32_0 = arith.constant 0 : i32
    %c0_i32_1 = arith.constant 0 : i32
    return %c0_i32, %c0_i32_0 : i32, i32
  }
  func.func @transform_19(%arg0: i32) -> (i32, i32) {
    %c0_i32 = arith.constant 0 : i32
    %c0_i32_0 = arith.constant 0 : i32
    %c0_i32_1 = arith.constant 0 : i32
    return %c0_i32, %c0_i32_0 : i32, i32
  }
  func.func @transform_20(%arg0: i32) -> (i32, i32) {
    %c0_i32 = arith.constant 0 : i32
    %c0_i32_0 = arith.constant 0 : i32
    %c0_i32_1 = arith.constant 0 : i32
    return %c0_i32, %c0_i32_0 : i32, i32
  }
  func.func @transform_21(%arg0: i32) -> (i32, i32) {
    %c0_i32 = arith.constant 0 : i32
    %c0_i32_0 = arith.constant 0 : i32
    %c0_i32_1 = arith.constant 0 : i32
    return %c0_i32, %c0_i32_0 : i32, i32
  }
  func.func @transform_22(%arg0: i32) -> (i32, i32) {
    %c0_i32 = arith.constant 0 : i32
    %c0_i32_0 = arith.constant 0 : i32
    %c0_i32_1 = arith.constant 0 : i32
    return %c0_i32, %c0_i32_0 : i32, i32
  }
  func.func @transform_23(%arg0: i32) -> (i32, i32) {
    %c0_i32 = arith.constant 0 : i32
    %c0_i32_0 = arith.constant 0 : i32
    %c0_i32_1 = arith.constant 0 : i32
    return %c0_i32, %c0_i32_0 : i32, i32
  }
  func.func @transform_24(%arg0: i32) -> (i32, i32) {
    %c0_i32 = arith.constant 0 : i32
    %c0_i32_0 = arith.constant 0 : i32
    %c0_i32_1 = arith.constant 0 : i32
    return %c0_i32, %c0_i32_0 : i32, i32
  }
  func.func @transform_25(%arg0: i32) -> (i32, i32) {
    %c0_i32 = arith.constant 0 : i32
    %c0_i32_0 = arith.constant 0 : i32
    %c0_i32_1 = arith.constant 0 : i32
    return %c0_i32, %c0_i32_0 : i32, i32
  }
  func.func @transform_26(%arg0: i32) -> (i32, i32) {
    %c0_i32 = arith.constant 0 : i32
    %c0_i32_0 = arith.constant 0 : i32
    %c0_i32_1 = arith.constant 0 : i32
    return %c0_i32, %c0_i32_0 : i32, i32
  }
  func.func @transform_27(%arg0: i32) -> (i32, i32) {
    %c0_i32 = arith.constant 0 : i32
    %c0_i32_0 = arith.constant 0 : i32
    %c0_i32_1 = arith.constant 0 : i32
    return %c0_i32, %c0_i32_0 : i32, i32
  }
  func.func @transform_28(%arg0: i32) -> (i32, i32) {
    %c0_i32 = arith.constant 0 : i32
    %c0_i32_0 = arith.constant 0 : i32
    %c0_i32_1 = arith.constant 0 : i32
    return %c0_i32, %c0_i32_0 : i32, i32
  }
  func.func @transform_29(%arg0: i32) -> (i32, i32) {
    %c0_i32 = arith.constant 0 : i32
    %c0_i32_0 = arith.constant 0 : i32
    %c0_i32_1 = arith.constant 0 : i32
    return %c0_i32, %c0_i32_0 : i32, i32
  }
  func.func @transform_30(%arg0: i32) -> (i32, i32) {
    %c0_i32 = arith.constant 0 : i32
    %c0_i32_0 = arith.constant 0 : i32
    %c0_i32_1 = arith.constant 0 : i32
    return %c0_i32, %c0_i32_0 : i32, i32
  }
  func.func @transform_31(%arg0: i32) -> (i32, i32) {
    %c0_i32 = arith.constant 0 : i32
    %c0_i32_0 = arith.constant 0 : i32
    %c0_i32_1 = arith.constant 0 : i32
    return %c0_i32, %c0_i32_0 : i32, i32
  }
  func.func @transform_32(%arg0: i32) -> (i32, i32) {
    %c0_i32 = arith.constant 0 : i32
    %c0_i32_0 = arith.constant 0 : i32
    %c0_i32_1 = arith.constant 0 : i32
    return %c0_i32, %c0_i32_0 : i32, i32
  }
  func.func @transform_33(%arg0: i32) -> (i32, i32) {
    %c0_i32 = arith.constant 0 : i32
    %c0_i32_0 = arith.constant 0 : i32
    %c0_i32_1 = arith.constant 0 : i32
    return %c0_i32, %c0_i32_0 : i32, i32
  }
  func.func @transform_34(%arg0: i32) -> (i32, i32) {
    %c0_i32 = arith.constant 0 : i32
    %c0_i32_0 = arith.constant 0 : i32
    %c0_i32_1 = arith.constant 0 : i32
    return %c0_i32, %c0_i32_0 : i32, i32
  }
  func.func @transform_35(%arg0: i32) -> (i32, i32, i32) {
    %c0_i32 = arith.constant 0 : i32
    %c0_i32_0 = arith.constant 0 : i32
    %c0_i32_1 = arith.constant 0 : i32
    return %arg0, %c0_i32, %c0_i32_0 : i32, i32, i32
  }
}

</mosaic_0001>

<llo_original>
// kernel: credibility_regressor.1
$region0: #{credibility_regressor.1}
  #allocation0 [shape = 'u32[]', space=smem, size = 0x4, offset = 0x4, fixed_abs, tag = 'smem constant byte address 0x4 - core index']
  #allocation1 [shape = 'u32[144,128]{1,0:T(1,128)}', space=vmem, size = 0x12000, scoped, tag = 'internal scratch']
  #allocation2 [shape = 'f32[1,1]{1,0:T(1,128)S(1)}', space=vmem, size = 0x200, scoped, tag = 'scoped memory for credibility_regressor.1']
  #allocation3 [shape = 'f32[1,1]{1,0:T(1,128)S(1)}', space=vmem, size = 0x200, scoped, tag = 'scoped memory for credibility_regressor.1']
  %s0 = inlined_call_operand.smem [shape: u32[36], index: -1, kind: input, shape index: {}]
  %s1 = sld [smem:[%s0]]
  %s2 = scalar_lea.smem %s0, 1
  %s3 = sld [smem:[%s2]]
  %s4 = scalar_lea.smem %s0, 2
  %s5 = sld [smem:[%s4]]
  %s6 = scalar_lea.smem %s0, 3
  %s7 = sld [smem:[%s6]]
  %s8 = scalar_lea.smem %s0, 4
  %s9 = sld [smem:[%s8]]
  %s10 = scalar_lea.smem %s0, 5
  %s11 = sld [smem:[%s10]]
  %s12 = scalar_lea.smem %s0, 6
  %s13 = sld [smem:[%s12]]
  %s14 = scalar_lea.smem %s0, 7
  %s15 = sld [smem:[%s14]]
  %s16 = scalar_lea.smem %s0, 8
  %s17 = sld [smem:[%s16]]
  %s18 = scalar_lea.smem %s0, 9
  %s19 = sld [smem:[%s18]]
  %s20 = scalar_lea.smem %s0, 10
  %s21 = sld [smem:[%s20]]
  %s22 = scalar_lea.smem %s0, 11
  %s23 = sld [smem:[%s22]]
  %s24 = scalar_lea.smem %s0, 12
  %s25 = sld [smem:[%s24]]
  %s26 = scalar_lea.smem %s0, 13
  %s27 = sld [smem:[%s26]]
  %s28 = scalar_lea.smem %s0, 14
  %s29 = sld [smem:[%s28]]
  %s30 = scalar_lea.smem %s0, 15
  %s31 = sld [smem:[%s30]]
  %s32 = scalar_lea.smem %s0, 16
  %s33 = sld [smem:[%s32]]
  %s34 = scalar_lea.smem %s0, 17
  %s35 = sld [smem:[%s34]]
  %s36 = scalar_lea.smem %s0, 18
  %s37 = sld [smem:[%s36]]
  %s38 = scalar_lea.smem %s0, 19
  %s39 = sld [smem:[%s38]]
  %s40 = scalar_lea.smem %s0, 20
  %s41 = sld [smem:[%s40]]
  %s42 = scalar_lea.smem %s0, 21
  %s43 = sld [smem:[%s42]]
  %s44 = scalar_lea.smem %s0, 22
  %s45 = sld [smem:[%s44]]
  %s46 = scalar_lea.smem %s0, 23
  %s47 = sld [smem:[%s46]]
  %s48 = scalar_lea.smem %s0, 24
  %s49 = sld [smem:[%s48]]
  %s50 = scalar_lea.smem %s0, 25
  %s51 = sld [smem:[%s50]]
  %s52 = scalar_lea.smem %s0, 26
  %s53 = sld [smem:[%s52]]
  %s54 = scalar_lea.smem %s0, 27
  %s55 = sld [smem:[%s54]]
  %s56 = scalar_lea.smem %s0, 28
  %s57 = sld [smem:[%s56]]
  %s58 = scalar_lea.smem %s0, 29
  %s59 = sld [smem:[%s58]]
  %s60 = scalar_lea.smem %s0, 30
  %s61 = sld [smem:[%s60]]
  %s62 = scalar_lea.smem %s0, 31
  %s63 = sld [smem:[%s62]]
  %s64 = scalar_lea.smem %s0, 32
  %s65 = sld [smem:[%s64]]
  %s66 = scalar_lea.smem %s0, 33
  %s67 = sld [smem:[%s66]]
  %s68 = scalar_lea.smem %s0, 34
  %s69 = sld [smem:[%s68]]
  %s70 = scalar_lea.smem %s0, 35
  %s71 = sld [smem:[%s70]]
  %s72 = sld [smem:[#allocation0]]
  $region173: #{credibility_regressor.1} parent=0
    _
  %s74 = ssub.s32 1, %s72
  %s75 = scalar_select 0, %s74, %s72
  %v76 = vstv %s21
  %77 = vst [vmem:[#allocation2] sm:$0x1] %v76
  %v78 = vstv %s69
  %79 = vst [vmem:[#allocation3] sm:$0x1] %v78
  loop: start=0, step=1, limit=4
  $region2: #{credibility_regressor.1} parent=0 // loop_pre_header
    _
  $region3: #{credibility_regressor.1} parent=0 // loop_header
    %s81 = sphi 0, %s85
    %p82 = scmp.ge.s32.totalorder %s81, 4
    %s91 = sphi 0, %s93
    %s94 = sphi 0, %s91
    %s95 = sphi 0, %s94
    %s111 = sphi 0, %s95
    %s117 = sphi 0, %s119
    %s120 = sphi 0, %s117
    %s121 = sphi 0, %s120
    %s137 = sphi 0, %s121
    %s143 = sphi 0, %s145
    %s146 = sphi 0, %s143
    %s147 = sphi 0, %s146
    %s163 = sphi 0, %s147
    %s167 = sphi 0, %s167
    %s169 = sphi 0, %s167
    %s170 = sphi 0, %s169
    %s184 = sphi 0, %s170
    %s188 = sphi 0, %s188
    %s190 = sphi 0, %s188
    %s191 = sphi 0, %s190
    %s205 = sphi 0, %s191
    %s209 = sphi 0, %s209
    %s211 = sphi 0, %s209
    %s212 = sphi 0, %s211
    %s226 = sphi 0, %s212
    %s230 = sphi 0, %s230
    %s232 = sphi 0, %s230
    %s233 = sphi 0, %s232
    %s247 = sphi 0, %s233
    %s251 = sphi 0, %s251
    %s253 = sphi 0, %s251
    %s254 = sphi 0, %s253
    %s268 = sphi 0, %s254
    %s272 = sphi 0, %s272
    %s274 = sphi 0, %s272
    %s275 = sphi 0, %s274
    %s289 = sphi 0, %s275
    %s293 = sphi 0, %s293
    %s295 = sphi 0, %s293
    %s296 = sphi 0, %s295
    %s310 = sphi 0, %s296
    %s314 = sphi 0, %s314
    %s316 = sphi 0, %s314
    %s317 = sphi 0, %s316
    %s331 = sphi 0, %s317
    %s335 = sphi 0, %s335
    %s337 = sphi 0, %s335
    %s338 = sphi 0, %s337
    %s352 = sphi 0, %s338
    %s356 = sphi 0, %s356
    %s358 = sphi 0, %s356
    %s359 = sphi 0, %s358
    %s373 = sphi 0, %s359
    %s377 = sphi 0, %s377
    %s379 = sphi 0, %s377
    %s380 = sphi 0, %s379
    %s394 = sphi 0, %s380
    %s398 = sphi 0, %s398
    %s400 = sphi 0, %s398
    %s401 = sphi 0, %s400
    %s415 = sphi 0, %s401
    %s419 = sphi 0, %s419
    %s421 = sphi 0, %s419
    %s422 = sphi 0, %s421
    %s436 = sphi 0, %s422
    %s440 = sphi 0, %s440
    %s442 = sphi 0, %s440
    %s443 = sphi 0, %s442
    %s457 = sphi 0, %s443
    %s461 = sphi 0, %s461
    %s463 = sphi 0, %s461
    %s464 = sphi 0, %s463
    %s478 = sphi 0, %s464
    %s482 = sphi 0, %s482
    %s484 = sphi 0, %s482
    %s485 = sphi 0, %s484
    %s499 = sphi 0, %s485
    %s503 = sphi 0, %s503
    %s505 = sphi 0, %s503
    %s506 = sphi 0, %s505
    %s520 = sphi 0, %s506
    %s524 = sphi 0, %s524
    %s526 = sphi 0, %s524
    %s527 = sphi 0, %s526
    %s541 = sphi 0, %s527
    %s545 = sphi 0, %s545
    %s547 = sphi 0, %s545
    %s548 = sphi 0, %s547
    %s562 = sphi 0, %s548
    %s566 = sphi 0, %s566
    %s568 = sphi 0, %s566
    %s569 = sphi 0, %s568
    %s583 = sphi 0, %s569
    %s587 = sphi 0, %s587
    %s589 = sphi 0, %s587
    %s590 = sphi 0, %s589
    %s604 = sphi 0, %s590
    %s608 = sphi 0, %s608
    %s610 = sphi 0, %s608
    %s611 = sphi 0, %s610
    %s625 = sphi 0, %s611
    %s629 = sphi 0, %s629
    %s631 = sphi 0, %s629
    %s632 = sphi 0, %s631
    %s646 = sphi 0, %s632
    %s650 = sphi 0, %s650
    %s652 = sphi 0, %s650
    %s653 = sphi 0, %s652
    %s667 = sphi 0, %s653
    %s671 = sphi 0, %s671
    %s673 = sphi 0, %s671
    %s674 = sphi 0, %s673
    %s688 = sphi 0, %s674
    %s692 = sphi 0, %s692
    %s694 = sphi 0, %s692
    %s695 = sphi 0, %s694
    %s709 = sphi 0, %s695
    %s713 = sphi 0, %s713
    %s715 = sphi 0, %s713
    %s716 = sphi 0, %s715
    %s730 = sphi 0, %s716
    %s734 = sphi 0, %s734
    %s736 = sphi 0, %s734
    %s737 = sphi 0, %s736
    %s751 = sphi 0, %s737
    %s755 = sphi 0, %s755
    %s757 = sphi 0, %s755
    %s758 = sphi 0, %s757
    %s772 = sphi 0, %s758
    %s776 = sphi 0, %s776
    %s778 = sphi 0, %s776
    %s779 = sphi 0, %s778
    %s793 = sphi 0, %s779
    %s797 = sphi 0, %s797
    %s799 = sphi 0, %s797
    %s800 = sphi 0, %s799
    %s814 = sphi 0, %s800
    %s818 = sphi 0, %s818
    %s820 = sphi 0, %s818
    %s821 = sphi 0, %s820
    %s835 = sphi 0, %s821
    %s841 = sphi 0, %s843
    %s844 = sphi 0, %s841
    %s845 = sphi 0, %s844
    %s861 = sphi 0, %s845
  $region4: #{credibility_regressor.1} parent=0 // loop_header_branch
    %84 = sbr.rel (%p82) target = $region8
  $region5: #{credibility_regressor.1} parent=0 // loop_body
    %s86 = ssub.s32 %s81, 1
    %s87 = ssub.s32 %s81, 2
    %s88 = sadd.s32 %s81, 1
    %s89 = ssub.s32 %s81, %s88
    %p90 = scmp.eq.s32.totalorder %s89, 0
    %s92 = sadd.s32 %s91, 1
    %s93 = scalar_select %p90, %s91, %s92
    %p96 = pneg %p90
    %p97 = scmp.eq.s32.totalorder %s81, 1
    %p98 = por %p96, %p97
    %p99 = scmp.ne.s32.totalorder %s91, %s94
    %p100 = scmp.eq.s32.totalorder %s81, 0
    %p101 = por %p99, %p100
    %p102 = scmp.ne.s32.totalorder %s91, %s94
    %p103 = scmp.eq.s32.totalorder %s86, 1
    %p104 = por %p102, %p103
    %p105 = scmp.ne.s32.totalorder %s94, %s95
    %p106 = scmp.eq.s32.totalorder %s86, 0
    %p107 = por %p105, %p106
    %p108 = scmp.ne.s32.totalorder %s94, %s95
    %p109 = scmp.eq.s32.totalorder %s87, 1
    %p110 = por %p108, %p109
    %p112 = scmp.ne.s32.totalorder %s95, %s111
    %p113 = scmp.eq.s32.totalorder %s87, 0
    %p114 = por %p112, %p113
    %s115 = ssub.s32 %s81, %s88
    %p116 = scmp.eq.s32.totalorder %s115, 0
    %s118 = sadd.s32 %s117, 1
    %s119 = scalar_select %p116, %s117, %s118
    %p122 = pneg %p116
    %p123 = scmp.eq.s32.totalorder %s81, 1
    %p124 = por %p122, %p123
    %p125 = scmp.ne.s32.totalorder %s117, %s120
    %p126 = scmp.eq.s32.totalorder %s81, 0
    %p127 = por %p125, %p126
    %p128 = scmp.ne.s32.totalorder %s117, %s120
    %p129 = scmp.eq.s32.totalorder %s86, 1
    %p130 = por %p128, %p129
    %p131 = scmp.ne.s32.totalorder %s120, %s121
    %p132 = scmp.eq.s32.totalorder %s86, 0
    %p133 = por %p131, %p132
    %p134 = scmp.ne.s32.totalorder %s120, %s121
    %p135 = scmp.eq.s32.totalorder %s87, 1
    %p136 = por %p134, %p135
    %p138 = scmp.ne.s32.totalorder %s121, %s137
    %p139 = scmp.eq.s32.totalorder %s87, 0
    %p140 = por %p138, %p139
    %s141 = ssub.s32 %s81, %s88
    %p142 = scmp.eq.s32.totalorder %s141, 0
    %s144 = sadd.s32 %s143, 1
    %s145 = scalar_select %p142, %s143, %s144
    %p148 = pneg %p142
    %p149 = scmp.eq.s32.totalorder %s81, 1
    %p150 = por %p148, %p149
    %p151 = scmp.ne.s32.totalorder %s143, %s146
    %p152 = scmp.eq.s32.totalorder %s81, 0
    %p153 = por %p151, %p152
    %p154 = scmp.ne.s32.totalorder %s143, %s146
    %p155 = scmp.eq.s32.totalorder %s86, 1
    %p156 = por %p154, %p155
    %p157 = scmp.ne.s32.totalorder %s146, %s147
    %p158 = scmp.eq.s32.totalorder %s86, 0
    %p159 = por %p157, %p158
    %p160 = scmp.ne.s32.totalorder %s146, %s147
    %p161 = scmp.eq.s32.totalorder %s87, 1
    %p162 = por %p160, %p161
    %p164 = scmp.ne.s32.totalorder %s147, %s163
    %p165 = scmp.eq.s32.totalorder %s87, 0
    %p166 = por %p164, %p165
    %s168 = sadd.s32 %s167, 1
    %p171 = scmp.eq.s32.totalorder %s81, 1
    %p172 = scmp.ne.s32.totalorder %s167, %s169
    %p173 = scmp.eq.s32.totalorder %s81, 0
    %p174 = por %p172, %p173
    %p175 = scmp.ne.s32.totalorder %s167, %s169
    %p176 = scmp.eq.s32.totalorder %s86, 1
    %p177 = por %p175, %p176
    %p178 = scmp.ne.s32.totalorder %s169, %s170
    %p179 = scmp.eq.s32.totalorder %s86, 0
    %p180 = por %p178, %p179
    %p181 = scmp.ne.s32.totalorder %s169, %s170
    %p182 = scmp.eq.s32.totalorder %s87, 1
    %p183 = por %p181, %p182
    %p185 = scmp.ne.s32.totalorder %s170, %s184
    %p186 = scmp.eq.s32.totalorder %s87, 0
    %p187 = por %p185, %p186
    %s189 = sadd.s32 %s188, 1
    %p192 = scmp.eq.s32.totalorder %s81, 1
    %p193 = scmp.ne.s32.totalorder %s188, %s190
    %p194 = scmp.eq.s32.totalorder %s81, 0
    %p195 = por %p193, %p194
    %p196 = scmp.ne.s32.totalorder %s188, %s190
    %p197 = scmp.eq.s32.totalorder %s86, 1
    %p198 = por %p196, %p197
    %p199 = scmp.ne.s32.totalorder %s190, %s191
    %p200 = scmp.eq.s32.totalorder %s86, 0
    %p201 = por %p199, %p200
    %p202 = scmp.ne.s32.totalorder %s190, %s191
    %p203 = scmp.eq.s32.totalorder %s87, 1
    %p204 = por %p202, %p203
    %p206 = scmp.ne.s32.totalorder %s191, %s205
    %p207 = scmp.eq.s32.totalorder %s87, 0
    %p208 = por %p206, %p207
    %s210 = sadd.s32 %s209, 1
    %p213 = scmp.eq.s32.totalorder %s81, 1
    %p214 = scmp.ne.s32.totalorder %s209, %s211
    %p215 = scmp.eq.s32.totalorder %s81, 0
    %p216 = por %p214, %p215
    %p217 = scmp.ne.s32.totalorder %s209, %s211
    %p218 = scmp.eq.s32.totalorder %s86, 1
    %p219 = por %p217, %p218
    %p220 = scmp.ne.s32.totalorder %s211, %s212
    %p221 = scmp.eq.s32.totalorder %s86, 0
    %p222 = por %p220, %p221
    %p223 = scmp.ne.s32.totalorder %s211, %s212
    %p224 = scmp.eq.s32.totalorder %s87, 1
    %p225 = por %p223, %p224
    %p227 = scmp.ne.s32.totalorder %s212, %s226
    %p228 = scmp.eq.s32.totalorder %s87, 0
    %p229 = por %p227, %p228
    %s231 = sadd.s32 %s230, 1
    %p234 = scmp.eq.s32.totalorder %s81, 1
    %p235 = scmp.ne.s32.totalorder %s230, %s232
    %p236 = scmp.eq.s32.totalorder %s81, 0
    %p237 = por %p235, %p236
    %p238 = scmp.ne.s32.totalorder %s230, %s232
    %p239 = scmp.eq.s32.totalorder %s86, 1
    %p240 = por %p238, %p239
    %p241 = scmp.ne.s32.totalorder %s232, %s233
    %p242 = scmp.eq.s32.totalorder %s86, 0
    %p243 = por %p241, %p242
    %p244 = scmp.ne.s32.totalorder %s232, %s233
    %p245 = scmp.eq.s32.totalorder %s87, 1
    %p246 = por %p244, %p245
    %p248 = scmp.ne.s32.totalorder %s233, %s247
    %p249 = scmp.eq.s32.totalorder %s87, 0
    %p250 = por %p248, %p249
    %s252 = sadd.s32 %s251, 1
    %p255 = scmp.eq.s32.totalorder %s81, 1
    %p256 = scmp.ne.s32.totalorder %s251, %s253
    %p257 = scmp.eq.s32.totalorder %s81, 0
    %p258 = por %p256, %p257
    %p259 = scmp.ne.s32.totalorder %s251, %s253
    %p260 = scmp.eq.s32.totalorder %s86, 1
    %p261 = por %p259, %p260
    %p262 = scmp.ne.s32.totalorder %s253, %s254
    %p263 = scmp.eq.s32.totalorder %s86, 0
    %p264 = por %p262, %p263
    %p265 = scmp.ne.s32.totalorder %s253, %s254
    %p266 = scmp.eq.s32.totalorder %s87, 1
    %p267 = por %p265, %p266
    %p269 = scmp.ne.s32.totalorder %s254, %s268
    %p270 = scmp.eq.s32.totalorder %s87, 0
    %p271 = por %p269, %p270
    %s273 = sadd.s32 %s272, 1
    %p276 = scmp.eq.s32.totalorder %s81, 1
    %p277 = scmp.ne.s32.totalorder %s272, %s274
    %p278 = scmp.eq.s32.totalorder %s81, 0
    %p279 = por %p277, %p278
    %p280 = scmp.ne.s32.totalorder %s272, %s274
    %p281 = scmp.eq.s32.totalorder %s86, 1
    %p282 = por %p280, %p281
    %p283 = scmp.ne.s32.totalorder %s274, %s275
    %p284 = scmp.eq.s32.totalorder %s86, 0
    %p285 = por %p283, %p284
    %p286 = scmp.ne.s32.totalorder %s274, %s275
    %p287 = scmp.eq.s32.totalorder %s87, 1
    %p288 = por %p286, %p287
    %p290 = scmp.ne.s32.totalorder %s275, %s289
    %p291 = scmp.eq.s32.totalorder %s87, 0
    %p292 = por %p290, %p291
    %s294 = sadd.s32 %s293, 1
    %p297 = scmp.eq.s32.totalorder %s81, 1
    %p298 = scmp.ne.s32.totalorder %s293, %s295
    %p299 = scmp.eq.s32.totalorder %s81, 0
    %p300 = por %p298, %p299
    %p301 = scmp.ne.s32.totalorder %s293, %s295
    %p302 = scmp.eq.s32.totalorder %s86, 1
    %p303 = por %p301, %p302
    %p304 = scmp.ne.s32.totalorder %s295, %s296
    %p305 = scmp.eq.s32.totalorder %s86, 0
    %p306 = por %p304, %p305
    %p307 = scmp.ne.s32.totalorder %s295, %s296
    %p308 = scmp.eq.s32.totalorder %s87, 1
    %p309 = por %p307, %p308
    %p311 = scmp.ne.s32.totalorder %s296, %s310
    %p312 = scmp.eq.s32.totalorder %s87, 0
    %p313 = por %p311, %p312
    %s315 = sadd.s32 %s314, 1
    %p318 = scmp.eq.s32.totalorder %s81, 1
    %p319 = scmp.ne.s32.totalorder %s314, %s316
    %p320 = scmp.eq.s32.totalorder %s81, 0
    %p321 = por %p319, %p320
    %p322 = scmp.ne.s32.totalorder %s314, %s316
    %p323 = scmp.eq.s32.totalorder %s86, 1
    %p324 = por %p322, %p323
    %p325 = scmp.ne.s32.totalorder %s316, %s317
    %p326 = scmp.eq.s32.totalorder %s86, 0
    %p327 = por %p325, %p326
    %p328 = scmp.ne.s32.totalorder %s316, %s317
    %p329 = scmp.eq.s32.totalorder %s87, 1
    %p330 = por %p328, %p329
    %p332 = scmp.ne.s32.totalorder %s317, %s331
    %p333 = scmp.eq.s32.totalorder %s87, 0
    %p334 = por %p332, %p333
    %s336 = sadd.s32 %s335, 1
    %p339 = scmp.eq.s32.totalorder %s81, 1
    %p340 = scmp.ne.s32.totalorder %s335, %s337
    %p341 = scmp.eq.s32.totalorder %s81, 0
    %p342 = por %p340, %p341
    %p343 = scmp.ne.s32.totalorder %s335, %s337
    %p344 = scmp.eq.s32.totalorder %s86, 1
    %p345 = por %p343, %p344
    %p346 = scmp.ne.s32.totalorder %s337, %s338
    %p347 = scmp.eq.s32.totalorder %s86, 0
    %p348 = por %p346, %p347
    %p349 = scmp.ne.s32.totalorder %s337, %s338
    %p350 = scmp.eq.s32.totalorder %s87, 1
    %p351 = por %p349, %p350
    %p353 = scmp.ne.s32.totalorder %s338, %s352
    %p354 = scmp.eq.s32.totalorder %s87, 0
    %p355 = por %p353, %p354
    %s357 = sadd.s32 %s356, 1
    %p360 = scmp.eq.s32.totalorder %s81, 1
    %p361 = scmp.ne.s32.totalorder %s356, %s358
    %p362 = scmp.eq.s32.totalorder %s81, 0
    %p363 = por %p361, %p362
    %p364 = scmp.ne.s32.totalorder %s356, %s358
    %p365 = scmp.eq.s32.totalorder %s86, 1
    %p366 = por %p364, %p365
    %p367 = scmp.ne.s32.totalorder %s358, %s359
    %p368 = scmp.eq.s32.totalorder %s86, 0
    %p369 = por %p367, %p368
    %p370 = scmp.ne.s32.totalorder %s358, %s359
    %p371 = scmp.eq.s32.totalorder %s87, 1
    %p372 = por %p370, %p371
    %p374 = scmp.ne.s32.totalorder %s359, %s373
    %p375 = scmp.eq.s32.totalorder %s87, 0
    %p376 = por %p374, %p375
    %s378 = sadd.s32 %s377, 1
    %p381 = scmp.eq.s32.totalorder %s81, 1
    %p382 = scmp.ne.s32.totalorder %s377, %s379
    %p383 = scmp.eq.s32.totalorder %s81, 0
    %p384 = por %p382, %p383
    %p385 = scmp.ne.s32.totalorder %s377, %s379
    %p386 = scmp.eq.s32.totalorder %s86, 1
    %p387 = por %p385, %p386
    %p388 = scmp.ne.s32.totalorder %s379, %s380
    %p389 = scmp.eq.s32.totalorder %s86, 0
    %p390 = por %p388, %p389
    %p391 = scmp.ne.s32.totalorder %s379, %s380
    %p392 = scmp.eq.s32.totalorder %s87, 1
    %p393 = por %p391, %p392
    %p395 = scmp.ne.s32.totalorder %s380, %s394
    %p396 = scmp.eq.s32.totalorder %s87, 0
    %p397 = por %p395, %p396
    %s399 = sadd.s32 %s398, 1
    %p402 = scmp.eq.s32.totalorder %s81, 1
    %p403 = scmp.ne.s32.totalorder %s398, %s400
    %p404 = scmp.eq.s32.totalorder %s81, 0
    %p405 = por %p403, %p404
    %p406 = scmp.ne.s32.totalorder %s398, %s400
    %p407 = scmp.eq.s32.totalorder %s86, 1
    %p408 = por %p406, %p407
    %p409 = scmp.ne.s32.totalorder %s400, %s401
    %p410 = scmp.eq.s32.totalorder %s86, 0
    %p411 = por %p409, %p410
    %p412 = scmp.ne.s32.totalorder %s400, %s401
    %p413 = scmp.eq.s32.totalorder %s87, 1
    %p414 = por %p412, %p413
    %p416 = scmp.ne.s32.totalorder %s401, %s415
    %p417 = scmp.eq.s32.totalorder %s87, 0
    %p418 = por %p416, %p417
    %s420 = sadd.s32 %s419, 1
    %p423 = scmp.eq.s32.totalorder %s81, 1
    %p424 = scmp.ne.s32.totalorder %s419, %s421
    %p425 = scmp.eq.s32.totalorder %s81, 0
    %p426 = por %p424, %p425
    %p427 = scmp.ne.s32.totalorder %s419, %s421
    %p428 = scmp.eq.s32.totalorder %s86, 1
    %p429 = por %p427, %p428
    %p430 = scmp.ne.s32.totalorder %s421, %s422
    %p431 = scmp.eq.s32.totalorder %s86, 0
    %p432 = por %p430, %p431
    %p433 = scmp.ne.s32.totalorder %s421, %s422
    %p434 = scmp.eq.s32.totalorder %s87, 1
    %p435 = por %p433, %p434
    %p437 = scmp.ne.s32.totalorder %s422, %s436
    %p438 = scmp.eq.s32.totalorder %s87, 0
    %p439 = por %p437, %p438
    %s441 = sadd.s32 %s440, 1
    %p444 = scmp.eq.s32.totalorder %s81, 1
    %p445 = scmp.ne.s32.totalorder %s440, %s442
    %p446 = scmp.eq.s32.totalorder %s81, 0
    %p447 = por %p445, %p446
    %p448 = scmp.ne.s32.totalorder %s440, %s442
    %p449 = scmp.eq.s32.totalorder %s86, 1
    %p450 = por %p448, %p449
    %p451 = scmp.ne.s32.totalorder %s442, %s443
    %p452 = scmp.eq.s32.totalorder %s86, 0
    %p453 = por %p451, %p452
    %p454 = scmp.ne.s32.totalorder %s442, %s443
    %p455 = scmp.eq.s32.totalorder %s87, 1
    %p456 = por %p454, %p455
    %p458 = scmp.ne.s32.totalorder %s443, %s457
    %p459 = scmp.eq.s32.totalorder %s87, 0
    %p460 = por %p458, %p459
    %s462 = sadd.s32 %s461, 1
    %p465 = scmp.eq.s32.totalorder %s81, 1
    %p466 = scmp.ne.s32.totalorder %s461, %s463
    %p467 = scmp.eq.s32.totalorder %s81, 0
    %p468 = por %p466, %p467
    %p469 = scmp.ne.s32.totalorder %s461, %s463
    %p470 = scmp.eq.s32.totalorder %s86, 1
    %p471 = por %p469, %p470
    %p472 = scmp.ne.s32.totalorder %s463, %s464
    %p473 = scmp.eq.s32.totalorder %s86, 0
    %p474 = por %p472, %p473
    %p475 = scmp.ne.s32.totalorder %s463, %s464
    %p476 = scmp.eq.s32.totalorder %s87, 1
    %p477 = por %p475, %p476
    %p479 = scmp.ne.s32.totalorder %s464, %s478
    %p480 = scmp.eq.s32.totalorder %s87, 0
    %p481 = por %p479, %p480
    %s483 = sadd.s32 %s482, 1
    %p486 = scmp.eq.s32.totalorder %s81, 1
    %p487 = scmp.ne.s32.totalorder %s482, %s484
    %p488 = scmp.eq.s32.totalorder %s81, 0
    %p489 = por %p487, %p488
    %p490 = scmp.ne.s32.totalorder %s482, %s484
    %p491 = scmp.eq.s32.totalorder %s86, 1
    %p492 = por %p490, %p491
    %p493 = scmp.ne.s32.totalorder %s484, %s485
    %p494 = scmp.eq.s32.totalorder %s86, 0
    %p495 = por %p493, %p494
    %p496 = scmp.ne.s32.totalorder %s484, %s485
    %p497 = scmp.eq.s32.totalorder %s87, 1
    %p498 = por %p496, %p497
    %p500 = scmp.ne.s32.totalorder %s485, %s499
    %p501 = scmp.eq.s32.totalorder %s87, 0
    %p502 = por %p500, %p501
    %s504 = sadd.s32 %s503, 1
    %p507 = scmp.eq.s32.totalorder %s81, 1
    %p508 = scmp.ne.s32.totalorder %s503, %s505
    %p509 = scmp.eq.s32.totalorder %s81, 0
    %p510 = por %p508, %p509
    %p511 = scmp.ne.s32.totalorder %s503, %s505
    %p512 = scmp.eq.s32.totalorder %s86, 1
    %p513 = por %p511, %p512
    %p514 = scmp.ne.s32.totalorder %s505, %s506
    %p515 = scmp.eq.s32.totalorder %s86, 0
    %p516 = por %p514, %p515
    %p517 = scmp.ne.s32.totalorder %s505, %s506
    %p518 = scmp.eq.s32.totalorder %s87, 1
    %p519 = por %p517, %p518
    %p521 = scmp.ne.s32.totalorder %s506, %s520
    %p522 = scmp.eq.s32.totalorder %s87, 0
    %p523 = por %p521, %p522
    %s525 = sadd.s32 %s524, 1
    %p528 = scmp.eq.s32.totalorder %s81, 1
    %p529 = scmp.ne.s32.totalorder %s524, %s526
    %p530 = scmp.eq.s32.totalorder %s81, 0
    %p531 = por %p529, %p530
    %p532 = scmp.ne.s32.totalorder %s524, %s526
    %p533 = scmp.eq.s32.totalorder %s86, 1
    %p534 = por %p532, %p533
    %p535 = scmp.ne.s32.totalorder %s526, %s527
    %p536 = scmp.eq.s32.totalorder %s86, 0
    %p537 = por %p535, %p536
    %p538 = scmp.ne.s32.totalorder %s526, %s527
    %p539 = scmp.eq.s32.totalorder %s87, 1
    %p540 = por %p538, %p539
    %p542 = scmp.ne.s32.totalorder %s527, %s541
    %p543 = scmp.eq.s32.totalorder %s87, 0
    %p544 = por %p542, %p543
    %s546 = sadd.s32 %s545, 1
    %p549 = scmp.eq.s32.totalorder %s81, 1
    %p550 = scmp.ne.s32.totalorder %s545, %s547
    %p551 = scmp.eq.s32.totalorder %s81, 0
    %p552 = por %p550, %p551
    %p553 = scmp.ne.s32.totalorder %s545, %s547
    %p554 = scmp.eq.s32.totalorder %s86, 1
    %p555 = por %p553, %p554
    %p556 = scmp.ne.s32.totalorder %s547, %s548
    %p557 = scmp.eq.s32.totalorder %s86, 0
    %p558 = por %p556, %p557
    %p559 = scmp.ne.s32.totalorder %s547, %s548
    %p560 = scmp.eq.s32.totalorder %s87, 1
    %p561 = por %p559, %p560
    %p563 = scmp.ne.s32.totalorder %s548, %s562
    %p564 = scmp.eq.s32.totalorder %s87, 0
    %p565 = por %p563, %p564
    %s567 = sadd.s32 %s566, 1
    %p570 = scmp.eq.s32.totalorder %s81, 1
    %p571 = scmp.ne.s32.totalorder %s566, %s568
    %p572 = scmp.eq.s32.totalorder %s81, 0
    %p573 = por %p571, %p572
    %p574 = scmp.ne.s32.totalorder %s566, %s568
    %p575 = scmp.eq.s32.totalorder %s86, 1
    %p576 = por %p574, %p575
    %p577 = scmp.ne.s32.totalorder %s568, %s569
    %p578 = scmp.eq.s32.totalorder %s86, 0
    %p579 = por %p577, %p578
    %p580 = scmp.ne.s32.totalorder %s568, %s569
    %p581 = scmp.eq.s32.totalorder %s87, 1
    %p582 = por %p580, %p581
    %p584 = scmp.ne.s32.totalorder %s569, %s583
    %p585 = scmp.eq.s32.totalorder %s87, 0
    %p586 = por %p584, %p585
    %s588 = sadd.s32 %s587, 1
    %p591 = scmp.eq.s32.totalorder %s81, 1
    %p592 = scmp.ne.s32.totalorder %s587, %s589
    %p593 = scmp.eq.s32.totalorder %s81, 0
    %p594 = por %p592, %p593
    %p595 = scmp.ne.s32.totalorder %s587, %s589
    %p596 = scmp.eq.s32.totalorder %s86, 1
    %p597 = por %p595, %p596
    %p598 = scmp.ne.s32.totalorder %s589, %s590
    %p599 = scmp.eq.s32.totalorder %s86, 0
    %p600 = por %p598, %p599
    %p601 = scmp.ne.s32.totalorder %s589, %s590
    %p602 = scmp.eq.s32.totalorder %s87, 1
    %p603 = por %p601, %p602
    %p605 = scmp.ne.s32.totalorder %s590, %s604
    %p606 = scmp.eq.s32.totalorder %s87, 0
    %p607 = por %p605, %p606
    %s609 = sadd.s32 %s608, 1
    %p612 = scmp.eq.s32.totalorder %s81, 1
    %p613 = scmp.ne.s32.totalorder %s608, %s610
    %p614 = scmp.eq.s32.totalorder %s81, 0
    %p615 = por %p613, %p614
    %p616 = scmp.ne.s32.totalorder %s608, %s610
    %p617 = scmp.eq.s32.totalorder %s86, 1
    %p618 = por %p616, %p617
    %p619 = scmp.ne.s32.totalorder %s610, %s611
    %p620 = scmp.eq.s32.totalorder %s86, 0
    %p621 = por %p619, %p620
    %p622 = scmp.ne.s32.totalorder %s610, %s611
    %p623 = scmp.eq.s32.totalorder %s87, 1
    %p624 = por %p622, %p623
    %p626 = scmp.ne.s32.totalorder %s611, %s625
    %p627 = scmp.eq.s32.totalorder %s87, 0
    %p628 = por %p626, %p627
    %s630 = sadd.s32 %s629, 1
    %p633 = scmp.eq.s32.totalorder %s81, 1
    %p634 = scmp.ne.s32.totalorder %s629, %s631
    %p635 = scmp.eq.s32.totalorder %s81, 0
    %p636 = por %p634, %p635
    %p637 = scmp.ne.s32.totalorder %s629, %s631
    %p638 = scmp.eq.s32.totalorder %s86, 1
    %p639 = por %p637, %p638
    %p640 = scmp.ne.s32.totalorder %s631, %s632
    %p641 = scmp.eq.s32.totalorder %s86, 0
    %p642 = por %p640, %p641
    %p643 = scmp.ne.s32.totalorder %s631, %s632
    %p644 = scmp.eq.s32.totalorder %s87, 1
    %p645 = por %p643, %p644
    %p647 = scmp.ne.s32.totalorder %s632, %s646
    %p648 = scmp.eq.s32.totalorder %s87, 0
    %p649 = por %p647, %p648
    %s651 = sadd.s32 %s650, 1
    %p654 = scmp.eq.s32.totalorder %s81, 1
    %p655 = scmp.ne.s32.totalorder %s650, %s652
    %p656 = scmp.eq.s32.totalorder %s81, 0
    %p657 = por %p655, %p656
    %p658 = scmp.ne.s32.totalorder %s650, %s652
    %p659 = scmp.eq.s32.totalorder %s86, 1
    %p660 = por %p658, %p659
    %p661 = scmp.ne.s32.totalorder %s652, %s653
    %p662 = scmp.eq.s32.totalorder %s86, 0
    %p663 = por %p661, %p662
    %p664 = scmp.ne.s32.totalorder %s652, %s653
    %p665 = scmp.eq.s32.totalorder %s87, 1
    %p666 = por %p664, %p665
    %p668 = scmp.ne.s32.totalorder %s653, %s667
    %p669 = scmp.eq.s32.totalorder %s87, 0
    %p670 = por %p668, %p669
    %s672 = sadd.s32 %s671, 1
    %p675 = scmp.eq.s32.totalorder %s81, 1
    %p676 = scmp.ne.s32.totalorder %s671, %s673
    %p677 = scmp.eq.s32.totalorder %s81, 0
    %p678 = por %p676, %p677
    %p679 = scmp.ne.s32.totalorder %s671, %s673
    %p680 = scmp.eq.s32.totalorder %s86, 1
    %p681 = por %p679, %p680
    %p682 = scmp.ne.s32.totalorder %s673, %s674
    %p683 = scmp.eq.s32.totalorder %s86, 0
    %p684 = por %p682, %p683
    %p685 = scmp.ne.s32.totalorder %s673, %s674
    %p686 = scmp.eq.s32.totalorder %s87, 1
    %p687 = por %p685, %p686
    %p689 = scmp.ne.s32.totalorder %s674, %s688
    %p690 = scmp.eq.s32.totalorder %s87, 0
    %p691 = por %p689, %p690
    %s693 = sadd.s32 %s692, 1
    %p696 = scmp.eq.s32.totalorder %s81, 1
    %p697 = scmp.ne.s32.totalorder %s692, %s694
    %p698 = scmp.eq.s32.totalorder %s81, 0
    %p699 = por %p697, %p698
    %p700 = scmp.ne.s32.totalorder %s692, %s694
    %p701 = scmp.eq.s32.totalorder %s86, 1
    %p702 = por %p700, %p701
    %p703 = scmp.ne.s32.totalorder %s694, %s695
    %p704 = scmp.eq.s32.totalorder %s86, 0
    %p705 = por %p703, %p704
    %p706 = scmp.ne.s32.totalorder %s694, %s695
    %p707 = scmp.eq.s32.totalorder %s87, 1
    %p708 = por %p706, %p707
    %p710 = scmp.ne.s32.totalorder %s695, %s709
    %p711 = scmp.eq.s32.totalorder %s87, 0
    %p712 = por %p710, %p711
    %s714 = sadd.s32 %s713, 1
    %p717 = scmp.eq.s32.totalorder %s81, 1
    %p718 = scmp.ne.s32.totalorder %s713, %s715
    %p719 = scmp.eq.s32.totalorder %s81, 0
    %p720 = por %p718, %p719
    %p721 = scmp.ne.s32.totalorder %s713, %s715
    %p722 = scmp.eq.s32.totalorder %s86, 1
    %p723 = por %p721, %p722
    %p724 = scmp.ne.s32.totalorder %s715, %s716
    %p725 = scmp.eq.s32.totalorder %s86, 0
    %p726 = por %p724, %p725
    %p727 = scmp.ne.s32.totalorder %s715, %s716
    %p728 = scmp.eq.s32.totalorder %s87, 1
    %p729 = por %p727, %p728
    %p731 = scmp.ne.s32.totalorder %s716, %s730
    %p732 = scmp.eq.s32.totalorder %s87, 0
    %p733 = por %p731, %p732
    %s735 = sadd.s32 %s734, 1
    %p738 = scmp.eq.s32.totalorder %s81, 1
    %p739 = scmp.ne.s32.totalorder %s734, %s736
    %p740 = scmp.eq.s32.totalorder %s81, 0
    %p741 = por %p739, %p740
    %p742 = scmp.ne.s32.totalorder %s734, %s736
    %p743 = scmp.eq.s32.totalorder %s86, 1
    %p744 = por %p742, %p743
    %p745 = scmp.ne.s32.totalorder %s736, %s737
    %p746 = scmp.eq.s32.totalorder %s86, 0
    %p747 = por %p745, %p746
    %p748 = scmp.ne.s32.totalorder %s736, %s737
    %p749 = scmp.eq.s32.totalorder %s87, 1
    %p750 = por %p748, %p749
    %p752 = scmp.ne.s32.totalorder %s737, %s751
    %p753 = scmp.eq.s32.totalorder %s87, 0
    %p754 = por %p752, %p753
    %s756 = sadd.s32 %s755, 1
    %p759 = scmp.eq.s32.totalorder %s81, 1
    %p760 = scmp.ne.s32.totalorder %s755, %s757
    %p761 = scmp.eq.s32.totalorder %s81, 0
    %p762 = por %p760, %p761
    %p763 = scmp.ne.s32.totalorder %s755, %s757
    %p764 = scmp.eq.s32.totalorder %s86, 1
    %p765 = por %p763, %p764
    %p766 = scmp.ne.s32.totalorder %s757, %s758
    %p767 = scmp.eq.s32.totalorder %s86, 0
    %p768 = por %p766, %p767
    %p769 = scmp.ne.s32.totalorder %s757, %s758
    %p770 = scmp.eq.s32.totalorder %s87, 1
    %p771 = por %p769, %p770
    %p773 = scmp.ne.s32.totalorder %s758, %s772
    %p774 = scmp.eq.s32.totalorder %s87, 0
    %p775 = por %p773, %p774
    %s777 = sadd.s32 %s776, 1
    %p780 = scmp.eq.s32.totalorder %s81, 1
    %p781 = scmp.ne.s32.totalorder %s776, %s778
    %p782 = scmp.eq.s32.totalorder %s81, 0
    %p783 = por %p781, %p782
    %p784 = scmp.ne.s32.totalorder %s776, %s778
    %p785 = scmp.eq.s32.totalorder %s86, 1
    %p786 = por %p784, %p785
    %p787 = scmp.ne.s32.totalorder %s778, %s779
    %p788 = scmp.eq.s32.totalorder %s86, 0
    %p789 = por %p787, %p788
    %p790 = scmp.ne.s32.totalorder %s778, %s779
    %p791 = scmp.eq.s32.totalorder %s87, 1
    %p792 = por %p790, %p791
    %p794 = scmp.ne.s32.totalorder %s779, %s793
    %p795 = scmp.eq.s32.totalorder %s87, 0
    %p796 = por %p794, %p795
    %s798 = sadd.s32 %s797, 1
    %p801 = scmp.eq.s32.totalorder %s81, 1
    %p802 = scmp.ne.s32.totalorder %s797, %s799
    %p803 = scmp.eq.s32.totalorder %s81, 0
    %p804 = por %p802, %p803
    %p805 = scmp.ne.s32.totalorder %s797, %s799
    %p806 = scmp.eq.s32.totalorder %s86, 1
    %p807 = por %p805, %p806
    %p808 = scmp.ne.s32.totalorder %s799, %s800
    %p809 = scmp.eq.s32.totalorder %s86, 0
    %p810 = por %p808, %p809
    %p811 = scmp.ne.s32.totalorder %s799, %s800
    %p812 = scmp.eq.s32.totalorder %s87, 1
    %p813 = por %p811, %p812
    %p815 = scmp.ne.s32.totalorder %s800, %s814
    %p816 = scmp.eq.s32.totalorder %s87, 0
    %p817 = por %p815, %p816
    %s819 = sadd.s32 %s818, 1
    %p822 = scmp.eq.s32.totalorder %s81, 1
    %p823 = scmp.ne.s32.totalorder %s818, %s820
    %p824 = scmp.eq.s32.totalorder %s81, 0
    %p825 = por %p823, %p824
    %p826 = scmp.ne.s32.totalorder %s818, %s820
    %p827 = scmp.eq.s32.totalorder %s86, 1
    %p828 = por %p826, %p827
    %p829 = scmp.ne.s32.totalorder %s820, %s821
    %p830 = scmp.eq.s32.totalorder %s86, 0
    %p831 = por %p829, %p830
    %p832 = scmp.ne.s32.totalorder %s820, %s821
    %p833 = scmp.eq.s32.totalorder %s87, 1
    %p834 = por %p832, %p833
    %p836 = scmp.ne.s32.totalorder %s821, %s835
    %p837 = scmp.eq.s32.totalorder %s87, 0
    %p838 = por %p836, %p837
    %s839 = ssub.s32 %s81, %s88
    %p840 = scmp.eq.s32.totalorder %s839, 0
    %s842 = sadd.s32 %s841, 1
    %s843 = scalar_select %p840, %s841, %s842
    %p846 = pneg %p840
    %p847 = scmp.eq.s32.totalorder %s81, 1
    %p848 = por %p846, %p847
    %p849 = scmp.ne.s32.totalorder %s841, %s844
    %p850 = scmp.eq.s32.totalorder %s81, 0
    %p851 = por %p849, %p850
    %p852 = scmp.ne.s32.totalorder %s841, %s844
    %p853 = scmp.eq.s32.totalorder %s86, 1
    %p854 = por %p852, %p853
    %p855 = scmp.ne.s32.totalorder %s844, %s845
    %p856 = scmp.eq.s32.totalorder %s86, 0
    %p857 = por %p855, %p856
    %p858 = scmp.ne.s32.totalorder %s844, %s845
    %p859 = scmp.eq.s32.totalorder %s87, 1
    %p860 = por %p858, %p859
    %p862 = scmp.ne.s32.totalorder %s845, %s861
    %p863 = scmp.eq.s32.totalorder %s87, 0
    %p864 = por %p862, %p863
    %p865 = scmp.le.s32.totalorder 1, %s81
    %p866 = scmp.lt.s32.totalorder %s81, 3
    %p867 = pnand %p865, %p866
    %p868 = pneg %p867
    // Predicated region
    $region9: #{credibility_regressor.1} parent=5 // pred_check
      _
    $region10: #{credibility_regressor.1} parent=5 // pred_check_branch
      %870 = sbr.rel (%p867) target = $region12
    $region11: #{credibility_regressor.1} parent=5 // pred_region
      %s871 = ssub.s32 %s81, 1
      // Predicated region
      $region13: #{credibility_regressor.1} parent=11 // pred_check
        %p872 = pneg %p180
      $region14: #{credibility_regressor.1} parent=11 // pred_check_branch
        %874 = sbr.rel (%p872) target = $region16
      $region15: #{credibility_regressor.1} parent=11 // pred_region
        _
      $region16: #{credibility_regressor.1} parent=11 // pred_fallthru
        _
      // Predicated region
      $region17: #{credibility_regressor.1} parent=11 // pred_check
        %p875 = pneg %p201
      $region18: #{credibility_regressor.1} parent=11 // pred_check_branch
        %877 = sbr.rel (%p875) target = $region20
      $region19: #{credibility_regressor.1} parent=11 // pred_region
        _
      $region20: #{credibility_regressor.1} parent=11 // pred_fallthru
        _
      // Predicated region
      $region21: #{credibility_regressor.1} parent=11 // pred_check
        %p878 = pneg %p222
      $region22: #{credibility_regressor.1} parent=11 // pred_check_branch
        %880 = sbr.rel (%p878) target = $region24
      $region23: #{credibility_regressor.1} parent=11 // pred_region
        _
      $region24: #{credibility_regressor.1} parent=11 // pred_fallthru
        _
      // Predicated region
      $region25: #{credibility_regressor.1} parent=11 // pred_check
        %p881 = pneg %p243
      $region26: #{credibility_regressor.1} parent=11 // pred_check_branch
        %883 = sbr.rel (%p881) target = $region28
      $region27: #{credibility_regressor.1} parent=11 // pred_region
        _
      $region28: #{credibility_regressor.1} parent=11 // pred_fallthru
        _
      // Predicated region
      $region29: #{credibility_regressor.1} parent=11 // pred_check
        %p884 = pneg %p264
      $region30: #{credibility_regressor.1} parent=11 // pred_check_branch
        %886 = sbr.rel (%p884) target = $region32
      $region31: #{credibility_regressor.1} parent=11 // pred_region
        _
      $region32: #{credibility_regressor.1} parent=11 // pred_fallthru
        _
      // Predicated region
      $region33: #{credibility_regressor.1} parent=11 // pred_check
        %p887 = pneg %p285
      $region34: #{credibility_regressor.1} parent=11 // pred_check_branch
        %889 = sbr.rel (%p887) target = $region36
      $region35: #{credibility_regressor.1} parent=11 // pred_region
        _
      $region36: #{credibility_regressor.1} parent=11 // pred_fallthru
        _
      // Predicated region
      $region37: #{credibility_regressor.1} parent=11 // pred_check
        %p890 = pneg %p306
      $region38: #{credibility_regressor.1} parent=11 // pred_check_branch
        %892 = sbr.rel (%p890) target = $region40
      $region39: #{credibility_regressor.1} parent=11 // pred_region
        _
      $region40: #{credibility_regressor.1} parent=11 // pred_fallthru
        _
      // Predicated region
      $region41: #{credibility_regressor.1} parent=11 // pred_check
        %p893 = pneg %p327
      $region42: #{credibility_regressor.1} parent=11 // pred_check_branch
        %895 = sbr.rel (%p893) target = $region44
      $region43: #{credibility_regressor.1} parent=11 // pred_region
        _
      $region44: #{credibility_regressor.1} parent=11 // pred_fallthru
        _
      // Predicated region
      $region45: #{credibility_regressor.1} parent=11 // pred_check
        %p896 = pneg %p348
      $region46: #{credibility_regressor.1} parent=11 // pred_check_branch
        %898 = sbr.rel (%p896) target = $region48
      $region47: #{credibility_regressor.1} parent=11 // pred_region
        _
      $region48: #{credibility_regressor.1} parent=11 // pred_fallthru
        _
      // Predicated region
      $region49: #{credibility_regressor.1} parent=11 // pred_check
        %p899 = pneg %p369
      $region50: #{credibility_regressor.1} parent=11 // pred_check_branch
        %901 = sbr.rel (%p899) target = $region52
      $region51: #{credibility_regressor.1} parent=11 // pred_region
        _
      $region52: #{credibility_regressor.1} parent=11 // pred_fallthru
        _
      // Predicated region
      $region53: #{credibility_regressor.1} parent=11 // pred_check
        %p902 = pneg %p390
      $region54: #{credibility_regressor.1} parent=11 // pred_check_branch
        %904 = sbr.rel (%p902) target = $region56
      $region55: #{credibility_regressor.1} parent=11 // pred_region
        _
      $region56: #{credibility_regressor.1} parent=11 // pred_fallthru
        _
      // Predicated region
      $region57: #{credibility_regressor.1} parent=11 // pred_check
        %p905 = pneg %p411
      $region58: #{credibility_regressor.1} parent=11 // pred_check_branch
        %907 = sbr.rel (%p905) target = $region60
      $region59: #{credibility_regressor.1} parent=11 // pred_region
        _
      $region60: #{credibility_regressor.1} parent=11 // pred_fallthru
        _
      // Predicated region
      $region61: #{credibility_regressor.1} parent=11 // pred_check
        %p908 = pneg %p432
      $region62: #{credibility_regressor.1} parent=11 // pred_check_branch
        %910 = sbr.rel (%p908) target = $region64
      $region63: #{credibility_regressor.1} parent=11 // pred_region
        _
      $region64: #{credibility_regressor.1} parent=11 // pred_fallthru
        _
      // Predicated region
      $region65: #{credibility_regressor.1} parent=11 // pred_check
        %p911 = pneg %p453
      $region66: #{credibility_regressor.1} parent=11 // pred_check_branch
        %913 = sbr.rel (%p911) target = $region68
      $region67: #{credibility_regressor.1} parent=11 // pred_region
        _
      $region68: #{credibility_regressor.1} parent=11 // pred_fallthru
        _
      // Predicated region
      $region69: #{credibility_regressor.1} parent=11 // pred_check
        %p914 = pneg %p474
      $region70: #{credibility_regressor.1} parent=11 // pred_check_branch
        %916 = sbr.rel (%p914) target = $region72
      $region71: #{credibility_regressor.1} parent=11 // pred_region
        _
      $region72: #{credibility_regressor.1} parent=11 // pred_fallthru
        _
      // Predicated region
      $region73: #{credibility_regressor.1} parent=11 // pred_check
        %p917 = pneg %p495
      $region74: #{credibility_regressor.1} parent=11 // pred_check_branch
        %919 = sbr.rel (%p917) target = $region76
      $region75: #{credibility_regressor.1} parent=11 // pred_region
        _
      $region76: #{credibility_regressor.1} parent=11 // pred_fallthru
        _
      // Predicated region
      $region77: #{credibility_regressor.1} parent=11 // pred_check
        %p920 = pneg %p516
      $region78: #{credibility_regressor.1} parent=11 // pred_check_branch
        %922 = sbr.rel (%p920) target = $region80
      $region79: #{credibility_regressor.1} parent=11 // pred_region
        _
      $region80: #{credibility_regressor.1} parent=11 // pred_fallthru
        _
      // Predicated region
      $region81: #{credibility_regressor.1} parent=11 // pred_check
        %p923 = pneg %p537
      $region82: #{credibility_regressor.1} parent=11 // pred_check_branch
        %925 = sbr.rel (%p923) target = $region84
      $region83: #{credibility_regressor.1} parent=11 // pred_region
        _
      $region84: #{credibility_regressor.1} parent=11 // pred_fallthru
        _
      // Predicated region
      $region85: #{credibility_regressor.1} parent=11 // pred_check
        %p926 = pneg %p558
      $region86: #{credibility_regressor.1} parent=11 // pred_check_branch
        %928 = sbr.rel (%p926) target = $region88
      $region87: #{credibility_regressor.1} parent=11 // pred_region
        _
      $region88: #{credibility_regressor.1} parent=11 // pred_fallthru
        _
      // Predicated region
      $region89: #{credibility_regressor.1} parent=11 // pred_check
        %p929 = pneg %p579
      $region90: #{credibility_regressor.1} parent=11 // pred_check_branch
        %931 = sbr.rel (%p929) target = $region92
      $region91: #{credibility_regressor.1} parent=11 // pred_region
        _
      $region92: #{credibility_regressor.1} parent=11 // pred_fallthru
        _
      // Predicated region
      $region93: #{credibility_regressor.1} parent=11 // pred_check
        %p932 = pneg %p600
      $region94: #{credibility_regressor.1} parent=11 // pred_check_branch
        %934 = sbr.rel (%p932) target = $region96
      $region95: #{credibility_regressor.1} parent=11 // pred_region
        _
      $region96: #{credibility_regressor.1} parent=11 // pred_fallthru
        _
      // Predicated region
      $region97: #{credibility_regressor.1} parent=11 // pred_check
        %p935 = pneg %p621
      $region98: #{credibility_regressor.1} parent=11 // pred_check_branch
        %937 = sbr.rel (%p935) target = $region100
      $region99: #{credibility_regressor.1} parent=11 // pred_region
        _
      $region100: #{credibility_regressor.1} parent=11 // pred_fallthru
        _
      // Predicated region
      $region101: #{credibility_regressor.1} parent=11 // pred_check
        %p938 = pneg %p642
      $region102: #{credibility_regressor.1} parent=11 // pred_check_branch
        %940 = sbr.rel (%p938) target = $region104
      $region103: #{credibility_regressor.1} parent=11 // pred_region
        _
      $region104: #{credibility_regressor.1} parent=11 // pred_fallthru
        _
      // Predicated region
      $region105: #{credibility_regressor.1} parent=11 // pred_check
        %p941 = pneg %p663
      $region106: #{credibility_regressor.1} parent=11 // pred_check_branch
        %943 = sbr.rel (%p941) target = $region108
      $region107: #{credibility_regressor.1} parent=11 // pred_region
        _
      $region108: #{credibility_regressor.1} parent=11 // pred_fallthru
        _
      // Predicated region
      $region109: #{credibility_regressor.1} parent=11 // pred_check
        %p944 = pneg %p684
      $region110: #{credibility_regressor.1} parent=11 // pred_check_branch
        %946 = sbr.rel (%p944) target = $region112
      $region111: #{credibility_regressor.1} parent=11 // pred_region
        _
      $region112: #{credibility_regressor.1} parent=11 // pred_fallthru
        _
      // Predicated region
      $region113: #{credibility_regressor.1} parent=11 // pred_check
        %p947 = pneg %p705
      $region114: #{credibility_regressor.1} parent=11 // pred_check_branch
        %949 = sbr.rel (%p947) target = $region116
      $region115: #{credibility_regressor.1} parent=11 // pred_region
        _
      $region116: #{credibility_regressor.1} parent=11 // pred_fallthru
        _
      // Predicated region
      $region117: #{credibility_regressor.1} parent=11 // pred_check
        %p950 = pneg %p726
      $region118: #{credibility_regressor.1} parent=11 // pred_check_branch
        %952 = sbr.rel (%p950) target = $region120
      $region119: #{credibility_regressor.1} parent=11 // pred_region
        _
      $region120: #{credibility_regressor.1} parent=11 // pred_fallthru
        _
      // Predicated region
      $region121: #{credibility_regressor.1} parent=11 // pred_check
        %p953 = pneg %p747
      $region122: #{credibility_regressor.1} parent=11 // pred_check_branch
        %955 = sbr.rel (%p953) target = $region124
      $region123: #{credibility_regressor.1} parent=11 // pred_region
        _
      $region124: #{credibility_regressor.1} parent=11 // pred_fallthru
        _
      // Predicated region
      $region125: #{credibility_regressor.1} parent=11 // pred_check
        %p956 = pneg %p768
      $region126: #{credibility_regressor.1} parent=11 // pred_check_branch
        %958 = sbr.rel (%p956) target = $region128
      $region127: #{credibility_regressor.1} parent=11 // pred_region
        _
      $region128: #{credibility_regressor.1} parent=11 // pred_fallthru
        _
      // Predicated region
      $region129: #{credibility_regressor.1} parent=11 // pred_check
        %p959 = pneg %p789
      $region130: #{credibility_regressor.1} parent=11 // pred_check_branch
        %961 = sbr.rel (%p959) target = $region132
      $region131: #{credibility_regressor.1} parent=11 // pred_region
        _
      $region132: #{credibility_regressor.1} parent=11 // pred_fallthru
        _
      // Predicated region
      $region133: #{credibility_regressor.1} parent=11 // pred_check
        %p962 = pneg %p810
      $region134: #{credibility_regressor.1} parent=11 // pred_check_branch
        %964 = sbr.rel (%p962) target = $region136
      $region135: #{credibility_regressor.1} parent=11 // pred_region
        _
      $region136: #{credibility_regressor.1} parent=11 // pred_fallthru
        _
      // Predicated region
      $region137: #{credibility_regressor.1} parent=11 // pred_check
        %p965 = pneg %p831
      $region138: #{credibility_regressor.1} parent=11 // pred_check_branch
        %967 = sbr.rel (%p965) target = $region140
      $region139: #{credibility_regressor.1} parent=11 // pred_region
        _
      $region140: #{credibility_regressor.1} parent=11 // pred_fallthru
        _
    $region12: #{credibility_regressor.1} parent=5 // pred_fallthru
      _
    %p968 = scmp.lt.s32.totalorder %s81, 2
    // Predicated region
    $region141: #{credibility_regressor.1} parent=5 // pred_check
      %p969 = pneg %p968
    $region142: #{credibility_regressor.1} parent=5 // pred_check_branch
      %971 = sbr.rel (%p969) target = $region144
    $region143: #{credibility_regressor.1} parent=5 // pred_region
      // Predicated region
      $region145: #{credibility_regressor.1} parent=143 // pred_check
        %p972 = pneg %p101
      $region146: #{credibility_regressor.1} parent=143 // pred_check_branch
        %974 = sbr.rel (%p972) target = $region148
      $region147: #{credibility_regressor.1} parent=143 // pred_region
        %p975 = scmp.lt.s32.totalorder %s81, 1
        %s976 = scalar_select %p975, %s81, 1
        %s977 = smul.addr %s976, 4
        %s978 = scalar_lea.vmem %s1, %s977
      $region148: #{credibility_regressor.1} parent=143 // pred_fallthru
        _
      // Predicated region
      $region149: #{credibility_regressor.1} parent=143 // pred_check
        %p979 = pneg %p127
      $region150: #{credibility_regressor.1} parent=143 // pred_check_branch
        %981 = sbr.rel (%p979) target = $region152
      $region151: #{credibility_regressor.1} parent=143 // pred_region
        %p982 = scmp.lt.s32.totalorder %s81, 1
        %s983 = scalar_select %p982, %s81, 1
        %s984 = scalar_lea.vmem %s3, %s983
      $region152: #{credibility_regressor.1} parent=143 // pred_fallthru
        _
      // Predicated region
      $region153: #{credibility_regressor.1} parent=143 // pred_check
        %p985 = pneg %p153
      $region154: #{credibility_regressor.1} parent=143 // pred_check_branch
        %987 = sbr.rel (%p985) target = $region156
      $region155: #{credibility_regressor.1} parent=143 // pred_region
        %p988 = scmp.lt.s32.totalorder %s81, 1
        %s989 = scalar_select %p988, %s81, 1
        %s990 = smul.addr %s989, 8
        %s991 = scalar_lea.vmem %s5, %s990
      $region156: #{credibility_regressor.1} parent=143 // pred_fallthru
        _
    $region144: #{credibility_regressor.1} parent=5 // pred_fallthru
      _
    %p992 = scmp.le.s32.totalorder 1, %s81
    %p993 = scmp.lt.s32.totalorder %s81, 3
    %p994 = pnand %p992, %p993
    %p995 = pneg %p994
    // Predicated region
    $region157: #{credibility_regressor.1} parent=5 // pred_check
      _
    $region158: #{credibility_regressor.1} parent=5 // pred_check_branch
      %997 = sbr.rel (%p994) target = $region160
    $region159: #{credibility_regressor.1} parent=5 // pred_region
      %s998 = ssub.s32 %s81, 1
      %p999 = scmp.lt.s32.totalorder %s86, 1
      %s1000 = scalar_select %p999, %s86, 1
      %s1001 = smul.addr %s1000, 4
      %s1002 = scalar_lea.vmem %s1, %s1001
      %p1003 = pneg %p107
      %p1004 = pneg %p104
      %p1005 = scmp.lt.s32.totalorder %s86, 1
      %s1006 = scalar_select %p1005, %s86, 1
      %s1007 = scalar_lea.vmem %s3, %s1006
      %p1008 = pneg %p133
      %p1009 = pneg %p130
      %p1010 = scmp.lt.s32.totalorder %s86, 1
      %s1011 = scalar_select %p1010, %s86, 1
      %s1012 = smul.addr %s1011, 8
      %s1013 = scalar_lea.vmem %s5, %s1012
      %p1014 = pneg %p159
      %p1015 = pneg %p156
      %p1016 = pneg %p180
      %p1017 = pneg %p177
      %p1018 = pneg %p201
      %p1019 = pneg %p198
      %p1020 = pneg %p222
      %p1021 = pneg %p219
      %p1022 = pneg %p243
      %p1023 = pneg %p240
      %p1024 = pneg %p264
      %p1025 = pneg %p261
      %p1026 = pneg %p285
      %p1027 = pneg %p282
      %p1028 = pneg %p306
      %p1029 = pneg %p303
      %p1030 = pneg %p327
      %p1031 = pneg %p324
      %p1032 = pneg %p348
      %p1033 = pneg %p345
      %p1034 = pneg %p369
      %p1035 = pneg %p366
      %p1036 = pneg %p390
      %p1037 = pneg %p387
      %p1038 = pneg %p411
      %p1039 = pneg %p408
      %p1040 = pneg %p432
      %p1041 = pneg %p429
      %p1042 = pneg %p453
      %p1043 = pneg %p450
      %p1044 = pneg %p474
      %p1045 = pneg %p471
      %p1046 = pneg %p495
      %p1047 = pneg %p492
      %p1048 = pneg %p516
      %p1049 = pneg %p513
      %p1050 = pneg %p537
      %p1051 = pneg %p534
      %p1052 = pneg %p558
      %p1053 = pneg %p555
      %p1054 = pneg %p579
      %p1055 = pneg %p576
      %p1056 = pneg %p600
      %p1057 = pneg %p597
      %p1058 = pneg %p621
      %p1059 = pneg %p618
      %p1060 = pneg %p642
      %p1061 = pneg %p639
      %p1062 = pneg %p663
      %p1063 = pneg %p660
      %p1064 = pneg %p684
      %p1065 = pneg %p681
      %p1066 = pneg %p705
      %p1067 = pneg %p702
      %p1068 = pneg %p726
      %p1069 = pneg %p723
      %p1070 = pneg %p747
      %p1071 = pneg %p744
      %p1072 = pneg %p768
      %p1073 = pneg %p765
      %p1074 = pneg %p789
      %p1075 = pneg %p786
      %p1076 = pneg %p810
      %p1077 = pneg %p807
      %p1078 = pneg %p831
      %p1079 = pneg %p828
      %p1080 = pneg %p857
      %p1081 = pneg %p854
      %p1082 = scmp.lt.s32.totalorder %s86, 1
      %s1083 = scalar_select %p1082, %s86, 1
      %s1084 = scalar_lea.vmem %s71, %s1083
      %p1085 = scmp.lt.s32.totalorder %s86, 1
      %s1086 = scalar_select %p1085, %s86, 1
      %s1087 = smul.addr %s1086, 4
      %s1088 = scalar_lea.vmem %s1, %s1087
      %p1089 = scmp.lt.s32.totalorder %s86, 1
      %s1090 = scalar_select %p1089, %s86, 1
      %s1091 = scalar_lea.vmem %s3, %s1090
      %p1092 = scmp.lt.s32.totalorder %s86, 1
      %s1093 = scalar_select %p1092, %s86, 1
      %s1094 = smul.addr %s1093, 8
      %s1095 = scalar_lea.vmem %s5, %s1094
      %p1096 = scmp.lt.s32.totalorder %s86, 1
      %s1097 = scalar_select %p1096, %s86, 1
      %s1098 = scalar_lea.vmem %s71, %s1097
      %v1100 = vld [vmem:[%s1088] sm:$0xf]
      %v1101 = vld [vmem:[%s7] sm:$0xf]
      %v1102 = vld [vmem:[%s7 + $0x4] sm:$0xf]
      %v1103 = vld [vmem:[%s7 + $0x8] sm:$0xf]
      %v1104 = vld [vmem:[%s7 + $0xc] sm:$0xf]
      %v1105 = vld [vmem:[%s9] sm:$0x1]
      %v1107 = vlaneseq
      %v1108 = vshrl.u32 %v1107, 7
      %v1109 = vsub.s32 0, %v1108
      %v1110 = vrot.slane %v1105, %v1109
      %v1116 = vunpack.c.l.b16 %v1101
      %v1117 = vunpack.c.l.b16 %v1102
      %v1118 = vunpack.c.l.b16 %v1103
      %v1119 = vunpack.c.l.b16 %v1104
      %v1120 = vpack.c.b16 %v1117, %v1116
      %v1121 = vpack.c.b16 %v1119, %v1118
      %vm1124 = vcmask 261120
      %v1126 = vsel %vm1124, %v1100, 0
      %1128 = vmatprep.subr.bf16.mxu0 0
      %1129 = vmatpush1.bf16.msra.mxu0 %v1120
      %1130 = vmatprep.subr.bf16.mxu0 0
      %1131 = vmatpush1.bf16.msra.mxu0 %v1121
      %1132 = vmatprep.subr.bf16.mxu0 0
      %1133 = vmatpush1.bf16.msra.mxu0 0
      %1134 = vmatprep.subr.bf16.mxu0 0
      %1135 = vmatpush1.bf16.msra.mxu0 0
      %1136 = vmatprep.subr.bf16.mxu0 0
      %1137 = vmatpush1.bf16.msra.mxu0 0
      %1138 = vmatprep.subr.bf16.mxu0 0
      %1139 = vmatpush1.bf16.msra.mxu0 0
      %1140 = vmatprep.subr.bf16.mxu0 0
      %1141 = vmatpush1.bf16.msra.mxu0 0
      %1142 = vmatprep.subr.bf16.mxu0 0
      %1143 = vmatpush1.bf16.msra.mxu0 0
      %1144 = vmatprep.subr.bf16.mxu0 0
      %1145 = vmatpush1.bf16.msra.mxu0 0
      %1146 = vmatprep.subr.bf16.mxu0 0
      %1147 = vmatpush1.bf16.msra.mxu0 0
      %1148 = vmatprep.subr.bf16.mxu0 0
      %1149 = vmatpush1.bf16.msra.mxu0 0
      %1150 = vmatprep.subr.bf16.mxu0 0
      %1151 = vmatpush1.bf16.msra.mxu0 0
      %1152 = vmatprep.subr.bf16.mxu0 0
      %1153 = vmatpush1.bf16.msra.mxu0 0
      %1154 = vmatprep.subr.bf16.mxu0 0
      %1155 = vmatpush1.bf16.msra.mxu0 0
      %1156 = vmatprep.subr.bf16.mxu0 0
      %1157 = vmatpush1.bf16.msra.mxu0 0
      %1158 = vmatprep.subr.bf16.mxu0 0
      %1159 = vmatpush1.bf16.msra.mxu0 0
      %1160 = vmatprep.mubr.bf16.mxu0 0
      %1161 = vmatmul.mubr.bf16.gmra.mrb[0].mxu0 %v1126
      %v1162 = vpop.f32.mrb[0].mxu0
      %v1163 = vadd.f32 %v1110, %v1162
      %v1164 = vpop.f32.mrb[0].mxu0
      %v1165 = vpop.f32.mrb[0].mxu0
      %v1166 = vpop.f32.mrb[0].mxu0
      %1167 = vdwg.mxu0
      %v1168 = vld [vmem:[%s1091] sm:$0x1]
      %v1169 = vpack.c.bf16 %v1163, %v1163
      %v1171 = vlaneseq
      %v1172 = vshrl.u32 %v1171, 7
      %v1173 = vsub.s32 0, %v1172
      %v1174 = vrot.slane %v1168, %v1173
      %1177 = vrot.lane.b32.xlu0 %v1169, 96
      %v1178 = vpop.permute.xlu0 %1177
      %vm1179 = vcmask 31744
      %v1181 = vsel %vm1179, %v1169, 0
      %v1184 = vsel %vm1179, %v1178, 0
      %1186 = vmatprep.subr.bf16.mxu0 0
      %1187 = vmatpush1.bf16.xpose.msra.mxu0 %v1184
      %1188 = vmatprep.subr.bf16.mxu0 0
      %1189 = vmatpush1.bf16.xpose.msra.mxu0 0
      %1190 = vmatprep.subr.bf16.mxu0 0
      %1191 = vmatpush1.bf16.xpose.msra.mxu0 0
      %1192 = vmatprep.subr.bf16.mxu0 0
      %1193 = vmatpush1.bf16.xpose.msra.mxu0 0
      %1194 = vmatprep.subr.bf16.mxu0 0
      %1195 = vmatpush1.bf16.xpose.msra.mxu0 0
      %1196 = vmatprep.subr.bf16.mxu0 0
      %1197 = vmatpush1.bf16.xpose.msra.mxu0 0
      %1198 = vmatprep.subr.bf16.mxu0 0
      %1199 = vmatpush1.bf16.xpose.msra.mxu0 0
      %1200 = vmatprep.subr.bf16.mxu0 0
      %1201 = vmatpush1.bf16.xpose.msra.mxu0 0
      %1202 = vmatprep.subr.bf16.mxu0 0
      %1203 = vmatpush1.bf16.xpose.msra.mxu0 0
      %1204 = vmatprep.subr.bf16.mxu0 0
      %1205 = vmatpush1.bf16.xpose.msra.mxu0 0
      %1206 = vmatprep.subr.bf16.mxu0 0
      %1207 = vmatpush1.bf16.xpose.msra.mxu0 0
      %1208 = vmatprep.subr.bf16.mxu0 0
      %1209 = vmatpush1.bf16.xpose.msra.mxu0 0
      %1210 = vmatprep.subr.bf16.mxu0 0
      %1211 = vmatpush1.bf16.xpose.msra.mxu0 0
      %1212 = vmatprep.subr.bf16.mxu0 0
      %1213 = vmatpush1.bf16.xpose.msra.mxu0 0
      %1214 = vmatprep.subr.bf16.mxu0 0
      %1215 = vmatpush1.bf16.xpose.msra.mxu0 0
      %1216 = vmatprep.subr.bf16.mxu0 0
      %1217 = vmatpush1.bf16.xpose.msra.mxu0 0
      %1218 = vmatprep.mubr.bf16.mxu0 0
      %1219 = vmatmul.mubr.bf16.gmra.mrb[0].mxu0 %v1181
      %v1220 = vpop.f32.mrb[0].mxu0
      %v1221 = vadd.f32 %v1174, %v1220
      %v1222 = vpop.f32.mrb[0].mxu0
      %v1223 = vpop.f32.mrb[0].mxu0
      %v1224 = vpop.f32.mrb[0].mxu0
      %1225 = vdwg.mxu0
      %vm1226 = vcmask 64512
      %v1227 = vsel %vm1226, %v1221, -inf
      %1228 = vmax.xlane.f32.xlu0 %v1227
      %v1229 = vpop.xlane.xlu0 %1228
      %v1230 = vsub.f32 %v1221, %v1229
      %v1231 = vmul.f32 %v1230, 1.442695
      %v1232 = vpow.pop %v1231
      %v1233 = vsel %vm1226, %v1232, 0.0
      %1234 = vadd.xlane.f32.xlu0 %v1233
      %v1235 = vpop.xlane.xlu0 %1234
      %v1236 = vrcp.pop %v1235
      %v1237 = vmul.f32 %v1232, %v1236
      %v1238 = vpack.c.bf16 %v1237, %v1237
      %1239 = vrot.lane.b32.xlu0 %v1169, 64
      %v1240 = vpop.permute.xlu0 %1239
      %v1242 = vsel %vm1226, %v1238, 0
      %vm1244 = vcmask 1043456
      %v1246 = vsel %vm1244, %v1240, 0
      %1248 = vmatprep.subr.bf16.mxu0 0
      %1249 = vmatpush1.bf16.msra.mxu0 %v1246
      %1250 = vmatprep.subr.bf16.mxu0 0
      %1251 = vmatpush1.bf16.msra.mxu0 0
      %1252 = vmatprep.subr.bf16.mxu0 0
      %1253 = vmatpush1.bf16.msra.mxu0 0
      %1254 = vmatprep.subr.bf16.mxu0 0
      %1255 = vmatpush1.bf16.msra.mxu0 0
      %1256 = vmatprep.subr.bf16.mxu0 0
      %1257 = vmatpush1.bf16.msra.mxu0 0
      %1258 = vmatprep.subr.bf16.mxu0 0
      %1259 = vmatpush1.bf16.msra.mxu0 0
      %1260 = vmatprep.subr.bf16.mxu0 0
      %1261 = vmatpush1.bf16.msra.mxu0 0
      %1262 = vmatprep.subr.bf16.mxu0 0
      %1263 = vmatpush1.bf16.msra.mxu0 0
      %1264 = vmatprep.subr.bf16.mxu0 0
      %1265 = vmatpush1.bf16.msra.mxu0 0
      %1266 = vmatprep.subr.bf16.mxu0 0
      %1267 = vmatpush1.bf16.msra.mxu0 0
      %1268 = vmatprep.subr.bf16.mxu0 0
      %1269 = vmatpush1.bf16.msra.mxu0 0
      %1270 = vmatprep.subr.bf16.mxu0 0
      %1271 = vmatpush1.bf16.msra.mxu0 0
      %1272 = vmatprep.subr.bf16.mxu0 0
      %1273 = vmatpush1.bf16.msra.mxu0 0
      %1274 = vmatprep.subr.bf16.mxu0 0
      %1275 = vmatpush1.bf16.msra.mxu0 0
      %1276 = vmatprep.subr.bf16.mxu0 0
      %1277 = vmatpush1.bf16.msra.mxu0 0
      %1278 = vmatprep.subr.bf16.mxu0 0
      %1279 = vmatpush1.bf16.msra.mxu0 0
      %1280 = vmatprep.mubr.bf16.mxu0 0
      %1281 = vmatmul.mubr.bf16.gmra.mrb[0].mxu0 %v1242
      %v1282 = vpop.f32.mrb[0].mxu0
      %v1283 = vadd.f32 0.0, %v1282
      %v1284 = vpop.f32.mrb[0].mxu0
      %v1285 = vpop.f32.mrb[0].mxu0
      %v1286 = vpop.f32.mrb[0].mxu0
      %1287 = vdwg.mxu0
      %1288 = vrot.lane.b32.xlu0 %v1169, 124
      %v1289 = vpop.permute.xlu0 %1288
      %1290 = vrot.lane.b32.xlu0 %v1169, 92
      %v1291 = vpop.permute.xlu0 %1290
      %v1293 = vsel %vm1179, %v1289, 0
      %v1296 = vsel %vm1179, %v1291, 0
      %1298 = vmatprep.subr.bf16.mxu0 0
      %1299 = vmatpush1.bf16.xpose.msra.mxu0 %v1296
      %1300 = vmatprep.subr.bf16.mxu0 0
      %1301 = vmatpush1.bf16.xpose.msra.mxu0 0
      %1302 = vmatprep.subr.bf16.mxu0 0
      %1303 = vmatpush1.bf16.xpose.msra.mxu0 0
      %1304 = vmatprep.subr.bf16.mxu0 0
      %1305 = vmatpush1.bf16.xpose.msra.mxu0 0
      %1306 = vmatprep.subr.bf16.mxu0 0
      %1307 = vmatpush1.bf16.xpose.msra.mxu0 0
      %1308 = vmatprep.subr.bf16.mxu0 0
      %1309 = vmatpush1.bf16.xpose.msra.mxu0 0
      %1310 = vmatprep.subr.bf16.mxu0 0
      %1311 = vmatpush1.bf16.xpose.msra.mxu0 0
      %1312 = vmatprep.subr.bf16.mxu0 0
      %1313 = vmatpush1.bf16.xpose.msra.mxu0 0
      %1314 = vmatprep.subr.bf16.mxu0 0
      %1315 = vmatpush1.bf16.xpose.msra.mxu0 0
      %1316 = vmatprep.subr.bf16.mxu0 0
      %1317 = vmatpush1.bf16.xpose.msra.mxu0 0
      %1318 = vmatprep.subr.bf16.mxu0 0
      %1319 = vmatpush1.bf16.xpose.msra.mxu0 0
      %1320 = vmatprep.subr.bf16.mxu0 0
      %1321 = vmatpush1.bf16.xpose.msra.mxu0 0
      %1322 = vmatprep.subr.bf16.mxu0 0
      %1323 = vmatpush1.bf16.xpose.msra.mxu0 0
      %1324 = vmatprep.subr.bf16.mxu0 0
      %1325 = vmatpush1.bf16.xpose.msra.mxu0 0
      %1326 = vmatprep.subr.bf16.mxu0 0
      %1327 = vmatpush1.bf16.xpose.msra.mxu0 0
      %1328 = vmatprep.subr.bf16.mxu0 0
      %1329 = vmatpush1.bf16.xpose.msra.mxu0 0
      %1330 = vmatprep.mubr.bf16.mxu0 0
      %1331 = vmatmul.mubr.bf16.gmra.mrb[0].mxu0 %v1293
      %v1332 = vpop.f32.mrb[0].mxu0
      %v1333 = vadd.f32 %v1174, %v1332
      %v1334 = vpop.f32.mrb[0].mxu0
      %v1335 = vpop.f32.mrb[0].mxu0
      %v1336 = vpop.f32.mrb[0].mxu0
      %1337 = vdwg.mxu0
      %v1338 = vsel %vm1226, %v1333, -inf
      %1339 = vmax.xlane.f32.xlu0 %v1338
      %v1340 = vpop.xlane.xlu0 %1339
      %v1341 = vsub.f32 %v1333, %v1340
      %v1342 = vmul.f32 %v1341, 1.442695
      %v1343 = vpow.pop %v1342
      %v1344 = vsel %vm1226, %v1343, 0.0
      %1345 = vadd.xlane.f32.xlu0 %v1344
      %v1346 = vpop.xlane.xlu0 %1345
      %v1347 = vrcp.pop %v1346
      %v1348 = vmul.f32 %v1343, %v1347
      %v1349 = vpack.c.bf16 %v1348, %v1348
      %1350 = vrot.lane.b32.xlu0 %v1169, 60
      %v1351 = vpop.permute.xlu0 %1350
      %v1353 = vsel %vm1226, %v1349, 0
      %v1356 = vsel %vm1244, %v1351, 0
      %1358 = vmatprep.subr.bf16.mxu0 0
      %1359 = vmatpush1.bf16.msra.mxu0 %v1356
      %1360 = vmatprep.subr.bf16.mxu0 0
      %1361 = vmatpush1.bf16.msra.mxu0 0
      %1362 = vmatprep.subr.bf16.mxu0 0
      %1363 = vmatpush1.bf16.msra.mxu0 0
      %1364 = vmatprep.subr.bf16.mxu0 0
      %1365 = vmatpush1.bf16.msra.mxu0 0
      %1366 = vmatprep.subr.bf16.mxu0 0
      %1367 = vmatpush1.bf16.msra.mxu0 0
      %1368 = vmatprep.subr.bf16.mxu0 0
      %1369 = vmatpush1.bf16.msra.mxu0 0
      %1370 = vmatprep.subr.bf16.mxu0 0
      %1371 = vmatpush1.bf16.msra.mxu0 0
      %1372 = vmatprep.subr.bf16.mxu0 0
      %1373 = vmatpush1.bf16.msra.mxu0 0
      %1374 = vmatprep.subr.bf16.mxu0 0
      %1375 = vmatpush1.bf16.msra.mxu0 0
      %1376 = vmatprep.subr.bf16.mxu0 0
      %1377 = vmatpush1.bf16.msra.mxu0 0
      %1378 = vmatprep.subr.bf16.mxu0 0
      %1379 = vmatpush1.bf16.msra.mxu0 0
      %1380 = vmatprep.subr.bf16.mxu0 0
      %1381 = vmatpush1.bf16.msra.mxu0 0
      %1382 = vmatprep.subr.bf16.mxu0 0
      %1383 = vmatpush1.bf16.msra.mxu0 0
      %1384 = vmatprep.subr.bf16.mxu0 0
      %1385 = vmatpush1.bf16.msra.mxu0 0
      %1386 = vmatprep.subr.bf16.mxu0 0
      %1387 = vmatpush1.bf16.msra.mxu0 0
      %1388 = vmatprep.subr.bf16.mxu0 0
      %1389 = vmatpush1.bf16.msra.mxu0 0
      %1390 = vmatprep.mubr.bf16.mxu0 0
      %1391 = vmatmul.mubr.bf16.gmra.mrb[0].mxu0 %v1353
      %v1392 = vpop.f32.mrb[0].mxu0
      %v1393 = vadd.f32 0.0, %v1392
      %v1394 = vpop.f32.mrb[0].mxu0
      %v1395 = vpop.f32.mrb[0].mxu0
      %v1396 = vpop.f32.mrb[0].mxu0
      %1397 = vdwg.mxu0
      %1398 = vrot.lane.b32.xlu0 %v1169, 120
      %v1399 = vpop.permute.xlu0 %1398
      %1400 = vrot.lane.b32.xlu0 %v1169, 88
      %v1401 = vpop.permute.xlu0 %1400
      %v1403 = vsel %vm1179, %v1399, 0
      %v1406 = vsel %vm1179, %v1401, 0
      %1408 = vmatprep.subr.bf16.mxu0 0
      %1409 = vmatpush1.bf16.xpose.msra.mxu0 %v1406
      %1410 = vmatprep.subr.bf16.mxu0 0
      %1411 = vmatpush1.bf16.xpose.msra.mxu0 0
      %1412 = vmatprep.subr.bf16.mxu0 0
      %1413 = vmatpush1.bf16.xpose.msra.mxu0 0
      %1414 = vmatprep.subr.bf16.mxu0 0
      %1415 = vmatpush1.bf16.xpose.msra.mxu0 0
      %1416 = vmatprep.subr.bf16.mxu0 0
      %1417 = vmatpush1.bf16.xpose.msra.mxu0 0
      %1418 = vmatprep.subr.bf16.mxu0 0
      %1419 = vmatpush1.bf16.xpose.msra.mxu0 0
      %1420 = vmatprep.subr.bf16.mxu0 0
      %1421 = vmatpush1.bf16.xpose.msra.mxu0 0
      %1422 = vmatprep.subr.bf16.mxu0 0
      %1423 = vmatpush1.bf16.xpose.msra.mxu0 0
      %1424 = vmatprep.subr.bf16.mxu0 0
      %1425 = vmatpush1.bf16.xpose.msra.mxu0 0
      %1426 = vmatprep.subr.bf16.mxu0 0
      %1427 = vmatpush1.bf16.xpose.msra.mxu0 0
      %1428 = vmatprep.subr.bf16.mxu0 0
      %1429 = vmatpush1.bf16.xpose.msra.mxu0 0
      %1430 = vmatprep.subr.bf16.mxu0 0
      %1431 = vmatpush1.bf16.xpose.msra.mxu0 0
      %1432 = vmatprep.subr.bf16.mxu0 0
      %1433 = vmatpush1.bf16.xpose.msra.mxu0 0
      %1434 = vmatprep.subr.bf16.mxu0 0
      %1435 = vmatpush1.bf16.xpose.msra.mxu0 0
      %1436 = vmatprep.subr.bf16.mxu0 0
      %1437 = vmatpush1.bf16.xpose.msra.mxu0 0
      %1438 = vmatprep.subr.bf16.mxu0 0
      %1439 = vmatpush1.bf16.xpose.msra.mxu0 0
      %1440 = vmatprep.mubr.bf16.mxu0 0
      %1441 = vmatmul.mubr.bf16.gmra.mrb[0].mxu0 %v1403
      %v1442 = vpop.f32.mrb[0].mxu0
      %v1443 = vadd.f32 %v1174, %v1442
      %v1444 = vpop.f32.mrb[0].mxu0
      %v1445 = vpop.f32.mrb[0].mxu0
      %v1446 = vpop.f32.mrb[0].mxu0
      %1447 = vdwg.mxu0
      %v1448 = vsel %vm1226, %v1443, -inf
      %1449 = vmax.xlane.f32.xlu0 %v1448
      %v1450 = vpop.xlane.xlu0 %1449
      %v1451 = vsub.f32 %v1443, %v1450
      %v1452 = vmul.f32 %v1451, 1.442695
      %v1453 = vpow.pop %v1452
      %v1454 = vsel %vm1226, %v1453, 0.0
      %1455 = vadd.xlane.f32.xlu0 %v1454
      %v1456 = vpop.xlane.xlu0 %1455
      %v1457 = vrcp.pop %v1456
      %v1458 = vmul.f32 %v1453, %v1457
      %v1459 = vpack.c.bf16 %v1458, %v1458
      %1460 = vrot.lane.b32.xlu0 %v1169, 56
      %v1461 = vpop.permute.xlu0 %1460
      %v1463 = vsel %vm1226, %v1459, 0
      %v1466 = vsel %vm1244, %v1461, 0
      %1468 = vmatprep.subr.bf16.mxu0 0
      %1469 = vmatpush1.bf16.msra.mxu0 %v1466
      %1470 = vmatprep.subr.bf16.mxu0 0
      %1471 = vmatpush1.bf16.msra.mxu0 0
      %1472 = vmatprep.subr.bf16.mxu0 0
      %1473 = vmatpush1.bf16.msra.mxu0 0
      %1474 = vmatprep.subr.bf16.mxu0 0
      %1475 = vmatpush1.bf16.msra.mxu0 0
      %1476 = vmatprep.subr.bf16.mxu0 0
      %1477 = vmatpush1.bf16.msra.mxu0 0
      %1478 = vmatprep.subr.bf16.mxu0 0
      %1479 = vmatpush1.bf16.msra.mxu0 0
      %1480 = vmatprep.subr.bf16.mxu0 0
      %1481 = vmatpush1.bf16.msra.mxu0 0
      %1482 = vmatprep.subr.bf16.mxu0 0
      %1483 = vmatpush1.bf16.msra.mxu0 0
      %1484 = vmatprep.subr.bf16.mxu0 0
      %1485 = vmatpush1.bf16.msra.mxu0 0
      %1486 = vmatprep.subr.bf16.mxu0 0
      %1487 = vmatpush1.bf16.msra.mxu0 0
      %1488 = vmatprep.subr.bf16.mxu0 0
      %1489 = vmatpush1.bf16.msra.mxu0 0
      %1490 = vmatprep.subr.bf16.mxu0 0
      %1491 = vmatpush1.bf16.msra.mxu0 0
      %1492 = vmatprep.subr.bf16.mxu0 0
      %1493 = vmatpush1.bf16.msra.mxu0 0
      %1494 = vmatprep.subr.bf16.mxu0 0
      %1495 = vmatpush1.bf16.msra.mxu0 0
      %1496 = vmatprep.subr.bf16.mxu0 0
      %1497 = vmatpush1.bf16.msra.mxu0 0
      %1498 = vmatprep.subr.bf16.mxu0 0
      %1499 = vmatpush1.bf16.msra.mxu0 0
      %1500 = vmatprep.mubr.bf16.mxu0 0
      %1501 = vmatmul.mubr.bf16.gmra.mrb[0].mxu0 %v1463
      %v1502 = vpop.f32.mrb[0].mxu0
      %v1503 = vadd.f32 0.0, %v1502
      %v1504 = vpop.f32.mrb[0].mxu0
      %v1505 = vpop.f32.mrb[0].mxu0
      %v1506 = vpop.f32.mrb[0].mxu0
      %1507 = vdwg.mxu0
      %1508 = vrot.lane.b32.xlu0 %v1169, 116
      %v1509 = vpop.permute.xlu0 %1508
      %1510 = vrot.lane.b32.xlu0 %v1169, 84
      %v1511 = vpop.permute.xlu0 %1510
      %v1513 = vsel %vm1179, %v1509, 0
      %v1516 = vsel %vm1179, %v1511, 0
      %1518 = vmatprep.subr.bf16.mxu0 0
      %1519 = vmatpush1.bf16.xpose.msra.mxu0 %v1516
      %1520 = vmatprep.subr.bf16.mxu0 0
      %1521 = vmatpush1.bf16.xpose.msra.mxu0 0
      %1522 = vmatprep.subr.bf16.mxu0 0
      %1523 = vmatpush1.bf16.xpose.msra.mxu0 0
      %1524 = vmatprep.subr.bf16.mxu0 0
      %1525 = vmatpush1.bf16.xpose.msra.mxu0 0
      %1526 = vmatprep.subr.bf16.mxu0 0
      %1527 = vmatpush1.bf16.xpose.msra.mxu0 0
      %1528 = vmatprep.subr.bf16.mxu0 0
      %1529 = vmatpush1.bf16.xpose.msra.mxu0 0
      %1530 = vmatprep.subr.bf16.mxu0 0
      %1531 = vmatpush1.bf16.xpose.msra.mxu0 0
      %1532 = vmatprep.subr.bf16.mxu0 0
      %1533 = vmatpush1.bf16.xpose.msra.mxu0 0
      %1534 = vmatprep.subr.bf16.mxu0 0
      %1535 = vmatpush1.bf16.xpose.msra.mxu0 0
      %1536 = vmatprep.subr.bf16.mxu0 0
      %1537 = vmatpush1.bf16.xpose.msra.mxu0 0
      %1538 = vmatprep.subr.bf16.mxu0 0
      %1539 = vmatpush1.bf16.xpose.msra.mxu0 0
      %1540 = vmatprep.subr.bf16.mxu0 0
      %1541 = vmatpush1.bf16.xpose.msra.mxu0 0
      %1542 = vmatprep.subr.bf16.mxu0 0
      %1543 = vmatpush1.bf16.xpose.msra.mxu0 0
      %1544 = vmatprep.subr.bf16.mxu0 0
      %1545 = vmatpush1.bf16.xpose.msra.mxu0 0
      %1546 = vmatprep.subr.bf16.mxu0 0
      %1547 = vmatpush1.bf16.xpose.msra.mxu0 0
      %1548 = vmatprep.subr.bf16.mxu0 0
      %1549 = vmatpush1.bf16.xpose.msra.mxu0 0
      %1550 = vmatprep.mubr.bf16.mxu0 0
      %1551 = vmatmul.mubr.bf16.gmra.mrb[0].mxu0 %v1513
      %v1552 = vpop.f32.mrb[0].mxu0
      %v1553 = vadd.f32 %v1174, %v1552
      %v1554 = vpop.f32.mrb[0].mxu0
      %v1555 = vpop.f32.mrb[0].mxu0
      %v1556 = vpop.f32.mrb[0].mxu0
      %1557 = vdwg.mxu0
      %v1558 = vsel %vm1226, %v1553, -inf
      %1559 = vmax.xlane.f32.xlu0 %v1558
      %v1560 = vpop.xlane.xlu0 %1559
      %v1561 = vsub.f32 %v1553, %v1560
      %v1562 = vmul.f32 %v1561, 1.442695
      %v1563 = vpow.pop %v1562
      %v1564 = vsel %vm1226, %v1563, 0.0
      %1565 = vadd.xlane.f32.xlu0 %v1564
      %v1566 = vpop.xlane.xlu0 %1565
      %v1567 = vrcp.pop %v1566
      %v1568 = vmul.f32 %v1563, %v1567
      %v1569 = vpack.c.bf16 %v1568, %v1568
      %1570 = vrot.lane.b32.xlu0 %v1169, 52
      %v1571 = vpop.permute.xlu0 %1570
      %v1573 = vsel %vm1226, %v1569, 0
      %v1576 = vsel %vm1244, %v1571, 0
      %1578 = vmatprep.subr.bf16.mxu0 0
      %1579 = vmatpush1.bf16.msra.mxu0 %v1576
      %1580 = vmatprep.subr.bf16.mxu0 0
      %1581 = vmatpush1.bf16.msra.mxu0 0
      %1582 = vmatprep.subr.bf16.mxu0 0
      %1583 = vmatpush1.bf16.msra.mxu0 0
      %1584 = vmatprep.subr.bf16.mxu0 0
      %1585 = vmatpush1.bf16.msra.mxu0 0
      %1586 = vmatprep.subr.bf16.mxu0 0
      %1587 = vmatpush1.bf16.msra.mxu0 0
      %1588 = vmatprep.subr.bf16.mxu0 0
      %1589 = vmatpush1.bf16.msra.mxu0 0
      %1590 = vmatprep.subr.bf16.mxu0 0
      %1591 = vmatpush1.bf16.msra.mxu0 0
      %1592 = vmatprep.subr.bf16.mxu0 0
      %1593 = vmatpush1.bf16.msra.mxu0 0
      %1594 = vmatprep.subr.bf16.mxu0 0
      %1595 = vmatpush1.bf16.msra.mxu0 0
      %1596 = vmatprep.subr.bf16.mxu0 0
      %1597 = vmatpush1.bf16.msra.mxu0 0
      %1598 = vmatprep.subr.bf16.mxu0 0
      %1599 = vmatpush1.bf16.msra.mxu0 0
      %1600 = vmatprep.subr.bf16.mxu0 0
      %1601 = vmatpush1.bf16.msra.mxu0 0
      %1602 = vmatprep.subr.bf16.mxu0 0
      %1603 = vmatpush1.bf16.msra.mxu0 0
      %1604 = vmatprep.subr.bf16.mxu0 0
      %1605 = vmatpush1.bf16.msra.mxu0 0
      %1606 = vmatprep.subr.bf16.mxu0 0
      %1607 = vmatpush1.bf16.msra.mxu0 0
      %1608 = vmatprep.subr.bf16.mxu0 0
      %1609 = vmatpush1.bf16.msra.mxu0 0
      %1610 = vmatprep.mubr.bf16.mxu0 0
      %1611 = vmatmul.mubr.bf16.gmra.mrb[0].mxu0 %v1573
      %v1612 = vpop.f32.mrb[0].mxu0
      %v1613 = vadd.f32 0.0, %v1612
      %v1614 = vpop.f32.mrb[0].mxu0
      %v1615 = vpop.f32.mrb[0].mxu0
      %v1616 = vpop.f32.mrb[0].mxu0
      %1617 = vdwg.mxu0
      %1618 = vrot.lane.b32.xlu0 %v1169, 112
      %v1619 = vpop.permute.xlu0 %1618
      %1620 = vrot.lane.b32.xlu0 %v1169, 80
      %v1621 = vpop.permute.xlu0 %1620
      %v1623 = vsel %vm1179, %v1619, 0
      %v1626 = vsel %vm1179, %v1621, 0
      %1628 = vmatprep.subr.bf16.mxu0 0
      %1629 = vmatpush1.bf16.xpose.msra.mxu0 %v1626
      %1630 = vmatprep.subr.bf16.mxu0 0
      %1631 = vmatpush1.bf16.xpose.msra.mxu0 0
      %1632 = vmatprep.subr.bf16.mxu0 0
      %1633 = vmatpush1.bf16.xpose.msra.mxu0 0
      %1634 = vmatprep.subr.bf16.mxu0 0
      %1635 = vmatpush1.bf16.xpose.msra.mxu0 0
      %1636 = vmatprep.subr.bf16.mxu0 0
      %1637 = vmatpush1.bf16.xpose.msra.mxu0 0
      %1638 = vmatprep.subr.bf16.mxu0 0
      %1639 = vmatpush1.bf16.xpose.msra.mxu0 0
      %1640 = vmatprep.subr.bf16.mxu0 0
      %1641 = vmatpush1.bf16.xpose.msra.mxu0 0
      %1642 = vmatprep.subr.bf16.mxu0 0
      %1643 = vmatpush1.bf16.xpose.msra.mxu0 0
      %1644 = vmatprep.subr.bf16.mxu0 0
      %1645 = vmatpush1.bf16.xpose.msra.mxu0 0
      %1646 = vmatprep.subr.bf16.mxu0 0
      %1647 = vmatpush1.bf16.xpose.msra.mxu0 0
      %1648 = vmatprep.subr.bf16.mxu0 0
      %1649 = vmatpush1.bf16.xpose.msra.mxu0 0
      %1650 = vmatprep.subr.bf16.mxu0 0
      %1651 = vmatpush1.bf16.xpose.msra.mxu0 0
      %1652 = vmatprep.subr.bf16.mxu0 0
      %1653 = vmatpush1.bf16.xpose.msra.mxu0 0
      %1654 = vmatprep.subr.bf16.mxu0 0
      %1655 = vmatpush1.bf16.xpose.msra.mxu0 0
      %1656 = vmatprep.subr.bf16.mxu0 0
      %1657 = vmatpush1.bf16.xpose.msra.mxu0 0
      %1658 = vmatprep.subr.bf16.mxu0 0
      %1659 = vmatpush1.bf16.xpose.msra.mxu0 0
      %1660 = vmatprep.mubr.bf16.mxu0 0
      %1661 = vmatmul.mubr.bf16.gmra.mrb[0].mxu0 %v1623
      %v1662 = vpop.f32.mrb[0].mxu0
      %v1663 = vadd.f32 %v1174, %v1662
      %v1664 = vpop.f32.mrb[0].mxu0
      %v1665 = vpop.f32.mrb[0].mxu0
      %v1666 = vpop.f32.mrb[0].mxu0
      %1667 = vdwg.mxu0
      %v1668 = vsel %vm1226, %v1663, -inf
      %1669 = vmax.xlane.f32.xlu0 %v1668
      %v1670 = vpop.xlane.xlu0 %1669
      %v1671 = vsub.f32 %v1663, %v1670
      %v1672 = vmul.f32 %v1671, 1.442695
      %v1673 = vpow.pop %v1672
      %v1674 = vsel %vm1226, %v1673, 0.0
      %1675 = vadd.xlane.f32.xlu0 %v1674
      %v1676 = vpop.xlane.xlu0 %1675
      %v1677 = vrcp.pop %v1676
      %v1678 = vmul.f32 %v1673, %v1677
      %v1679 = vpack.c.bf16 %v1678, %v1678
      %1680 = vrot.lane.b32.xlu0 %v1169, 48
      %v1681 = vpop.permute.xlu0 %1680
      %v1683 = vsel %vm1226, %v1679, 0
      %v1686 = vsel %vm1244, %v1681, 0
      %1688 = vmatprep.subr.bf16.mxu0 0
      %1689 = vmatpush1.bf16.msra.mxu0 %v1686
      %1690 = vmatprep.subr.bf16.mxu0 0
      %1691 = vmatpush1.bf16.msra.mxu0 0
      %1692 = vmatprep.subr.bf16.mxu0 0
      %1693 = vmatpush1.bf16.msra.mxu0 0
      %1694 = vmatprep.subr.bf16.mxu0 0
      %1695 = vmatpush1.bf16.msra.mxu0 0
      %1696 = vmatprep.subr.bf16.mxu0 0
      %1697 = vmatpush1.bf16.msra.mxu0 0
      %1698 = vmatprep.subr.bf16.mxu0 0
      %1699 = vmatpush1.bf16.msra.mxu0 0
      %1700 = vmatprep.subr.bf16.mxu0 0
      %1701 = vmatpush1.bf16.msra.mxu0 0
      %1702 = vmatprep.subr.bf16.mxu0 0
      %1703 = vmatpush1.bf16.msra.mxu0 0
      %1704 = vmatprep.subr.bf16.mxu0 0
      %1705 = vmatpush1.bf16.msra.mxu0 0
      %1706 = vmatprep.subr.bf16.mxu0 0
      %1707 = vmatpush1.bf16.msra.mxu0 0
      %1708 = vmatprep.subr.bf16.mxu0 0
      %1709 = vmatpush1.bf16.msra.mxu0 0
      %1710 = vmatprep.subr.bf16.mxu0 0
      %1711 = vmatpush1.bf16.msra.mxu0 0
      %1712 = vmatprep.subr.bf16.mxu0 0
      %1713 = vmatpush1.bf16.msra.mxu0 0
      %1714 = vmatprep.subr.bf16.mxu0 0
      %1715 = vmatpush1.bf16.msra.mxu0 0
      %1716 = vmatprep.subr.bf16.mxu0 0
      %1717 = vmatpush1.bf16.msra.mxu0 0
      %1718 = vmatprep.subr.bf16.mxu0 0
      %1719 = vmatpush1.bf16.msra.mxu0 0
      %1720 = vmatprep.mubr.bf16.mxu0 0
      %1721 = vmatmul.mubr.bf16.gmra.mrb[0].mxu0 %v1683
      %v1722 = vpop.f32.mrb[0].mxu0
      %v1723 = vadd.f32 0.0, %v1722
      %v1724 = vpop.f32.mrb[0].mxu0
      %v1725 = vpop.f32.mrb[0].mxu0
      %v1726 = vpop.f32.mrb[0].mxu0
      %1727 = vdwg.mxu0
      %1728 = vrot.lane.b32.xlu0 %v1169, 108
      %v1729 = vpop.permute.xlu0 %1728
      %1730 = vrot.lane.b32.xlu0 %v1169, 76
      %v1731 = vpop.permute.xlu0 %1730
      %v1733 = vsel %vm1179, %v1729, 0
      %v1736 = vsel %vm1179, %v1731, 0
      %1738 = vmatprep.subr.bf16.mxu0 0
      %1739 = vmatpush1.bf16.xpose.msra.mxu0 %v1736
      %1740 = vmatprep.subr.bf16.mxu0 0
      %1741 = vmatpush1.bf16.xpose.msra.mxu0 0
      %1742 = vmatprep.subr.bf16.mxu0 0
      %1743 = vmatpush1.bf16.xpose.msra.mxu0 0
      %1744 = vmatprep.subr.bf16.mxu0 0
      %1745 = vmatpush1.bf16.xpose.msra.mxu0 0
      %1746 = vmatprep.subr.bf16.mxu0 0
      %1747 = vmatpush1.bf16.xpose.msra.mxu0 0
      %1748 = vmatprep.subr.bf16.mxu0 0
      %1749 = vmatpush1.bf16.xpose.msra.mxu0 0
      %1750 = vmatprep.subr.bf16.mxu0 0
      %1751 = vmatpush1.bf16.xpose.msra.mxu0 0
      %1752 = vmatprep.subr.bf16.mxu0 0
      %1753 = vmatpush1.bf16.xpose.msra.mxu0 0
      %1754 = vmatprep.subr.bf16.mxu0 0
      %1755 = vmatpush1.bf16.xpose.msra.mxu0 0
      %1756 = vmatprep.subr.bf16.mxu0 0
      %1757 = vmatpush1.bf16.xpose.msra.mxu0 0
      %1758 = vmatprep.subr.bf16.mxu0 0
      %1759 = vmatpush1.bf16.xpose.msra.mxu0 0
      %1760 = vmatprep.subr.bf16.mxu0 0
      %1761 = vmatpush1.bf16.xpose.msra.mxu0 0
      %1762 = vmatprep.subr.bf16.mxu0 0
      %1763 = vmatpush1.bf16.xpose.msra.mxu0 0
      %1764 = vmatprep.subr.bf16.mxu0 0
      %1765 = vmatpush1.bf16.xpose.msra.mxu0 0
      %1766 = vmatprep.subr.bf16.mxu0 0
      %1767 = vmatpush1.bf16.xpose.msra.mxu0 0
      %1768 = vmatprep.subr.bf16.mxu0 0
      %1769 = vmatpush1.bf16.xpose.msra.mxu0 0
      %1770 = vmatprep.mubr.bf16.mxu0 0
      %1771 = vmatmul.mubr.bf16.gmra.mrb[0].mxu0 %v1733
      %v1772 = vpop.f32.mrb[0].mxu0
      %v1773 = vadd.f32 %v1174, %v1772
      %v1774 = vpop.f32.mrb[0].mxu0
      %v1775 = vpop.f32.mrb[0].mxu0
      %v1776 = vpop.f32.mrb[0].mxu0
      %1777 = vdwg.mxu0
      %v1778 = vsel %vm1226, %v1773, -inf
      %1779 = vmax.xlane.f32.xlu0 %v1778
      %v1780 = vpop.xlane.xlu0 %1779
      %v1781 = vsub.f32 %v1773, %v1780
      %v1782 = vmul.f32 %v1781, 1.442695
      %v1783 = vpow.pop %v1782
      %v1784 = vsel %vm1226, %v1783, 0.0
      %1785 = vadd.xlane.f32.xlu0 %v1784
      %v1786 = vpop.xlane.xlu0 %1785
      %v1787 = vrcp.pop %v1786
      %v1788 = vmul.f32 %v1783, %v1787
      %v1789 = vpack.c.bf16 %v1788, %v1788
      %1790 = vrot.lane.b32.xlu0 %v1169, 44
      %v1791 = vpop.permute.xlu0 %1790
      %v1793 = vsel %vm1226, %v1789, 0
      %v1796 = vsel %vm1244, %v1791, 0
      %1798 = vmatprep.subr.bf16.mxu0 0
      %1799 = vmatpush1.bf16.msra.mxu0 %v1796
      %1800 = vmatprep.subr.bf16.mxu0 0
      %1801 = vmatpush1.bf16.msra.mxu0 0
      %1802 = vmatprep.subr.bf16.mxu0 0
      %1803 = vmatpush1.bf16.msra.mxu0 0
      %1804 = vmatprep.subr.bf16.mxu0 0
      %1805 = vmatpush1.bf16.msra.mxu0 0
      %1806 = vmatprep.subr.bf16.mxu0 0
      %1807 = vmatpush1.bf16.msra.mxu0 0
      %1808 = vmatprep.subr.bf16.mxu0 0
      %1809 = vmatpush1.bf16.msra.mxu0 0
      %1810 = vmatprep.subr.bf16.mxu0 0
      %1811 = vmatpush1.bf16.msra.mxu0 0
      %1812 = vmatprep.subr.bf16.mxu0 0
      %1813 = vmatpush1.bf16.msra.mxu0 0
      %1814 = vmatprep.subr.bf16.mxu0 0
      %1815 = vmatpush1.bf16.msra.mxu0 0
      %1816 = vmatprep.subr.bf16.mxu0 0
      %1817 = vmatpush1.bf16.msra.mxu0 0
      %1818 = vmatprep.subr.bf16.mxu0 0
      %1819 = vmatpush1.bf16.msra.mxu0 0
      %1820 = vmatprep.subr.bf16.mxu0 0
      %1821 = vmatpush1.bf16.msra.mxu0 0
      %1822 = vmatprep.subr.bf16.mxu0 0
      %1823 = vmatpush1.bf16.msra.mxu0 0
      %1824 = vmatprep.subr.bf16.mxu0 0
      %1825 = vmatpush1.bf16.msra.mxu0 0
      %1826 = vmatprep.subr.bf16.mxu0 0
      %1827 = vmatpush1.bf16.msra.mxu0 0
      %1828 = vmatprep.subr.bf16.mxu0 0
      %1829 = vmatpush1.bf16.msra.mxu0 0
      %1830 = vmatprep.mubr.bf16.mxu0 0
      %1831 = vmatmul.mubr.bf16.gmra.mrb[0].mxu0 %v1793
      %v1832 = vpop.f32.mrb[0].mxu0
      %v1833 = vadd.f32 0.0, %v1832
      %v1834 = vpop.f32.mrb[0].mxu0
      %v1835 = vpop.f32.mrb[0].mxu0
      %v1836 = vpop.f32.mrb[0].mxu0
      %1837 = vdwg.mxu0
      %1838 = vrot.lane.b32.xlu0 %v1169, 104
      %v1839 = vpop.permute.xlu0 %1838
      %1840 = vrot.lane.b32.xlu0 %v1169, 72
      %v1841 = vpop.permute.xlu0 %1840
      %v1843 = vsel %vm1179, %v1839, 0
      %v1846 = vsel %vm1179, %v1841, 0
      %1848 = vmatprep.subr.bf16.mxu0 0
      %1849 = vmatpush1.bf16.xpose.msra.mxu0 %v1846
      %1850 = vmatprep.subr.bf16.mxu0 0
      %1851 = vmatpush1.bf16.xpose.msra.mxu0 0
      %1852 = vmatprep.subr.bf16.mxu0 0
      %1853 = vmatpush1.bf16.xpose.msra.mxu0 0
      %1854 = vmatprep.subr.bf16.mxu0 0
      %1855 = vmatpush1.bf16.xpose.msra.mxu0 0
      %1856 = vmatprep.subr.bf16.mxu0 0
      %1857 = vmatpush1.bf16.xpose.msra.mxu0 0
      %1858 = vmatprep.subr.bf16.mxu0 0
      %1859 = vmatpush1.bf16.xpose.msra.mxu0 0
      %1860 = vmatprep.subr.bf16.mxu0 0
      %1861 = vmatpush1.bf16.xpose.msra.mxu0 0
      %1862 = vmatprep.subr.bf16.mxu0 0
      %1863 = vmatpush1.bf16.xpose.msra.mxu0 0
      %1864 = vmatprep.subr.bf16.mxu0 0
      %1865 = vmatpush1.bf16.xpose.msra.mxu0 0
      %1866 = vmatprep.subr.bf16.mxu0 0
      %1867 = vmatpush1.bf16.xpose.msra.mxu0 0
      %1868 = vmatprep.subr.bf16.mxu0 0
      %1869 = vmatpush1.bf16.xpose.msra.mxu0 0
      %1870 = vmatprep.subr.bf16.mxu0 0
      %1871 = vmatpush1.bf16.xpose.msra.mxu0 0
      %1872 = vmatprep.subr.bf16.mxu0 0
      %1873 = vmatpush1.bf16.xpose.msra.mxu0 0
      %1874 = vmatprep.subr.bf16.mxu0 0
      %1875 = vmatpush1.bf16.xpose.msra.mxu0 0
      %1876 = vmatprep.subr.bf16.mxu0 0
      %1877 = vmatpush1.bf16.xpose.msra.mxu0 0
      %1878 = vmatprep.subr.bf16.mxu0 0
      %1879 = vmatpush1.bf16.xpose.msra.mxu0 0
      %1880 = vmatprep.mubr.bf16.mxu0 0
      %1881 = vmatmul.mubr.bf16.gmra.mrb[0].mxu0 %v1843
      %v1882 = vpop.f32.mrb[0].mxu0
      %v1883 = vadd.f32 %v1174, %v1882
      %v1884 = vpop.f32.mrb[0].mxu0
      %v1885 = vpop.f32.mrb[0].mxu0
      %v1886 = vpop.f32.mrb[0].mxu0
      %1887 = vdwg.mxu0
      %v1888 = vsel %vm1226, %v1883, -inf
      %1889 = vmax.xlane.f32.xlu0 %v1888
      %v1890 = vpop.xlane.xlu0 %1889
      %v1891 = vsub.f32 %v1883, %v1890
      %v1892 = vmul.f32 %v1891, 1.442695
      %v1893 = vpow.pop %v1892
      %v1894 = vsel %vm1226, %v1893, 0.0
      %1895 = vadd.xlane.f32.xlu0 %v1894
      %v1896 = vpop.xlane.xlu0 %1895
      %v1897 = vrcp.pop %v1896
      %v1898 = vmul.f32 %v1893, %v1897
      %v1899 = vpack.c.bf16 %v1898, %v1898
      %1900 = vrot.lane.b32.xlu0 %v1169, 40
      %v1901 = vpop.permute.xlu0 %1900
      %v1903 = vsel %vm1226, %v1899, 0
      %v1906 = vsel %vm1244, %v1901, 0
      %1908 = vmatprep.subr.bf16.mxu0 0
      %1909 = vmatpush1.bf16.msra.mxu0 %v1906
      %1910 = vmatprep.subr.bf16.mxu0 0
      %1911 = vmatpush1.bf16.msra.mxu0 0
      %1912 = vmatprep.subr.bf16.mxu0 0
      %1913 = vmatpush1.bf16.msra.mxu0 0
      %1914 = vmatprep.subr.bf16.mxu0 0
      %1915 = vmatpush1.bf16.msra.mxu0 0
      %1916 = vmatprep.subr.bf16.mxu0 0
      %1917 = vmatpush1.bf16.msra.mxu0 0
      %1918 = vmatprep.subr.bf16.mxu0 0
      %1919 = vmatpush1.bf16.msra.mxu0 0
      %1920 = vmatprep.subr.bf16.mxu0 0
      %1921 = vmatpush1.bf16.msra.mxu0 0
      %1922 = vmatprep.subr.bf16.mxu0 0
      %1923 = vmatpush1.bf16.msra.mxu0 0
      %1924 = vmatprep.subr.bf16.mxu0 0
      %1925 = vmatpush1.bf16.msra.mxu0 0
      %1926 = vmatprep.subr.bf16.mxu0 0
      %1927 = vmatpush1.bf16.msra.mxu0 0
      %1928 = vmatprep.subr.bf16.mxu0 0
      %1929 = vmatpush1.bf16.msra.mxu0 0
      %1930 = vmatprep.subr.bf16.mxu0 0
      %1931 = vmatpush1.bf16.msra.mxu0 0
      %1932 = vmatprep.subr.bf16.mxu0 0
      %1933 = vmatpush1.bf16.msra.mxu0 0
      %1934 = vmatprep.subr.bf16.mxu0 0
      %1935 = vmatpush1.bf16.msra.mxu0 0
      %1936 = vmatprep.subr.bf16.mxu0 0
      %1937 = vmatpush1.bf16.msra.mxu0 0
      %1938 = vmatprep.subr.bf16.mxu0 0
      %1939 = vmatpush1.bf16.msra.mxu0 0
      %1940 = vmatprep.mubr.bf16.mxu0 0
      %1941 = vmatmul.mubr.bf16.gmra.mrb[0].mxu0 %v1903
      %v1942 = vpop.f32.mrb[0].mxu0
      %v1943 = vadd.f32 0.0, %v1942
      %v1944 = vpop.f32.mrb[0].mxu0
      %v1945 = vpop.f32.mrb[0].mxu0
      %v1946 = vpop.f32.mrb[0].mxu0
      %1947 = vdwg.mxu0
      %1948 = vrot.lane.b32.xlu0 %v1169, 100
      %v1949 = vpop.permute.xlu0 %1948
      %1950 = vrot.lane.b32.xlu0 %v1169, 68
      %v1951 = vpop.permute.xlu0 %1950
      %v1953 = vsel %vm1179, %v1949, 0
      %v1956 = vsel %vm1179, %v1951, 0
      %1958 = vmatprep.subr.bf16.mxu0 0
      %1959 = vmatpush1.bf16.xpose.msra.mxu0 %v1956
      %1960 = vmatprep.subr.bf16.mxu0 0
      %1961 = vmatpush1.bf16.xpose.msra.mxu0 0
      %1962 = vmatprep.subr.bf16.mxu0 0
      %1963 = vmatpush1.bf16.xpose.msra.mxu0 0
      %1964 = vmatprep.subr.bf16.mxu0 0
      %1965 = vmatpush1.bf16.xpose.msra.mxu0 0
      %1966 = vmatprep.subr.bf16.mxu0 0
      %1967 = vmatpush1.bf16.xpose.msra.mxu0 0
      %1968 = vmatprep.subr.bf16.mxu0 0
      %1969 = vmatpush1.bf16.xpose.msra.mxu0 0
      %1970 = vmatprep.subr.bf16.mxu0 0
      %1971 = vmatpush1.bf16.xpose.msra.mxu0 0
      %1972 = vmatprep.subr.bf16.mxu0 0
      %1973 = vmatpush1.bf16.xpose.msra.mxu0 0
      %1974 = vmatprep.subr.bf16.mxu0 0
      %1975 = vmatpush1.bf16.xpose.msra.mxu0 0
      %1976 = vmatprep.subr.bf16.mxu0 0
      %1977 = vmatpush1.bf16.xpose.msra.mxu0 0
      %1978 = vmatprep.subr.bf16.mxu0 0
      %1979 = vmatpush1.bf16.xpose.msra.mxu0 0
      %1980 = vmatprep.subr.bf16.mxu0 0
      %1981 = vmatpush1.bf16.xpose.msra.mxu0 0
      %1982 = vmatprep.subr.bf16.mxu0 0
      %1983 = vmatpush1.bf16.xpose.msra.mxu0 0
      %1984 = vmatprep.subr.bf16.mxu0 0
      %1985 = vmatpush1.bf16.xpose.msra.mxu0 0
      %1986 = vmatprep.subr.bf16.mxu0 0
      %1987 = vmatpush1.bf16.xpose.msra.mxu0 0
      %1988 = vmatprep.subr.bf16.mxu0 0
      %1989 = vmatpush1.bf16.xpose.msra.mxu0 0
      %1990 = vmatprep.mubr.bf16.mxu0 0
      %1991 = vmatmul.mubr.bf16.gmra.mrb[0].mxu0 %v1953
      %v1992 = vpop.f32.mrb[0].mxu0
      %v1993 = vadd.f32 %v1174, %v1992
      %v1994 = vpop.f32.mrb[0].mxu0
      %v1995 = vpop.f32.mrb[0].mxu0
      %v1996 = vpop.f32.mrb[0].mxu0
      %1997 = vdwg.mxu0
      %v1998 = vsel %vm1226, %v1993, -inf
      %1999 = vmax.xlane.f32.xlu0 %v1998
      %v2000 = vpop.xlane.xlu0 %1999
      %v2001 = vsub.f32 %v1993, %v2000
      %v2002 = vmul.f32 %v2001, 1.442695
      %v2003 = vpow.pop %v2002
      %v2004 = vsel %vm1226, %v2003, 0.0
      %2005 = vadd.xlane.f32.xlu0 %v2004
      %v2006 = vpop.xlane.xlu0 %2005
      %v2007 = vrcp.pop %v2006
      %v2008 = vmul.f32 %v2003, %v2007
      %v2009 = vpack.c.bf16 %v2008, %v2008
      %2010 = vrot.lane.b32.xlu0 %v1169, 36
      %v2011 = vpop.permute.xlu0 %2010
      %v2013 = vsel %vm1226, %v2009, 0
      %v2016 = vsel %vm1244, %v2011, 0
      %2018 = vmatprep.subr.bf16.mxu0 0
      %2019 = vmatpush1.bf16.msra.mxu0 %v2016
      %2020 = vmatprep.subr.bf16.mxu0 0
      %2021 = vmatpush1.bf16.msra.mxu0 0
      %2022 = vmatprep.subr.bf16.mxu0 0
      %2023 = vmatpush1.bf16.msra.mxu0 0
      %2024 = vmatprep.subr.bf16.mxu0 0
      %2025 = vmatpush1.bf16.msra.mxu0 0
      %2026 = vmatprep.subr.bf16.mxu0 0
      %2027 = vmatpush1.bf16.msra.mxu0 0
      %2028 = vmatprep.subr.bf16.mxu0 0
      %2029 = vmatpush1.bf16.msra.mxu0 0
      %2030 = vmatprep.subr.bf16.mxu0 0
      %2031 = vmatpush1.bf16.msra.mxu0 0
      %2032 = vmatprep.subr.bf16.mxu0 0
      %2033 = vmatpush1.bf16.msra.mxu0 0
      %2034 = vmatprep.subr.bf16.mxu0 0
      %2035 = vmatpush1.bf16.msra.mxu0 0
      %2036 = vmatprep.subr.bf16.mxu0 0
      %2037 = vmatpush1.bf16.msra.mxu0 0
      %2038 = vmatprep.subr.bf16.mxu0 0
      %2039 = vmatpush1.bf16.msra.mxu0 0
      %2040 = vmatprep.subr.bf16.mxu0 0
      %2041 = vmatpush1.bf16.msra.mxu0 0
      %2042 = vmatprep.subr.bf16.mxu0 0
      %2043 = vmatpush1.bf16.msra.mxu0 0
      %2044 = vmatprep.subr.bf16.mxu0 0
      %2045 = vmatpush1.bf16.msra.mxu0 0
      %2046 = vmatprep.subr.bf16.mxu0 0
      %2047 = vmatpush1.bf16.msra.mxu0 0
      %2048 = vmatprep.subr.bf16.mxu0 0
      %2049 = vmatpush1.bf16.msra.mxu0 0
      %2050 = vmatprep.mubr.bf16.mxu0 0
      %2051 = vmatmul.mubr.bf16.gmra.mrb[0].mxu0 %v2013
      %v2052 = vpop.f32.mrb[0].mxu0
      %v2053 = vadd.f32 0.0, %v2052
      %v2054 = vpop.f32.mrb[0].mxu0
      %v2055 = vpop.f32.mrb[0].mxu0
      %v2056 = vpop.f32.mrb[0].mxu0
      %2057 = vdwg.mxu0
      %2059 = vrot.lane.b32.xlu0 %v1393, 4
      %v2060 = vpop.permute.xlu0 %2059
      %2063 = vrot.lane.b32.xlu0 %v1503, 8
      %v2064 = vpop.permute.xlu0 %2063
      %2067 = vrot.lane.b32.xlu0 %v1613, 12
      %v2068 = vpop.permute.xlu0 %2067
      %2071 = vrot.lane.b32.xlu0 %v1723, 16
      %v2072 = vpop.permute.xlu0 %2071
      %2075 = vrot.lane.b32.xlu0 %v1833, 20
      %v2076 = vpop.permute.xlu0 %2075
      %2079 = vrot.lane.b32.xlu0 %v1943, 24
      %v2080 = vpop.permute.xlu0 %2079
      %2083 = vrot.lane.b32.xlu0 %v2053, 28
      %v2084 = vpop.permute.xlu0 %2083
      %v2086 = vsel %vm1179, %v1283, %v2060
      %v2087 = vsel %vm1226, %v2086, %v2064
      %vm2088 = vcmask 97280
      %v2089 = vsel %vm2088, %v2087, %v2068
      %vm2090 = vcmask 130048
      %v2091 = vsel %vm2090, %v2089, %v2072
      %vm2092 = vcmask 162816
      %v2093 = vsel %vm2092, %v2091, %v2076
      %vm2094 = vcmask 195584
      %v2095 = vsel %vm2094, %v2093, %v2080
      %vm2096 = vcmask 228352
      %v2097 = vsel %vm2096, %v2095, %v2084
      %v2098 = vpack.c.bf16 %v2097, %v2097
      %v2099 = vld [vmem:[%s11] sm:$0xf]
      %v2100 = vld [vmem:[%s11 + $0x4] sm:$0xf]
      %v2101 = vld [vmem:[%s11 + $0x8] sm:$0xf]
      %v2102 = vld [vmem:[%s11 + $0xc] sm:$0xf]
      %v2103 = vld [vmem:[%s13] sm:$0x1]
      %v2105 = vlaneseq
      %v2106 = vshrl.u32 %v2105, 7
      %v2107 = vsub.s32 0, %v2106
      %v2108 = vrot.slane %v2103, %v2107
      %v2114 = vunpack.c.l.b16 %v2099
      %v2115 = vunpack.c.l.b16 %v2100
      %v2116 = vunpack.c.l.b16 %v2101
      %v2117 = vunpack.c.l.b16 %v2102
      %v2118 = vpack.c.b16 %v2115, %v2114
      %v2119 = vpack.c.b16 %v2117, %v2116
      %v2123 = vsel %vm1124, %v2098, 0
      %2125 = vmatprep.subr.bf16.mxu0 0
      %2126 = vmatpush1.bf16.msra.mxu0 %v2118
      %2127 = vmatprep.subr.bf16.mxu0 0
      %2128 = vmatpush1.bf16.msra.mxu0 %v2119
      %2129 = vmatprep.subr.bf16.mxu0 0
      %2130 = vmatpush1.bf16.msra.mxu0 0
      %2131 = vmatprep.subr.bf16.mxu0 0
      %2132 = vmatpush1.bf16.msra.mxu0 0
      %2133 = vmatprep.subr.bf16.mxu0 0
      %2134 = vmatpush1.bf16.msra.mxu0 0
      %2135 = vmatprep.subr.bf16.mxu0 0
      %2136 = vmatpush1.bf16.msra.mxu0 0
      %2137 = vmatprep.subr.bf16.mxu0 0
      %2138 = vmatpush1.bf16.msra.mxu0 0
      %2139 = vmatprep.subr.bf16.mxu0 0
      %2140 = vmatpush1.bf16.msra.mxu0 0
      %2141 = vmatprep.subr.bf16.mxu0 0
      %2142 = vmatpush1.bf16.msra.mxu0 0
      %2143 = vmatprep.subr.bf16.mxu0 0
      %2144 = vmatpush1.bf16.msra.mxu0 0
      %2145 = vmatprep.subr.bf16.mxu0 0
      %2146 = vmatpush1.bf16.msra.mxu0 0
      %2147 = vmatprep.subr.bf16.mxu0 0
      %2148 = vmatpush1.bf16.msra.mxu0 0
      %2149 = vmatprep.subr.bf16.mxu0 0
      %2150 = vmatpush1.bf16.msra.mxu0 0
      %2151 = vmatprep.subr.bf16.mxu0 0
      %2152 = vmatpush1.bf16.msra.mxu0 0
      %2153 = vmatprep.subr.bf16.mxu0 0
      %2154 = vmatpush1.bf16.msra.mxu0 0
      %2155 = vmatprep.subr.bf16.mxu0 0
      %2156 = vmatpush1.bf16.msra.mxu0 0
      %2157 = vmatprep.mubr.bf16.mxu0 0
      %2158 = vmatmul.mubr.bf16.gmra.mrb[0].mxu0 %v2123
      %v2159 = vpop.f32.mrb[0].mxu0
      %v2160 = vadd.f32 %v2108, %v2159
      %v2161 = vpop.f32.mrb[0].mxu0
      %v2162 = vpop.f32.mrb[0].mxu0
      %v2163 = vpop.f32.mrb[0].mxu0
      %2164 = vdwg.mxu0
      %v2165 = vpack.c.bf16 %v2160, %v2160
      %v2166 = vld [vmem:[%s15] sm:$0xf]
      %v2167 = vld [vmem:[%s15 + $0x4] sm:$0xf]
      %v2168 = vld [vmem:[%s15 + $0x8] sm:$0xf]
      %v2169 = vld [vmem:[%s15 + $0xc] sm:$0xf]
      %v2170 = vld [vmem:[%s17] sm:$0x1]
      %v2172 = vlaneseq
      %v2173 = vshrl.u32 %v2172, 7
      %v2174 = vsub.s32 0, %v2173
      %v2175 = vrot.slane %v2170, %v2174
      %v2181 = vunpack.c.l.b16 %v2166
      %v2182 = vunpack.c.l.b16 %v2167
      %v2183 = vunpack.c.l.b16 %v2168
      %v2184 = vunpack.c.l.b16 %v2169
      %v2185 = vpack.c.b16 %v2182, %v2181
      %v2186 = vpack.c.b16 %v2184, %v2183
      %v2190 = vsel %vm1124, %v2165, 0
      %2192 = vmatprep.subr.bf16.mxu0 0
      %2193 = vmatpush1.bf16.msra.mxu0 %v2185
      %2194 = vmatprep.subr.bf16.mxu0 0
      %2195 = vmatpush1.bf16.msra.mxu0 %v2186
      %2196 = vmatprep.subr.bf16.mxu0 0
      %2197 = vmatpush1.bf16.msra.mxu0 0
      %2198 = vmatprep.subr.bf16.mxu0 0
      %2199 = vmatpush1.bf16.msra.mxu0 0
      %2200 = vmatprep.subr.bf16.mxu0 0
      %2201 = vmatpush1.bf16.msra.mxu0 0
      %2202 = vmatprep.subr.bf16.mxu0 0
      %2203 = vmatpush1.bf16.msra.mxu0 0
      %2204 = vmatprep.subr.bf16.mxu0 0
      %2205 = vmatpush1.bf16.msra.mxu0 0
      %2206 = vmatprep.subr.bf16.mxu0 0
      %2207 = vmatpush1.bf16.msra.mxu0 0
      %2208 = vmatprep.subr.bf16.mxu0 0
      %2209 = vmatpush1.bf16.msra.mxu0 0
      %2210 = vmatprep.subr.bf16.mxu0 0
      %2211 = vmatpush1.bf16.msra.mxu0 0
      %2212 = vmatprep.subr.bf16.mxu0 0
      %2213 = vmatpush1.bf16.msra.mxu0 0
      %2214 = vmatprep.subr.bf16.mxu0 0
      %2215 = vmatpush1.bf16.msra.mxu0 0
      %2216 = vmatprep.subr.bf16.mxu0 0
      %2217 = vmatpush1.bf16.msra.mxu0 0
      %2218 = vmatprep.subr.bf16.mxu0 0
      %2219 = vmatpush1.bf16.msra.mxu0 0
      %2220 = vmatprep.subr.bf16.mxu0 0
      %2221 = vmatpush1.bf16.msra.mxu0 0
      %2222 = vmatprep.subr.bf16.mxu0 0
      %2223 = vmatpush1.bf16.msra.mxu0 0
      %2224 = vmatprep.mubr.bf16.mxu0 0
      %2225 = vmatmul.mubr.bf16.gmra.mrb[0].mxu0 %v2190
      %v2226 = vpop.f32.mrb[0].mxu0
      %v2227 = vadd.f32 %v2175, %v2226
      %v2228 = vpop.f32.mrb[0].mxu0
      %v2229 = vpop.f32.mrb[0].mxu0
      %v2230 = vpop.f32.mrb[0].mxu0
      %2231 = vdwg.mxu0
      %v2232 = vtanh.pop %v2227
      %v2233 = vpack.c.bf16 %v2232, %v2232
      %v2234 = vld [vmem:[%s19] sm:$0xf]
      %v2235 = vld [vmem:[%s19 + $0x4] sm:$0xf]
      %v2236 = vld [vmem:[%s19 + $0x8] sm:$0xf]
      %v2237 = vld [vmem:[%s19 + $0xc] sm:$0xf]
      %v2238 = vld [vmem:[%s19 + $0x10] sm:$0xf]
      %v2239 = vld [vmem:[%s19 + $0x14] sm:$0xf]
      %v2240 = vld [vmem:[%s19 + $0x18] sm:$0xf]
      %v2241 = vld [vmem:[%s19 + $0x1c] sm:$0xf]
      %v2242 = vld [vmem:[%s19 + $0x20] sm:$0xf]
      %v2243 = vld [vmem:[%s19 + $0x24] sm:$0xf]
      %v2244 = vld [vmem:[%s19 + $0x28] sm:$0xf]
      %v2245 = vld [vmem:[%s19 + $0x2c] sm:$0xf]
      %v2246 = vld [vmem:[%s19 + $0x30] sm:$0xf]
      %v2247 = vld [vmem:[%s19 + $0x34] sm:$0xf]
      %v2248 = vld [vmem:[%s19 + $0x38] sm:$0xf]
      %v2249 = vld [vmem:[%s19 + $0x3c] sm:$0xf]
      %v2250 = vld [vmem:[#allocation2] sm:$0x1]
      %v2252 = vlaneseq
      %v2253 = vshrl.u32 %v2252, 7
      %v2254 = vsub.s32 0, %v2253
      %v2255 = vrot.slane %v2250, %v2254
      %v2273 = vunpack.c.l.b16 %v2234
      %v2274 = vunpack.c.l.b16 %v2235
      %v2275 = vunpack.c.l.b16 %v2236
      %v2276 = vunpack.c.l.b16 %v2237
      %v2277 = vunpack.c.l.b16 %v2238
      %v2278 = vunpack.c.l.b16 %v2239
      %v2279 = vunpack.c.l.b16 %v2240
      %v2280 = vunpack.c.l.b16 %v2241
      %v2281 = vunpack.c.l.b16 %v2242
      %v2282 = vunpack.c.l.b16 %v2243
      %v2283 = vunpack.c.l.b16 %v2244
      %v2284 = vunpack.c.l.b16 %v2245
      %v2285 = vunpack.c.l.b16 %v2246
      %v2286 = vunpack.c.l.b16 %v2247
      %v2287 = vunpack.c.l.b16 %v2248
      %v2288 = vunpack.c.l.b16 %v2249
      %v2289 = vpack.c.b16 %v2274, %v2273
      %v2290 = vpack.c.b16 %v2276, %v2275
      %v2291 = vpack.c.b16 %v2278, %v2277
      %v2292 = vpack.c.b16 %v2280, %v2279
      %v2293 = vpack.c.b16 %v2282, %v2281
      %v2294 = vpack.c.b16 %v2284, %v2283
      %v2295 = vpack.c.b16 %v2286, %v2285
      %v2296 = vpack.c.b16 %v2288, %v2287
      %2305 = vmatprep.subr.bf16.mxu0 0
      %2306 = vmatpush1.bf16.msra.mxu0 %v2289
      %2307 = vmatprep.subr.bf16.mxu0 0
      %2308 = vmatpush1.bf16.msra.mxu0 %v2290
      %2309 = vmatprep.subr.bf16.mxu0 0
      %2310 = vmatpush1.bf16.msra.mxu0 %v2291
      %2311 = vmatprep.subr.bf16.mxu0 0
      %2312 = vmatpush1.bf16.msra.mxu0 %v2292
      %2313 = vmatprep.subr.bf16.mxu0 0
      %2314 = vmatpush1.bf16.msra.mxu0 %v2293
      %2315 = vmatprep.subr.bf16.mxu0 0
      %2316 = vmatpush1.bf16.msra.mxu0 %v2294
      %2317 = vmatprep.subr.bf16.mxu0 0
      %2318 = vmatpush1.bf16.msra.mxu0 %v2295
      %2319 = vmatprep.subr.bf16.mxu0 0
      %2320 = vmatpush1.bf16.msra.mxu0 %v2296
      %2321 = vmatprep.subr.bf16.mxu0 0
      %2322 = vmatpush1.bf16.msra.mxu0 0
      %2323 = vmatprep.subr.bf16.mxu0 0
      %2324 = vmatpush1.bf16.msra.mxu0 0
      %2325 = vmatprep.subr.bf16.mxu0 0
      %2326 = vmatpush1.bf16.msra.mxu0 0
      %2327 = vmatprep.subr.bf16.mxu0 0
      %2328 = vmatpush1.bf16.msra.mxu0 0
      %2329 = vmatprep.subr.bf16.mxu0 0
      %2330 = vmatpush1.bf16.msra.mxu0 0
      %2331 = vmatprep.subr.bf16.mxu0 0
      %2332 = vmatpush1.bf16.msra.mxu0 0
      %2333 = vmatprep.subr.bf16.mxu0 0
      %2334 = vmatpush1.bf16.msra.mxu0 0
      %2335 = vmatprep.subr.bf16.mxu0 0
      %2336 = vmatpush1.bf16.msra.mxu0 0
      %2337 = vmatprep.mubr.bf16.mxu0 0
      %2338 = vmatmul.mubr.bf16.gmra.mrb[0].mxu0 %v2233
      %v2339 = vpop.f32.mrb[0].mxu0
      %v2340 = vadd.f32 %v2255, %v2339
      %v2341 = vpop.f32.mrb[0].mxu0
      %v2342 = vpop.f32.mrb[0].mxu0
      %v2343 = vpop.f32.mrb[0].mxu0
      %2344 = vdwg.mxu0
      %v2345 = vld [vmem:[%s1095] sm:$0xff]
      %v2346 = vadd.f32 %v2340, %v2345
      %vm2347 = vcmask 7168
      %v2348 = vsel %vm2347, %v2346, -inf
      %v2349 = vrot.slane %v2348, 4
      %v2350 = vmax.f32 %v2348, %v2349
      %v2351 = vrot.slane %v2350, 2
      %v2352 = vmax.f32 %v2350, %v2351
      %v2353 = vrot.slane %v2352, 1
      %v2354 = vmax.f32 %v2352, %v2353
      %v2355 = vsub.f32 %v2346, %v2354
      %v2356 = vmul.f32 %v2355, 1.442695
      %v2357 = vpow.pop %v2356
      %v2358 = vsel %vm2347, %v2357, 0.0
      %v2359 = vrot.slane %v2358, 4
      %v2360 = vadd.f32 %v2358, %v2359
      %v2361 = vrot.slane %v2360, 2
      %v2362 = vadd.f32 %v2360, %v2361
      %v2363 = vrot.slane %v2362, 1
      %v2364 = vadd.f32 %v2362, %v2363
      %v2365 = vrcp.pop %v2364
      %v2366 = vmul.f32 %v2357, %v2365
      %2368 = vset.pattern.permute.xlu0 0
      %2369 = vperm.xlu0 %2368, %v2366
      %v2370 = vpop.permute.xlu0 %2369
      %v2372 = vmul.f32 %v2370, %v2160
      %v2373 = vsel %vm1124, %v2372, 0.0
      %v2374 = vrot.slane %v2373, 4
      %v2375 = vadd.f32 %v2373, %v2374
      %v2376 = vrot.slane %v2375, 2
      %v2377 = vadd.f32 %v2375, %v2376
      %v2378 = vrot.slane %v2377, 1
      %v2379 = vadd.f32 %v2377, %v2378
      %v2380 = vpack.c.bf16 %v2379, %v2379
      %v2381 = vld [vmem:[%s23] sm:$0xff]
      %v2382 = vld [vmem:[%s23 + $0x8] sm:$0xff]
      %v2383 = vld [vmem:[%s23 + $0x10] sm:$0xff]
      %v2384 = vld [vmem:[%s23 + $0x18] sm:$0xff]
      %v2385 = vld [vmem:[%s25] sm:$0x3]
      %v2390 = vunpack.c.l.b16 %v2381
      %v2391 = vunpack.c.h.b16 %v2381
      %v2392 = vunpack.c.l.b16 %v2382
      %v2393 = vunpack.c.h.b16 %v2382
      %v2394 = vunpack.c.l.b16 %v2383
      %v2395 = vunpack.c.h.b16 %v2383
      %v2396 = vunpack.c.l.b16 %v2384
      %v2397 = vunpack.c.h.b16 %v2384
      %v2398 = vpack.c.b16 %v2392, %v2390
      %v2399 = vpack.c.b16 %v2393, %v2391
      %v2400 = vpack.c.b16 %v2396, %v2394
      %v2401 = vpack.c.b16 %v2397, %v2395
      %v2407 = vlaneseq
      %v2408 = vshrl.u32 %v2407, 7
      %v2409 = vsub.s32 0, %v2408
      %v2410 = vrot.slane %v2385, %v2409
      %v2411 = vlaneseq
      %v2412 = vshrl.u32 %v2411, 7
      %v2413 = vsub.s32 1, %v2412
      %v2414 = vrot.slane %v2385, %v2413
      %v2418 = vsel %vm1124, %v2380, 0
      %2420 = vmatprep.subr.bf16.mxu0 %v2399
      %2421 = vmatpush1.bf16.msra.mxu0 %v2398
      %2422 = vmatprep.subr.bf16.mxu0 %v2401
      %2423 = vmatpush1.bf16.msra.mxu0 %v2400
      %2424 = vmatprep.subr.bf16.mxu0 0
      %2425 = vmatpush1.bf16.msra.mxu0 0
      %2426 = vmatprep.subr.bf16.mxu0 0
      %2427 = vmatpush1.bf16.msra.mxu0 0
      %2428 = vmatprep.subr.bf16.mxu0 0
      %2429 = vmatpush1.bf16.msra.mxu0 0
      %2430 = vmatprep.subr.bf16.mxu0 0
      %2431 = vmatpush1.bf16.msra.mxu0 0
      %2432 = vmatprep.subr.bf16.mxu0 0
      %2433 = vmatpush1.bf16.msra.mxu0 0
      %2434 = vmatprep.subr.bf16.mxu0 0
      %2435 = vmatpush1.bf16.msra.mxu0 0
      %2436 = vmatprep.subr.bf16.mxu0 0
      %2437 = vmatpush1.bf16.msra.mxu0 0
      %2438 = vmatprep.subr.bf16.mxu0 0
      %2439 = vmatpush1.bf16.msra.mxu0 0
      %2440 = vmatprep.subr.bf16.mxu0 0
      %2441 = vmatpush1.bf16.msra.mxu0 0
      %2442 = vmatprep.subr.bf16.mxu0 0
      %2443 = vmatpush1.bf16.msra.mxu0 0
      %2444 = vmatprep.subr.bf16.mxu0 0
      %2445 = vmatpush1.bf16.msra.mxu0 0
      %2446 = vmatprep.subr.bf16.mxu0 0
      %2447 = vmatpush1.bf16.msra.mxu0 0
      %2448 = vmatprep.subr.bf16.mxu0 0
      %2449 = vmatpush1.bf16.msra.mxu0 0
      %2450 = vmatprep.subr.bf16.mxu0 0
      %2451 = vmatpush1.bf16.msra.mxu0 0
      %2452 = vmatprep.mubr.bf16.mxu0 0
      %2453 = vmatmul.mubr.bf16.gmra.mrb[0].mxu0 %v2418
      %v2454 = vpop.f32.mrb[0].mxu0
      %v2455 = vadd.f32 %v2410, %v2454
      %v2456 = vpop.f32.mrb[0].mxu0
      %v2457 = vadd.f32 %v2414, %v2456
      %v2458 = vpop.f32.mrb[0].mxu0
      %v2459 = vpop.f32.mrb[0].mxu0
      %2460 = vdwg.mxu0
      %v2461 = vmax.f32 %v2455, 0.0
      %v2462 = vmax.f32 %v2457, 0.0
      %v2463 = vpack.c.bf16 %v2461, %v2461
      %v2464 = vpack.c.bf16 %v2462, %v2462
      %v2465 = vld [vmem:[%s27] sm:$0xf]
      %v2466 = vld [vmem:[%s27 + $0x4] sm:$0xf]
      %v2467 = vld [vmem:[%s27 + $0x8] sm:$0xf]
      %v2468 = vld [vmem:[%s27 + $0xc] sm:$0xf]
      %v2469 = vld [vmem:[%s27 + $0x10] sm:$0xf]
      %v2470 = vld [vmem:[%s27 + $0x14] sm:$0xf]
      %v2471 = vld [vmem:[%s27 + $0x18] sm:$0xf]
      %v2472 = vld [vmem:[%s27 + $0x1c] sm:$0xf]
      %v2473 = vld [vmem:[%s27 + $0x20] sm:$0xf]
      %v2474 = vld [vmem:[%s27 + $0x24] sm:$0xf]
      %v2475 = vld [vmem:[%s27 + $0x28] sm:$0xf]
      %v2476 = vld [vmem:[%s27 + $0x2c] sm:$0xf]
      %v2477 = vld [vmem:[%s27 + $0x30] sm:$0xf]
      %v2478 = vld [vmem:[%s27 + $0x34] sm:$0xf]
      %v2479 = vld [vmem:[%s27 + $0x38] sm:$0xf]
      %v2480 = vld [vmem:[%s27 + $0x3c] sm:$0xf]
      %v2481 = vld [vmem:[%s27 + $0x40] sm:$0xf]
      %v2482 = vld [vmem:[%s27 + $0x44] sm:$0xf]
      %v2483 = vld [vmem:[%s27 + $0x48] sm:$0xf]
      %v2484 = vld [vmem:[%s27 + $0x4c] sm:$0xf]
      %v2485 = vld [vmem:[%s27 + $0x50] sm:$0xf]
      %v2486 = vld [vmem:[%s27 + $0x54] sm:$0xf]
      %v2487 = vld [vmem:[%s27 + $0x58] sm:$0xf]
      %v2488 = vld [vmem:[%s27 + $0x5c] sm:$0xf]
      %v2489 = vld [vmem:[%s27 + $0x60] sm:$0xf]
      %v2490 = vld [vmem:[%s27 + $0x64] sm:$0xf]
      %v2491 = vld [vmem:[%s27 + $0x68] sm:$0xf]
      %v2492 = vld [vmem:[%s27 + $0x6c] sm:$0xf]
      %v2493 = vld [vmem:[%s27 + $0x70] sm:$0xf]
      %v2494 = vld [vmem:[%s27 + $0x74] sm:$0xf]
      %v2495 = vld [vmem:[%s27 + $0x78] sm:$0xf]
      %v2496 = vld [vmem:[%s27 + $0x7c] sm:$0xf]
      %v2497 = vld [vmem:[%s29] sm:$0x1]
      %v2530 = vunpack.c.l.b16 %v2465
      %v2531 = vunpack.c.l.b16 %v2466
      %v2532 = vunpack.c.l.b16 %v2467
      %v2533 = vunpack.c.l.b16 %v2468
      %v2534 = vunpack.c.l.b16 %v2469
      %v2535 = vunpack.c.l.b16 %v2470
      %v2536 = vunpack.c.l.b16 %v2471
      %v2537 = vunpack.c.l.b16 %v2472
      %v2538 = vunpack.c.l.b16 %v2473
      %v2539 = vunpack.c.l.b16 %v2474
      %v2540 = vunpack.c.l.b16 %v2475
      %v2541 = vunpack.c.l.b16 %v2476
      %v2542 = vunpack.c.l.b16 %v2477
      %v2543 = vunpack.c.l.b16 %v2478
      %v2544 = vunpack.c.l.b16 %v2479
      %v2545 = vunpack.c.l.b16 %v2480
      %v2546 = vunpack.c.l.b16 %v2481
      %v2547 = vunpack.c.l.b16 %v2482
      %v2548 = vunpack.c.l.b16 %v2483
      %v2549 = vunpack.c.l.b16 %v2484
      %v2550 = vunpack.c.l.b16 %v2485
      %v2551 = vunpack.c.l.b16 %v2486
      %v2552 = vunpack.c.l.b16 %v2487
      %v2553 = vunpack.c.l.b16 %v2488
      %v2554 = vunpack.c.l.b16 %v2489
      %v2555 = vunpack.c.l.b16 %v2490
      %v2556 = vunpack.c.l.b16 %v2491
      %v2557 = vunpack.c.l.b16 %v2492
      %v2558 = vunpack.c.l.b16 %v2493
      %v2559 = vunpack.c.l.b16 %v2494
      %v2560 = vunpack.c.l.b16 %v2495
      %v2561 = vunpack.c.l.b16 %v2496
      %v2562 = vpack.c.b16 %v2531, %v2530
      %v2563 = vpack.c.b16 %v2533, %v2532
      %v2564 = vpack.c.b16 %v2535, %v2534
      %v2565 = vpack.c.b16 %v2537, %v2536
      %v2566 = vpack.c.b16 %v2539, %v2538
      %v2567 = vpack.c.b16 %v2541, %v2540
      %v2568 = vpack.c.b16 %v2543, %v2542
      %v2569 = vpack.c.b16 %v2545, %v2544
      %v2570 = vpack.c.b16 %v2547, %v2546
      %v2571 = vpack.c.b16 %v2549, %v2548
      %v2572 = vpack.c.b16 %v2551, %v2550
      %v2573 = vpack.c.b16 %v2553, %v2552
      %v2574 = vpack.c.b16 %v2555, %v2554
      %v2575 = vpack.c.b16 %v2557, %v2556
      %v2576 = vpack.c.b16 %v2559, %v2558
      %v2577 = vpack.c.b16 %v2561, %v2560
      %2594 = vmatprep.subr.bf16.mxu0 0
      %2595 = vmatpush1.bf16.msra.mxu0 %v2562
      %2596 = vmatprep.subr.bf16.mxu0 0
      %2597 = vmatpush1.bf16.msra.mxu0 %v2563
      %2598 = vmatprep.subr.bf16.mxu0 0
      %2599 = vmatpush1.bf16.msra.mxu0 %v2564
      %2600 = vmatprep.subr.bf16.mxu0 0
      %2601 = vmatpush1.bf16.msra.mxu0 %v2565
      %2602 = vmatprep.subr.bf16.mxu0 0
      %2603 = vmatpush1.bf16.msra.mxu0 %v2566
      %2604 = vmatprep.subr.bf16.mxu0 0
      %2605 = vmatpush1.bf16.msra.mxu0 %v2567
      %2606 = vmatprep.subr.bf16.mxu0 0
      %2607 = vmatpush1.bf16.msra.mxu0 %v2568
      %2608 = vmatprep.subr.bf16.mxu0 0
      %2609 = vmatpush1.bf16.msra.mxu0 %v2569
      %2610 = vmatprep.subr.bf16.mxu0 0
      %2611 = vmatpush1.bf16.msra.mxu0 %v2570
      %2612 = vmatprep.subr.bf16.mxu0 0
      %2613 = vmatpush1.bf16.msra.mxu0 %v2571
      %2614 = vmatprep.subr.bf16.mxu0 0
      %2615 = vmatpush1.bf16.msra.mxu0 %v2572
      %2616 = vmatprep.subr.bf16.mxu0 0
      %2617 = vmatpush1.bf16.msra.mxu0 %v2573
      %2618 = vmatprep.subr.bf16.mxu0 0
      %2619 = vmatpush1.bf16.msra.mxu0 %v2574
      %2620 = vmatprep.subr.bf16.mxu0 0
      %2621 = vmatpush1.bf16.msra.mxu0 %v2575
      %2622 = vmatprep.subr.bf16.mxu0 0
      %2623 = vmatpush1.bf16.msra.mxu0 %v2576
      %2624 = vmatprep.subr.bf16.mxu0 0
      %2625 = vmatpush1.bf16.msra.mxu0 %v2577
      %2626 = vmatprep.mubr.bf16.mxu0 %v2464
      %2627 = vmatmul.mubr.bf16.gmra.mrb[0].mxu0 %v2463
      %v2628 = vpop.f32.mrb[0].mxu0
      %v2629 = vadd.f32 %v2497, %v2628
      %v2630 = vpop.f32.mrb[0].mxu0
      %v2631 = vpop.f32.mrb[0].mxu0
      %v2632 = vpop.f32.mrb[0].mxu0
      %2633 = vdwg.mxu0
      %v2634 = vmax.f32 %v2629, 0.0
      %v2635 = vpack.c.bf16 %v2634, %v2634
      %v2636 = vld [vmem:[%s31] sm:$0xf]
      %v2637 = vld [vmem:[%s31 + $0x4] sm:$0xf]
      %v2638 = vld [vmem:[%s31 + $0x8] sm:$0xf]
      %v2639 = vld [vmem:[%s31 + $0xc] sm:$0xf]
      %v2640 = vld [vmem:[%s31 + $0x10] sm:$0xf]
      %v2641 = vld [vmem:[%s31 + $0x14] sm:$0xf]
      %v2642 = vld [vmem:[%s31 + $0x18] sm:$0xf]
      %v2643 = vld [vmem:[%s31 + $0x1c] sm:$0xf]
      %v2644 = vld [vmem:[%s31 + $0x20] sm:$0xf]
      %v2645 = vld [vmem:[%s31 + $0x24] sm:$0xf]
      %v2646 = vld [vmem:[%s31 + $0x28] sm:$0xf]
      %v2647 = vld [vmem:[%s31 + $0x2c] sm:$0xf]
      %v2648 = vld [vmem:[%s31 + $0x30] sm:$0xf]
      %v2649 = vld [vmem:[%s31 + $0x34] sm:$0xf]
      %v2650 = vld [vmem:[%s31 + $0x38] sm:$0xf]
      %v2651 = vld [vmem:[%s31 + $0x3c] sm:$0xf]
      %v2652 = vld [vmem:[%s33] sm:$0x1]
      %v2669 = vunpack.c.l.b16 %v2636
      %v2670 = vunpack.c.l.b16 %v2637
      %v2671 = vunpack.c.l.b16 %v2638
      %v2672 = vunpack.c.l.b16 %v2639
      %v2673 = vunpack.c.l.b16 %v2640
      %v2674 = vunpack.c.l.b16 %v2641
      %v2675 = vunpack.c.l.b16 %v2642
      %v2676 = vunpack.c.l.b16 %v2643
      %v2677 = vunpack.c.l.b16 %v2644
      %v2678 = vunpack.c.l.b16 %v2645
      %v2679 = vunpack.c.l.b16 %v2646
      %v2680 = vunpack.c.l.b16 %v2647
      %v2681 = vunpack.c.l.b16 %v2648
      %v2682 = vunpack.c.l.b16 %v2649
      %v2683 = vunpack.c.l.b16 %v2650
      %v2684 = vunpack.c.l.b16 %v2651
      %v2685 = vpack.c.b16 %v2670, %v2669
      %v2686 = vpack.c.b16 %v2672, %v2671
      %v2687 = vpack.c.b16 %v2674, %v2673
      %v2688 = vpack.c.b16 %v2676, %v2675
      %v2689 = vpack.c.b16 %v2678, %v2677
      %v2690 = vpack.c.b16 %v2680, %v2679
      %v2691 = vpack.c.b16 %v2682, %v2681
      %v2692 = vpack.c.b16 %v2684, %v2683
      %2701 = vmatprep.subr.bf16.mxu0 0
      %2702 = vmatpush1.bf16.msra.mxu0 %v2685
      %2703 = vmatprep.subr.bf16.mxu0 0
      %2704 = vmatpush1.bf16.msra.mxu0 %v2686
      %2705 = vmatprep.subr.bf16.mxu0 0
      %2706 = vmatpush1.bf16.msra.mxu0 %v2687
      %2707 = vmatprep.subr.bf16.mxu0 0
      %2708 = vmatpush1.bf16.msra.mxu0 %v2688
      %2709 = vmatprep.subr.bf16.mxu0 0
      %2710 = vmatpush1.bf16.msra.mxu0 %v2689
      %2711 = vmatprep.subr.bf16.mxu0 0
      %2712 = vmatpush1.bf16.msra.mxu0 %v2690
      %2713 = vmatprep.subr.bf16.mxu0 0
      %2714 = vmatpush1.bf16.msra.mxu0 %v2691
      %2715 = vmatprep.subr.bf16.mxu0 0
      %2716 = vmatpush1.bf16.msra.mxu0 %v2692
      %2717 = vmatprep.subr.bf16.mxu0 0
      %2718 = vmatpush1.bf16.msra.mxu0 0
      %2719 = vmatprep.subr.bf16.mxu0 0
      %2720 = vmatpush1.bf16.msra.mxu0 0
      %2721 = vmatprep.subr.bf16.mxu0 0
      %2722 = vmatpush1.bf16.msra.mxu0 0
      %2723 = vmatprep.subr.bf16.mxu0 0
      %2724 = vmatpush1.bf16.msra.mxu0 0
      %2725 = vmatprep.subr.bf16.mxu0 0
      %2726 = vmatpush1.bf16.msra.mxu0 0
      %2727 = vmatprep.subr.bf16.mxu0 0
      %2728 = vmatpush1.bf16.msra.mxu0 0
      %2729 = vmatprep.subr.bf16.mxu0 0
      %2730 = vmatpush1.bf16.msra.mxu0 0
      %2731 = vmatprep.subr.bf16.mxu0 0
      %2732 = vmatpush1.bf16.msra.mxu0 0
      %2733 = vmatprep.mubr.bf16.mxu0 0
      %2734 = vmatmul.mubr.bf16.gmra.mrb[0].mxu0 %v2635
      %v2735 = vpop.f32.mrb[0].mxu0
      %v2736 = vadd.f32 %v2652, %v2735
      %v2737 = vpop.f32.mrb[0].mxu0
      %v2738 = vpop.f32.mrb[0].mxu0
      %v2739 = vpop.f32.mrb[0].mxu0
      %2740 = vdwg.mxu0
      %v2741 = vld [vmem:[%s35] sm:$0xf]
      %v2742 = vld [vmem:[%s35 + $0x4] sm:$0xf]
      %v2743 = vld [vmem:[%s35 + $0x8] sm:$0xf]
      %v2744 = vld [vmem:[%s35 + $0xc] sm:$0xf]
      %v2745 = vld [vmem:[%s37] sm:$0x1]
      %v2750 = vunpack.c.l.b16 %v2741
      %v2751 = vunpack.c.l.b16 %v2742
      %v2752 = vunpack.c.l.b16 %v2743
      %v2753 = vunpack.c.l.b16 %v2744
      %v2754 = vpack.c.b16 %v2751, %v2750
      %v2755 = vpack.c.b16 %v2753, %v2752
      %2758 = vmatprep.subr.bf16.mxu0 0
      %2759 = vmatpush1.bf16.msra.mxu0 %v2754
      %2760 = vmatprep.subr.bf16.mxu0 0
      %2761 = vmatpush1.bf16.msra.mxu0 %v2755
      %2762 = vmatprep.subr.bf16.mxu0 0
      %2763 = vmatpush1.bf16.msra.mxu0 0
      %2764 = vmatprep.subr.bf16.mxu0 0
      %2765 = vmatpush1.bf16.msra.mxu0 0
      %2766 = vmatprep.subr.bf16.mxu0 0
      %2767 = vmatpush1.bf16.msra.mxu0 0
      %2768 = vmatprep.subr.bf16.mxu0 0
      %2769 = vmatpush1.bf16.msra.mxu0 0
      %2770 = vmatprep.subr.bf16.mxu0 0
      %2771 = vmatpush1.bf16.msra.mxu0 0
      %2772 = vmatprep.subr.bf16.mxu0 0
      %2773 = vmatpush1.bf16.msra.mxu0 0
      %2774 = vmatprep.subr.bf16.mxu0 0
      %2775 = vmatpush1.bf16.msra.mxu0 0
      %2776 = vmatprep.subr.bf16.mxu0 0
      %2777 = vmatpush1.bf16.msra.mxu0 0
      %2778 = vmatprep.subr.bf16.mxu0 0
      %2779 = vmatpush1.bf16.msra.mxu0 0
      %2780 = vmatprep.subr.bf16.mxu0 0
      %2781 = vmatpush1.bf16.msra.mxu0 0
      %2782 = vmatprep.subr.bf16.mxu0 0
      %2783 = vmatpush1.bf16.msra.mxu0 0
      %2784 = vmatprep.subr.bf16.mxu0 0
      %2785 = vmatpush1.bf16.msra.mxu0 0
      %2786 = vmatprep.subr.bf16.mxu0 0
      %2787 = vmatpush1.bf16.msra.mxu0 0
      %2788 = vmatprep.subr.bf16.mxu0 0
      %2789 = vmatpush1.bf16.msra.mxu0 0
      %2790 = vmatprep.mubr.bf16.mxu0 0
      %2791 = vmatmul.mubr.bf16.gmra.mrb[0].mxu0 %v2190
      %v2792 = vpop.f32.mrb[0].mxu0
      %v2793 = vadd.f32 %v2745, %v2792
      %v2794 = vpop.f32.mrb[0].mxu0
      %v2795 = vpop.f32.mrb[0].mxu0
      %v2796 = vpop.f32.mrb[0].mxu0
      %2797 = vdwg.mxu0
      %v2798 = vmax.f32 %v2793, 0.0
      %v2799 = vpack.c.bf16 %v2798, %v2798
      %v2800 = vld [vmem:[%s39] sm:$0xf]
      %v2801 = vld [vmem:[%s39 + $0x4] sm:$0xf]
      %v2802 = vld [vmem:[%s39 + $0x8] sm:$0xf]
      %v2803 = vld [vmem:[%s39 + $0xc] sm:$0xf]
      %v2804 = vld [vmem:[%s39 + $0x10] sm:$0xf]
      %v2805 = vld [vmem:[%s39 + $0x14] sm:$0xf]
      %v2806 = vld [vmem:[%s39 + $0x18] sm:$0xf]
      %v2807 = vld [vmem:[%s39 + $0x1c] sm:$0xf]
      %v2808 = vld [vmem:[%s39 + $0x20] sm:$0xf]
      %v2809 = vld [vmem:[%s39 + $0x24] sm:$0xf]
      %v2810 = vld [vmem:[%s39 + $0x28] sm:$0xf]
      %v2811 = vld [vmem:[%s39 + $0x2c] sm:$0xf]
      %v2812 = vld [vmem:[%s39 + $0x30] sm:$0xf]
      %v2813 = vld [vmem:[%s39 + $0x34] sm:$0xf]
      %v2814 = vld [vmem:[%s39 + $0x38] sm:$0xf]
      %v2815 = vld [vmem:[%s39 + $0x3c] sm:$0xf]
      %v2816 = vld [vmem:[%s41] sm:$0x1]
      %v2833 = vunpack.c.l.b16 %v2800
      %v2834 = vunpack.c.l.b16 %v2801
      %v2835 = vunpack.c.l.b16 %v2802
      %v2836 = vunpack.c.l.b16 %v2803
      %v2837 = vunpack.c.l.b16 %v2804
      %v2838 = vunpack.c.l.b16 %v2805
      %v2839 = vunpack.c.l.b16 %v2806
      %v2840 = vunpack.c.l.b16 %v2807
      %v2841 = vunpack.c.l.b16 %v2808
      %v2842 = vunpack.c.l.b16 %v2809
      %v2843 = vunpack.c.l.b16 %v2810
      %v2844 = vunpack.c.l.b16 %v2811
      %v2845 = vunpack.c.l.b16 %v2812
      %v2846 = vunpack.c.l.b16 %v2813
      %v2847 = vunpack.c.l.b16 %v2814
      %v2848 = vunpack.c.l.b16 %v2815
      %v2849 = vpack.c.b16 %v2834, %v2833
      %v2850 = vpack.c.b16 %v2836, %v2835
      %v2851 = vpack.c.b16 %v2838, %v2837
      %v2852 = vpack.c.b16 %v2840, %v2839
      %v2853 = vpack.c.b16 %v2842, %v2841
      %v2854 = vpack.c.b16 %v2844, %v2843
      %v2855 = vpack.c.b16 %v2846, %v2845
      %v2856 = vpack.c.b16 %v2848, %v2847
      %2865 = vmatprep.subr.bf16.mxu0 0
      %2866 = vmatpush1.bf16.msra.mxu0 %v2849
      %2867 = vmatprep.subr.bf16.mxu0 0
      %2868 = vmatpush1.bf16.msra.mxu0 %v2850
      %2869 = vmatprep.subr.bf16.mxu0 0
      %2870 = vmatpush1.bf16.msra.mxu0 %v2851
      %2871 = vmatprep.subr.bf16.mxu0 0
      %2872 = vmatpush1.bf16.msra.mxu0 %v2852
      %2873 = vmatprep.subr.bf16.mxu0 0
      %2874 = vmatpush1.bf16.msra.mxu0 %v2853
      %2875 = vmatprep.subr.bf16.mxu0 0
      %2876 = vmatpush1.bf16.msra.mxu0 %v2854
      %2877 = vmatprep.subr.bf16.mxu0 0
      %2878 = vmatpush1.bf16.msra.mxu0 %v2855
      %2879 = vmatprep.subr.bf16.mxu0 0
      %2880 = vmatpush1.bf16.msra.mxu0 %v2856
      %2881 = vmatprep.subr.bf16.mxu0 0
      %2882 = vmatpush1.bf16.msra.mxu0 0
      %2883 = vmatprep.subr.bf16.mxu0 0
      %2884 = vmatpush1.bf16.msra.mxu0 0
      %2885 = vmatprep.subr.bf16.mxu0 0
      %2886 = vmatpush1.bf16.msra.mxu0 0
      %2887 = vmatprep.subr.bf16.mxu0 0
      %2888 = vmatpush1.bf16.msra.mxu0 0
      %2889 = vmatprep.subr.bf16.mxu0 0
      %2890 = vmatpush1.bf16.msra.mxu0 0
      %2891 = vmatprep.subr.bf16.mxu0 0
      %2892 = vmatpush1.bf16.msra.mxu0 0
      %2893 = vmatprep.subr.bf16.mxu0 0
      %2894 = vmatpush1.bf16.msra.mxu0 0
      %2895 = vmatprep.subr.bf16.mxu0 0
      %2896 = vmatpush1.bf16.msra.mxu0 0
      %2897 = vmatprep.mubr.bf16.mxu0 0
      %2898 = vmatmul.mubr.bf16.gmra.mrb[0].mxu0 %v2799
      %v2899 = vpop.f32.mrb[0].mxu0
      %v2900 = vadd.f32 %v2816, %v2899
      %v2901 = vpop.f32.mrb[0].mxu0
      %v2902 = vpop.f32.mrb[0].mxu0
      %v2903 = vpop.f32.mrb[0].mxu0
      %2904 = vdwg.mxu0
      %v2905 = vld [vmem:[%s43] sm:$0xf]
      %v2906 = vld [vmem:[%s43 + $0x4] sm:$0xf]
      %v2907 = vld [vmem:[%s43 + $0x8] sm:$0xf]
      %v2908 = vld [vmem:[%s43 + $0xc] sm:$0xf]
      %v2909 = vld [vmem:[%s45] sm:$0x1]
      %v2914 = vunpack.c.l.b16 %v2905
      %v2915 = vunpack.c.l.b16 %v2906
      %v2916 = vunpack.c.l.b16 %v2907
      %v2917 = vunpack.c.l.b16 %v2908
      %v2918 = vpack.c.b16 %v2915, %v2914
      %v2919 = vpack.c.b16 %v2917, %v2916
      %2922 = vmatprep.subr.bf16.mxu0 0
      %2923 = vmatpush1.bf16.msra.mxu0 %v2918
      %2924 = vmatprep.subr.bf16.mxu0 0
      %2925 = vmatpush1.bf16.msra.mxu0 %v2919
      %2926 = vmatprep.subr.bf16.mxu0 0
      %2927 = vmatpush1.bf16.msra.mxu0 0
      %2928 = vmatprep.subr.bf16.mxu0 0
      %2929 = vmatpush1.bf16.msra.mxu0 0
      %2930 = vmatprep.subr.bf16.mxu0 0
      %2931 = vmatpush1.bf16.msra.mxu0 0
      %2932 = vmatprep.subr.bf16.mxu0 0
      %2933 = vmatpush1.bf16.msra.mxu0 0
      %2934 = vmatprep.subr.bf16.mxu0 0
      %2935 = vmatpush1.bf16.msra.mxu0 0
      %2936 = vmatprep.subr.bf16.mxu0 0
      %2937 = vmatpush1.bf16.msra.mxu0 0
      %2938 = vmatprep.subr.bf16.mxu0 0
      %2939 = vmatpush1.bf16.msra.mxu0 0
      %2940 = vmatprep.subr.bf16.mxu0 0
      %2941 = vmatpush1.bf16.msra.mxu0 0
      %2942 = vmatprep.subr.bf16.mxu0 0
      %2943 = vmatpush1.bf16.msra.mxu0 0
      %2944 = vmatprep.subr.bf16.mxu0 0
      %2945 = vmatpush1.bf16.msra.mxu0 0
      %2946 = vmatprep.subr.bf16.mxu0 0
      %2947 = vmatpush1.bf16.msra.mxu0 0
      %2948 = vmatprep.subr.bf16.mxu0 0
      %2949 = vmatpush1.bf16.msra.mxu0 0
      %2950 = vmatprep.subr.bf16.mxu0 0
      %2951 = vmatpush1.bf16.msra.mxu0 0
      %2952 = vmatprep.subr.bf16.mxu0 0
      %2953 = vmatpush1.bf16.msra.mxu0 0
      %2954 = vmatprep.mubr.bf16.mxu0 0
      %2955 = vmatmul.mubr.bf16.gmra.mrb[0].mxu0 %v2418
      %v2956 = vpop.f32.mrb[0].mxu0
      %v2957 = vadd.f32 %v2909, %v2956
      %v2958 = vpop.f32.mrb[0].mxu0
      %v2959 = vpop.f32.mrb[0].mxu0
      %v2960 = vpop.f32.mrb[0].mxu0
      %2961 = vdwg.mxu0
      %v2962 = vmax.f32 %v2957, 0.0
      %v2963 = vpack.c.bf16 %v2962, %v2962
      %v2964 = vld [vmem:[%s47] sm:$0xf]
      %v2965 = vld [vmem:[%s47 + $0x4] sm:$0xf]
      %v2966 = vld [vmem:[%s47 + $0x8] sm:$0xf]
      %v2967 = vld [vmem:[%s47 + $0xc] sm:$0xf]
      %v2968 = vld [vmem:[%s47 + $0x10] sm:$0xf]
      %v2969 = vld [vmem:[%s47 + $0x14] sm:$0xf]
      %v2970 = vld [vmem:[%s47 + $0x18] sm:$0xf]
      %v2971 = vld [vmem:[%s47 + $0x1c] sm:$0xf]
      %v2972 = vld [vmem:[%s49] sm:$0x1]
      %v2981 = vunpack.c.l.b16 %v2964
      %v2982 = vunpack.c.l.b16 %v2965
      %v2983 = vunpack.c.l.b16 %v2966
      %v2984 = vunpack.c.l.b16 %v2967
      %v2985 = vunpack.c.l.b16 %v2968
      %v2986 = vunpack.c.l.b16 %v2969
      %v2987 = vunpack.c.l.b16 %v2970
      %v2988 = vunpack.c.l.b16 %v2971
      %v2989 = vpack.c.b16 %v2982, %v2981
      %v2990 = vpack.c.b16 %v2984, %v2983
      %v2991 = vpack.c.b16 %v2986, %v2985
      %v2992 = vpack.c.b16 %v2988, %v2987
      %vm2997 = vcmask 523264
      %v2999 = vsel %vm2997, %v2963, 0
      %3001 = vmatprep.subr.bf16.mxu0 0
      %3002 = vmatpush1.bf16.msra.mxu0 %v2989
      %3003 = vmatprep.subr.bf16.mxu0 0
      %3004 = vmatpush1.bf16.msra.mxu0 %v2990
      %3005 = vmatprep.subr.bf16.mxu0 0
      %3006 = vmatpush1.bf16.msra.mxu0 %v2991
      %3007 = vmatprep.subr.bf16.mxu0 0
      %3008 = vmatpush1.bf16.msra.mxu0 %v2992
      %3009 = vmatprep.subr.bf16.mxu0 0
      %3010 = vmatpush1.bf16.msra.mxu0 0
      %3011 = vmatprep.subr.bf16.mxu0 0
      %3012 = vmatpush1.bf16.msra.mxu0 0
      %3013 = vmatprep.subr.bf16.mxu0 0
      %3014 = vmatpush1.bf16.msra.mxu0 0
      %3015 = vmatprep.subr.bf16.mxu0 0
      %3016 = vmatpush1.bf16.msra.mxu0 0
      %3017 = vmatprep.subr.bf16.mxu0 0
      %3018 = vmatpush1.bf16.msra.mxu0 0
      %3019 = vmatprep.subr.bf16.mxu0 0
      %3020 = vmatpush1.bf16.msra.mxu0 0
      %3021 = vmatprep.subr.bf16.mxu0 0
      %3022 = vmatpush1.bf16.msra.mxu0 0
      %3023 = vmatprep.subr.bf16.mxu0 0
      %3024 = vmatpush1.bf16.msra.mxu0 0
      %3025 = vmatprep.subr.bf16.mxu0 0
      %3026 = vmatpush1.bf16.msra.mxu0 0
      %3027 = vmatprep.subr.bf16.mxu0 0
      %3028 = vmatpush1.bf16.msra.mxu0 0
      %3029 = vmatprep.subr.bf16.mxu0 0
      %3030 = vmatpush1.bf16.msra.mxu0 0
      %3031 = vmatprep.subr.bf16.mxu0 0
      %3032 = vmatpush1.bf16.msra.mxu0 0
      %3033 = vmatprep.mubr.bf16.mxu0 0
      %3034 = vmatmul.mubr.bf16.gmra.mrb[0].mxu0 %v2999
      %v3035 = vpop.f32.mrb[0].mxu0
      %v3036 = vadd.f32 %v2972, %v3035
      %v3037 = vpop.f32.mrb[0].mxu0
      %v3038 = vpop.f32.mrb[0].mxu0
      %v3039 = vpop.f32.mrb[0].mxu0
      %3040 = vdwg.mxu0
      %v3041 = vpack.c.bf16 %v2736, %v2736
      %v3042 = vld [vmem:[%s51] sm:$0xf]
      %v3043 = vld [vmem:[%s51 + $0x4] sm:$0xf]
      %v3044 = vld [vmem:[%s51 + $0x8] sm:$0xf]
      %v3045 = vld [vmem:[%s51 + $0xc] sm:$0xf]
      %v3046 = vld [vmem:[%s51 + $0x10] sm:$0xf]
      %v3047 = vld [vmem:[%s51 + $0x14] sm:$0xf]
      %v3048 = vld [vmem:[%s51 + $0x18] sm:$0xf]
      %v3049 = vld [vmem:[%s51 + $0x1c] sm:$0xf]
      %v3050 = vpack.c.bf16 %v2900, %v2900
      %v3051 = vld [vmem:[%s53] sm:$0xf]
      %v3052 = vld [vmem:[%s53 + $0x4] sm:$0xf]
      %v3053 = vld [vmem:[%s53 + $0x8] sm:$0xf]
      %v3054 = vld [vmem:[%s53 + $0xc] sm:$0xf]
      %v3055 = vld [vmem:[%s53 + $0x10] sm:$0xf]
      %v3056 = vld [vmem:[%s53 + $0x14] sm:$0xf]
      %v3057 = vld [vmem:[%s53 + $0x18] sm:$0xf]
      %v3058 = vld [vmem:[%s53 + $0x1c] sm:$0xf]
      %v3067 = vunpack.c.l.b16 %v3051
      %v3068 = vunpack.c.l.b16 %v3052
      %v3069 = vunpack.c.l.b16 %v3053
      %v3070 = vunpack.c.l.b16 %v3054
      %v3071 = vunpack.c.l.b16 %v3055
      %v3072 = vunpack.c.l.b16 %v3056
      %v3073 = vunpack.c.l.b16 %v3057
      %v3074 = vunpack.c.l.b16 %v3058
      %v3075 = vpack.c.b16 %v3068, %v3067
      %v3076 = vpack.c.b16 %v3070, %v3069
      %v3077 = vpack.c.b16 %v3072, %v3071
      %v3078 = vpack.c.b16 %v3074, %v3073
      %v3084 = vsel %vm2997, %v3050, 0
      %3086 = vmatprep.subr.bf16.mxu0 0
      %3087 = vmatpush1.bf16.msra.mxu0 %v3075
      %3088 = vmatprep.subr.bf16.mxu0 0
      %3089 = vmatpush1.bf16.msra.mxu0 %v3076
      %3090 = vmatprep.subr.bf16.mxu0 0
      %3091 = vmatpush1.bf16.msra.mxu0 %v3077
      %3092 = vmatprep.subr.bf16.mxu0 0
      %3093 = vmatpush1.bf16.msra.mxu0 %v3078
      %3094 = vmatprep.subr.bf16.mxu0 0
      %3095 = vmatpush1.bf16.msra.mxu0 0
      %3096 = vmatprep.subr.bf16.mxu0 0
      %3097 = vmatpush1.bf16.msra.mxu0 0
      %3098 = vmatprep.subr.bf16.mxu0 0
      %3099 = vmatpush1.bf16.msra.mxu0 0
      %3100 = vmatprep.subr.bf16.mxu0 0
      %3101 = vmatpush1.bf16.msra.mxu0 0
      %3102 = vmatprep.subr.bf16.mxu0 0
      %3103 = vmatpush1.bf16.msra.mxu0 0
      %3104 = vmatprep.subr.bf16.mxu0 0
      %3105 = vmatpush1.bf16.msra.mxu0 0
      %3106 = vmatprep.subr.bf16.mxu0 0
      %3107 = vmatpush1.bf16.msra.mxu0 0
      %3108 = vmatprep.subr.bf16.mxu0 0
      %3109 = vmatpush1.bf16.msra.mxu0 0
      %3110 = vmatprep.subr.bf16.mxu0 0
      %3111 = vmatpush1.bf16.msra.mxu0 0
      %3112 = vmatprep.subr.bf16.mxu0 0
      %3113 = vmatpush1.bf16.msra.mxu0 0
      %3114 = vmatprep.subr.bf16.mxu0 0
      %3115 = vmatpush1.bf16.msra.mxu0 0
      %3116 = vmatprep.subr.bf16.mxu0 0
      %3117 = vmatpush1.bf16.msra.mxu0 0
      %3118 = vmatprep.mubr.bf16.mxu0 0
      %3119 = vmatmul.mubr.bf16.gmra.mrb[0].mxu0 %v3084
      %v3120 = vpop.f32.mrb[0].mxu0
      %v3121 = vadd.f32 0.0, %v3120
      %v3122 = vpop.f32.mrb[0].mxu0
      %v3123 = vpop.f32.mrb[0].mxu0
      %v3124 = vpop.f32.mrb[0].mxu0
      %3125 = vdwg.mxu0
      %v3134 = vunpack.c.l.b16 %v3042
      %v3135 = vunpack.c.l.b16 %v3043
      %v3136 = vunpack.c.l.b16 %v3044
      %v3137 = vunpack.c.l.b16 %v3045
      %v3138 = vunpack.c.l.b16 %v3046
      %v3139 = vunpack.c.l.b16 %v3047
      %v3140 = vunpack.c.l.b16 %v3048
      %v3141 = vunpack.c.l.b16 %v3049
      %v3142 = vpack.c.b16 %v3135, %v3134
      %v3143 = vpack.c.b16 %v3137, %v3136
      %v3144 = vpack.c.b16 %v3139, %v3138
      %v3145 = vpack.c.b16 %v3141, %v3140
      %v3151 = vsel %vm2997, %v3041, 0
      %3153 = vmatprep.subr.bf16.mxu0 0
      %3154 = vmatpush1.bf16.msra.mxu0 %v3142
      %3155 = vmatprep.subr.bf16.mxu0 0
      %3156 = vmatpush1.bf16.msra.mxu0 %v3143
      %3157 = vmatprep.subr.bf16.mxu0 0
      %3158 = vmatpush1.bf16.msra.mxu0 %v3144
      %3159 = vmatprep.subr.bf16.mxu0 0
      %3160 = vmatpush1.bf16.msra.mxu0 %v3145
      %3161 = vmatprep.subr.bf16.mxu0 0
      %3162 = vmatpush1.bf16.msra.mxu0 0
      %3163 = vmatprep.subr.bf16.mxu0 0
      %3164 = vmatpush1.bf16.msra.mxu0 0
      %3165 = vmatprep.subr.bf16.mxu0 0
      %3166 = vmatpush1.bf16.msra.mxu0 0
      %3167 = vmatprep.subr.bf16.mxu0 0
      %3168 = vmatpush1.bf16.msra.mxu0 0
      %3169 = vmatprep.subr.bf16.mxu0 0
      %3170 = vmatpush1.bf16.msra.mxu0 0
      %3171 = vmatprep.subr.bf16.mxu0 0
      %3172 = vmatpush1.bf16.msra.mxu0 0
      %3173 = vmatprep.subr.bf16.mxu0 0
      %3174 = vmatpush1.bf16.msra.mxu0 0
      %3175 = vmatprep.subr.bf16.mxu0 0
      %3176 = vmatpush1.bf16.msra.mxu0 0
      %3177 = vmatprep.subr.bf16.mxu0 0
      %3178 = vmatpush1.bf16.msra.mxu0 0
      %3179 = vmatprep.subr.bf16.mxu0 0
      %3180 = vmatpush1.bf16.msra.mxu0 0
      %3181 = vmatprep.subr.bf16.mxu0 0
      %3182 = vmatpush1.bf16.msra.mxu0 0
      %3183 = vmatprep.subr.bf16.mxu0 0
      %3184 = vmatpush1.bf16.msra.mxu0 0
      %3185 = vmatprep.mubr.bf16.mxu0 0
      %3186 = vmatmul.mubr.bf16.gmra.mrb[0].mxu0 %v3151
      %v3187 = vpop.f32.mrb[0].mxu0
      %v3188 = vadd.f32 %v3121, %v3187
      %v3189 = vpop.f32.mrb[0].mxu0
      %v3190 = vpop.f32.mrb[0].mxu0
      %v3191 = vpop.f32.mrb[0].mxu0
      %3192 = vdwg.mxu0
      %v3193 = vpack.c.bf16 %v3036, %v3036
      %v3194 = vld [vmem:[%s55] sm:$0xf]
      %v3195 = vld [vmem:[%s55 + $0x4] sm:$0xf]
      %v3196 = vld [vmem:[%s55 + $0x8] sm:$0xf]
      %v3197 = vld [vmem:[%s55 + $0xc] sm:$0xf]
      %v3202 = vunpack.c.l.b16 %v3194
      %v3203 = vunpack.c.l.b16 %v3195
      %v3204 = vunpack.c.l.b16 %v3196
      %v3205 = vunpack.c.l.b16 %v3197
      %v3206 = vpack.c.b16 %v3203, %v3202
      %v3207 = vpack.c.b16 %v3205, %v3204
      %v3211 = vsel %vm1124, %v3193, 0
      %3213 = vmatprep.subr.bf16.mxu0 0
      %3214 = vmatpush1.bf16.msra.mxu0 %v3206
      %3215 = vmatprep.subr.bf16.mxu0 0
      %3216 = vmatpush1.bf16.msra.mxu0 %v3207
      %3217 = vmatprep.subr.bf16.mxu0 0
      %3218 = vmatpush1.bf16.msra.mxu0 0
      %3219 = vmatprep.subr.bf16.mxu0 0
      %3220 = vmatpush1.bf16.msra.mxu0 0
      %3221 = vmatprep.subr.bf16.mxu0 0
      %3222 = vmatpush1.bf16.msra.mxu0 0
      %3223 = vmatprep.subr.bf16.mxu0 0
      %3224 = vmatpush1.bf16.msra.mxu0 0
      %3225 = vmatprep.subr.bf16.mxu0 0
      %3226 = vmatpush1.bf16.msra.mxu0 0
      %3227 = vmatprep.subr.bf16.mxu0 0
      %3228 = vmatpush1.bf16.msra.mxu0 0
      %3229 = vmatprep.subr.bf16.mxu0 0
      %3230 = vmatpush1.bf16.msra.mxu0 0
      %3231 = vmatprep.subr.bf16.mxu0 0
      %3232 = vmatpush1.bf16.msra.mxu0 0
      %3233 = vmatprep.subr.bf16.mxu0 0
      %3234 = vmatpush1.bf16.msra.mxu0 0
      %3235 = vmatprep.subr.bf16.mxu0 0
      %3236 = vmatpush1.bf16.msra.mxu0 0
      %3237 = vmatprep.subr.bf16.mxu0 0
      %3238 = vmatpush1.bf16.msra.mxu0 0
      %3239 = vmatprep.subr.bf16.mxu0 0
      %3240 = vmatpush1.bf16.msra.mxu0 0
      %3241 = vmatprep.subr.bf16.mxu0 0
      %3242 = vmatpush1.bf16.msra.mxu0 0
      %3243 = vmatprep.subr.bf16.mxu0 0
      %3244 = vmatpush1.bf16.msra.mxu0 0
      %3245 = vmatprep.mubr.bf16.mxu0 0
      %3246 = vmatmul.mubr.bf16.gmra.mrb[0].mxu0 %v3211
      %v3247 = vpop.f32.mrb[0].mxu0
      %v3248 = vadd.f32 0.0, %v3247
      %v3249 = vpop.f32.mrb[0].mxu0
      %v3250 = vpop.f32.mrb[0].mxu0
      %v3251 = vpop.f32.mrb[0].mxu0
      %3252 = vdwg.mxu0
      %v3253 = vadd.f32 %v3188, %v3248
      %v3254 = vld [vmem:[%s57] sm:$0x1]
      %v3255 = vadd.f32 %v3253, %v3254
      %v3256 = vmax.f32 %v3255, 0.0
      %v3257 = vpack.c.bf16 %v3256, %v3256
      %v3258 = vld [vmem:[%s59] sm:$0xf]
      %v3259 = vld [vmem:[%s59 + $0x4] sm:$0xf]
      %v3260 = vld [vmem:[%s59 + $0x8] sm:$0xf]
      %v3261 = vld [vmem:[%s59 + $0xc] sm:$0xf]
      %v3262 = vld [vmem:[%s59 + $0x10] sm:$0xf]
      %v3263 = vld [vmem:[%s59 + $0x14] sm:$0xf]
      %v3264 = vld [vmem:[%s59 + $0x18] sm:$0xf]
      %v3265 = vld [vmem:[%s59 + $0x1c] sm:$0xf]
      %v3266 = vld [vmem:[%s59 + $0x20] sm:$0xf]
      %v3267 = vld [vmem:[%s59 + $0x24] sm:$0xf]
      %v3268 = vld [vmem:[%s59 + $0x28] sm:$0xf]
      %v3269 = vld [vmem:[%s59 + $0x2c] sm:$0xf]
      %v3270 = vld [vmem:[%s59 + $0x30] sm:$0xf]
      %v3271 = vld [vmem:[%s59 + $0x34] sm:$0xf]
      %v3272 = vld [vmem:[%s59 + $0x38] sm:$0xf]
      %v3273 = vld [vmem:[%s59 + $0x3c] sm:$0xf]
      %v3274 = vld [vmem:[%s61] sm:$0x1]
      %v3291 = vunpack.c.l.b16 %v3258
      %v3292 = vunpack.c.l.b16 %v3259
      %v3293 = vunpack.c.l.b16 %v3260
      %v3294 = vunpack.c.l.b16 %v3261
      %v3295 = vunpack.c.l.b16 %v3262
      %v3296 = vunpack.c.l.b16 %v3263
      %v3297 = vunpack.c.l.b16 %v3264
      %v3298 = vunpack.c.l.b16 %v3265
      %v3299 = vunpack.c.l.b16 %v3266
      %v3300 = vunpack.c.l.b16 %v3267
      %v3301 = vunpack.c.l.b16 %v3268
      %v3302 = vunpack.c.l.b16 %v3269
      %v3303 = vunpack.c.l.b16 %v3270
      %v3304 = vunpack.c.l.b16 %v3271
      %v3305 = vunpack.c.l.b16 %v3272
      %v3306 = vunpack.c.l.b16 %v3273
      %v3307 = vpack.c.b16 %v3292, %v3291
      %v3308 = vpack.c.b16 %v3294, %v3293
      %v3309 = vpack.c.b16 %v3296, %v3295
      %v3310 = vpack.c.b16 %v3298, %v3297
      %v3311 = vpack.c.b16 %v3300, %v3299
      %v3312 = vpack.c.b16 %v3302, %v3301
      %v3313 = vpack.c.b16 %v3304, %v3303
      %v3314 = vpack.c.b16 %v3306, %v3305
      %3323 = vmatprep.subr.bf16.mxu0 0
      %3324 = vmatpush1.bf16.msra.mxu0 %v3307
      %3325 = vmatprep.subr.bf16.mxu0 0
      %3326 = vmatpush1.bf16.msra.mxu0 %v3308
      %3327 = vmatprep.subr.bf16.mxu0 0
      %3328 = vmatpush1.bf16.msra.mxu0 %v3309
      %3329 = vmatprep.subr.bf16.mxu0 0
      %3330 = vmatpush1.bf16.msra.mxu0 %v3310
      %3331 = vmatprep.subr.bf16.mxu0 0
      %3332 = vmatpush1.bf16.msra.mxu0 %v3311
      %3333 = vmatprep.subr.bf16.mxu0 0
      %3334 = vmatpush1.bf16.msra.mxu0 %v3312
      %3335 = vmatprep.subr.bf16.mxu0 0
      %3336 = vmatpush1.bf16.msra.mxu0 %v3313
      %3337 = vmatprep.subr.bf16.mxu0 0
      %3338 = vmatpush1.bf16.msra.mxu0 %v3314
      %3339 = vmatprep.subr.bf16.mxu0 0
      %3340 = vmatpush1.bf16.msra.mxu0 0
      %3341 = vmatprep.subr.bf16.mxu0 0
      %3342 = vmatpush1.bf16.msra.mxu0 0
      %3343 = vmatprep.subr.bf16.mxu0 0
      %3344 = vmatpush1.bf16.msra.mxu0 0
      %3345 = vmatprep.subr.bf16.mxu0 0
      %3346 = vmatpush1.bf16.msra.mxu0 0
      %3347 = vmatprep.subr.bf16.mxu0 0
      %3348 = vmatpush1.bf16.msra.mxu0 0
      %3349 = vmatprep.subr.bf16.mxu0 0
      %3350 = vmatpush1.bf16.msra.mxu0 0
      %3351 = vmatprep.subr.bf16.mxu0 0
      %3352 = vmatpush1.bf16.msra.mxu0 0
      %3353 = vmatprep.subr.bf16.mxu0 0
      %3354 = vmatpush1.bf16.msra.mxu0 0
      %3355 = vmatprep.mubr.bf16.mxu0 0
      %3356 = vmatmul.mubr.bf16.gmra.mrb[0].mxu0 %v3257
      %v3357 = vpop.f32.mrb[0].mxu0
      %v3358 = vadd.f32 %v3274, %v3357
      %v3359 = vpop.f32.mrb[0].mxu0
      %v3360 = vpop.f32.mrb[0].mxu0
      %v3361 = vpop.f32.mrb[0].mxu0
      %3362 = vdwg.mxu0
      %v3363 = vmax.f32 %v3358, 0.0
      %v3364 = vpack.c.bf16 %v3363, %v3363
      %v3365 = vld [vmem:[%s63] sm:$0xf]
      %v3366 = vld [vmem:[%s63 + $0x4] sm:$0xf]
      %v3367 = vld [vmem:[%s63 + $0x8] sm:$0xf]
      %v3368 = vld [vmem:[%s63 + $0xc] sm:$0xf]
      %v3369 = vld [vmem:[%s63 + $0x10] sm:$0xf]
      %v3370 = vld [vmem:[%s63 + $0x14] sm:$0xf]
      %v3371 = vld [vmem:[%s63 + $0x18] sm:$0xf]
      %v3372 = vld [vmem:[%s63 + $0x1c] sm:$0xf]
      %v3373 = vld [vmem:[%s65] sm:$0x1]
      %v3382 = vunpack.c.l.b16 %v3365
      %v3383 = vunpack.c.l.b16 %v3366
      %v3384 = vunpack.c.l.b16 %v3367
      %v3385 = vunpack.c.l.b16 %v3368
      %v3386 = vunpack.c.l.b16 %v3369
      %v3387 = vunpack.c.l.b16 %v3370
      %v3388 = vunpack.c.l.b16 %v3371
      %v3389 = vunpack.c.l.b16 %v3372
      %v3390 = vpack.c.b16 %v3383, %v3382
      %v3391 = vpack.c.b16 %v3385, %v3384
      %v3392 = vpack.c.b16 %v3387, %v3386
      %v3393 = vpack.c.b16 %v3389, %v3388
      %v3399 = vsel %vm2997, %v3364, 0
      %3401 = vmatprep.subr.bf16.mxu0 0
      %3402 = vmatpush1.bf16.msra.mxu0 %v3390
      %3403 = vmatprep.subr.bf16.mxu0 0
      %3404 = vmatpush1.bf16.msra.mxu0 %v3391
      %3405 = vmatprep.subr.bf16.mxu0 0
      %3406 = vmatpush1.bf16.msra.mxu0 %v3392
      %3407 = vmatprep.subr.bf16.mxu0 0
      %3408 = vmatpush1.bf16.msra.mxu0 %v3393
      %3409 = vmatprep.subr.bf16.mxu0 0
      %3410 = vmatpush1.bf16.msra.mxu0 0
      %3411 = vmatprep.subr.bf16.mxu0 0
      %3412 = vmatpush1.bf16.msra.mxu0 0
      %3413 = vmatprep.subr.bf16.mxu0 0
      %3414 = vmatpush1.bf16.msra.mxu0 0
      %3415 = vmatprep.subr.bf16.mxu0 0
      %3416 = vmatpush1.bf16.msra.mxu0 0
      %3417 = vmatprep.subr.bf16.mxu0 0
      %3418 = vmatpush1.bf16.msra.mxu0 0
      %3419 = vmatprep.subr.bf16.mxu0 0
      %3420 = vmatpush1.bf16.msra.mxu0 0
      %3421 = vmatprep.subr.bf16.mxu0 0
      %3422 = vmatpush1.bf16.msra.mxu0 0
      %3423 = vmatprep.subr.bf16.mxu0 0
      %3424 = vmatpush1.bf16.msra.mxu0 0
      %3425 = vmatprep.subr.bf16.mxu0 0
      %3426 = vmatpush1.bf16.msra.mxu0 0
      %3427 = vmatprep.subr.bf16.mxu0 0
      %3428 = vmatpush1.bf16.msra.mxu0 0
      %3429 = vmatprep.subr.bf16.mxu0 0
      %3430 = vmatpush1.bf16.msra.mxu0 0
      %3431 = vmatprep.subr.bf16.mxu0 0
      %3432 = vmatpush1.bf16.msra.mxu0 0
      %3433 = vmatprep.mubr.bf16.mxu0 0
      %3434 = vmatmul.mubr.bf16.gmra.mrb[0].mxu0 %v3399
      %v3435 = vpop.f32.mrb[0].mxu0
      %v3436 = vadd.f32 %v3373, %v3435
      %v3437 = vpop.f32.mrb[0].mxu0
      %v3438 = vpop.f32.mrb[0].mxu0
      %v3439 = vpop.f32.mrb[0].mxu0
      %3440 = vdwg.mxu0
      %v3441 = vmax.f32 %v3436, 0.0
      %v3442 = vpack.c.bf16 %v3441, %v3441
      %v3443 = vld [vmem:[%s67] sm:$0xf]
      %v3444 = vld [vmem:[%s67 + $0x4] sm:$0xf]
      %v3445 = vld [vmem:[%s67 + $0x8] sm:$0xf]
      %v3446 = vld [vmem:[%s67 + $0xc] sm:$0xf]
      %v3447 = vld [vmem:[#allocation3] sm:$0x1]
      %v3452 = vunpack.c.l.b16 %v3443
      %v3453 = vunpack.c.l.b16 %v3444
      %v3454 = vunpack.c.l.b16 %v3445
      %v3455 = vunpack.c.l.b16 %v3446
      %v3456 = vpack.c.b16 %v3453, %v3452
      %v3457 = vpack.c.b16 %v3455, %v3454
      %v3461 = vsel %vm1124, %v3442, 0
      %3463 = vmatprep.subr.bf16.mxu0 0
      %3464 = vmatpush1.bf16.msra.mxu0 %v3456
      %3465 = vmatprep.subr.bf16.mxu0 0
      %3466 = vmatpush1.bf16.msra.mxu0 %v3457
      %3467 = vmatprep.subr.bf16.mxu0 0
      %3468 = vmatpush1.bf16.msra.mxu0 0
      %3469 = vmatprep.subr.bf16.mxu0 0
      %3470 = vmatpush1.bf16.msra.mxu0 0
      %3471 = vmatprep.subr.bf16.mxu0 0
      %3472 = vmatpush1.bf16.msra.mxu0 0
      %3473 = vmatprep.subr.bf16.mxu0 0
      %3474 = vmatpush1.bf16.msra.mxu0 0
      %3475 = vmatprep.subr.bf16.mxu0 0
      %3476 = vmatpush1.bf16.msra.mxu0 0
      %3477 = vmatprep.subr.bf16.mxu0 0
      %3478 = vmatpush1.bf16.msra.mxu0 0
      %3479 = vmatprep.subr.bf16.mxu0 0
      %3480 = vmatpush1.bf16.msra.mxu0 0
      %3481 = vmatprep.subr.bf16.mxu0 0
      %3482 = vmatpush1.bf16.msra.mxu0 0
      %3483 = vmatprep.subr.bf16.mxu0 0
      %3484 = vmatpush1.bf16.msra.mxu0 0
      %3485 = vmatprep.subr.bf16.mxu0 0
      %3486 = vmatpush1.bf16.msra.mxu0 0
      %3487 = vmatprep.subr.bf16.mxu0 0
      %3488 = vmatpush1.bf16.msra.mxu0 0
      %3489 = vmatprep.subr.bf16.mxu0 0
      %3490 = vmatpush1.bf16.msra.mxu0 0
      %3491 = vmatprep.subr.bf16.mxu0 0
      %3492 = vmatpush1.bf16.msra.mxu0 0
      %3493 = vmatprep.subr.bf16.mxu0 0
      %3494 = vmatpush1.bf16.msra.mxu0 0
      %3495 = vmatprep.mubr.bf16.mxu0 0
      %3496 = vmatmul.mubr.bf16.gmra.mrb[0].mxu0 %v3461
      %v3497 = vpop.f32.mrb[0].mxu0
      %v3498 = vadd.f32 %v3447, %v3497
      %v3499 = vpop.f32.mrb[0].mxu0
      %v3500 = vpop.f32.mrb[0].mxu0
      %v3501 = vpop.f32.mrb[0].mxu0
      %3502 = vdwg.mxu0
      %v3503 = vsub.f32 0.0, %v3498
      %v3504 = vmul.f32 %v3503, 1.442695
      %v3505 = vpow.pop %v3504
      %v3506 = vadd.f32 %v3505, 1.0
      %v3507 = vrcp.pop %v3506
      %v3508 = vmul.f32 1.0, %v3507
      %vm3509 = vcmask 0
      %3510 = vst.msk [vmem:[%s1098] sm:$0x1] %vm3509, %v3508
      %p3511 = scmp.lt.s32.totalorder %s86, 1
      %s3512 = scalar_select %p3511, %s86, 1
      %s3513 = scalar_lea.vmem %s71, %s3512
      // Predicated region
      $region161: #{credibility_regressor.1} parent=159 // pred_check
        %p3514 = pneg %p854
      $region162: #{credibility_regressor.1} parent=159 // pred_check_branch
        %3516 = sbr.rel (%p3514) target = $region164
      $region163: #{credibility_regressor.1} parent=159 // pred_region
        _
      $region164: #{credibility_regressor.1} parent=159 // pred_fallthru
        _
    $region160: #{credibility_regressor.1} parent=5 // pred_fallthru
      _
    %p3517 = scmp.le.s32.totalorder 2, %s81
    // Predicated region
    $region165: #{credibility_regressor.1} parent=5 // pred_check
      %p3518 = pneg %p3517
    $region166: #{credibility_regressor.1} parent=5 // pred_check_branch
      %3520 = sbr.rel (%p3518) target = $region168
    $region167: #{credibility_regressor.1} parent=5 // pred_region
      %s3521 = ssub.s32 %s81, 2
      // Predicated region
      $region169: #{credibility_regressor.1} parent=167 // pred_check
        %p3522 = pneg %p860
      $region170: #{credibility_regressor.1} parent=167 // pred_check_branch
        %3524 = sbr.rel (%p3522) target = $region172
      $region171: #{credibility_regressor.1} parent=167 // pred_region
        %p3525 = scmp.lt.s32.totalorder %s87, 1
        %s3526 = scalar_select %p3525, %s87, 1
        %s3527 = scalar_lea.vmem %s71, %s3526
      $region172: #{credibility_regressor.1} parent=167 // pred_fallthru
        _
    $region168: #{credibility_regressor.1} parent=5 // pred_fallthru
      _
  $region6: #{credibility_regressor.1} parent=0 // loop_footer
    %s85 = sadd.s32 1, %s81
  $region7: #{credibility_regressor.1} parent=0 // loop_footer_branch
    %80 = sbr.rel target = $region3
  $region8: #{credibility_regressor.1} parent=0 // loop_exit
    _

</llo_original>
